<compile_context>
chip_gen: v6e
topology: v6e:2x2x1
jax: 0.10.0
libtpu: 0.0.40
codegen_flags: <defaults>
</compile_context>

<pallas_src>
import math

import jax
import jax.numpy as jnp
from jax.experimental import pallas as pl
from jax.experimental.pallas import tpu as pltpu

PI = math.pi
LOG2 = math.log(2.0)


def _round_up(v, m):
    return ((v + m - 1) // m) * m


def _ssp(v):
    # shifted softplus: softplus(v) - log(2), numerically stable
    return jnp.logaddexp(v, 0.0) - LOG2


def interaction_kernel(cutoff_ref,
                       x_ref, src_ref, dst_ref, ea_ref, ew_ref,
                       mlp_w1_ref, mlp_b1_ref, mlp_w2_ref, mlp_b2_ref,
                       lin1_w_ref, lin2_w_ref, lin2_b_ref,
                       lin_w_ref, lin_b_ref,
                       out_ref,
                       x1_scr, agg_scr):
    f32 = jnp.float32
    bf16 = jnp.bfloat16
    e = pl.program_id(0)
    n_pad = agg_scr.shape[0]
    te = dst_ref.shape[1]

    # ---- once (edge tile 0): hoist x1 = lin1(x), zero the accumulator ------
    @pl.when(e == 0)
    def _init():
        x1 = jnp.dot(x_ref[...].astype(bf16), lin1_w_ref[...],
                     preferred_element_type=f32)
        x1_scr[...] = x1.astype(bf16)
        agg_scr[...] = jnp.zeros_like(agg_scr)

    # ---- filter network on this edge tile:  W = mlp(edge_attr) * C ---------
    h = jnp.dot(ea_ref[...], mlp_w1_ref[...], preferred_element_type=f32)
    h = _ssp(h + mlp_b1_ref[...])
    w = jnp.dot(h.astype(bf16), mlp_w2_ref[...], preferred_element_type=f32)
    w = w + mlp_b2_ref[...]

    cut = cutoff_ref[0]
    c = 0.5 * (jnp.cos(ew_ref[...] * (PI / cut)) + 1.0)       # [te, 1] f32
    w = w * c                                                  # [te, F]

    # ---- gather x1[src] via an in-kernel one-hot (edge-major) --------------
    lane_nodes = jax.lax.broadcasted_iota(jnp.int32, (te, n_pad), 1)
    gath_oh = (lane_nodes == src_ref[...]).astype(bf16)        # [te, n_pad]
    xj = jnp.dot(gath_oh, x1_scr[...], preferred_element_type=f32)   # [te, F]

    msg = (xj * w).astype(bf16)                                # [te, F]

    # ---- scatter-add onto destination nodes (node-major one-hot) -----------
    sub_nodes = jax.lax.broadcasted_iota(jnp.int32, (n_pad, te), 0)
    scat_oh = (sub_nodes == dst_ref[...]).astype(bf16)         # [n_pad, te]
    agg_scr[...] += jnp.dot(scat_oh, msg, preferred_element_type=f32)

    # ---- finalize on the last edge tile: lin2 -> ssp -> lin -----------------
    @pl.when(e == pl.num_programs(0) - 1)
    def _finalize():
        x2 = jnp.dot(agg_scr[...].astype(bf16), lin2_w_ref[...],
                     preferred_element_type=f32) + lin2_b_ref[...]
        x3 = _ssp(x2).astype(bf16)
        out_ref[...] = (jnp.dot(x3, lin_w_ref[...],
                                preferred_element_type=f32) + lin_b_ref[...])


def interaction_block(x, edge_index, edge_weight, edge_attr, params, cutoff,
                      *, edge_tile=256):
    """x: [N, H] f32, edge_index: [2, E] i32, edge_weight: [E] f32,
    edge_attr: [E, G] f32. Returns [N, H] f32."""
    N, H = x.shape
    E, G = edge_attr.shape
    F_ = params["mlp_w1"].shape[1]

    # lane-dense padding (feature dims -> multiples of 128, nodes -> x8)
    H_pad = _round_up(H, 128)
    G_pad = _round_up(G, 128)
    F_pad = _round_up(F_, 128)
    N_pad = _round_up(N, 8)
    TE = edge_tile                      # multiple of 128 (lane block for dst)
    E_pad = _round_up(max(E, 1), TE)
    num_e_tiles = E_pad // TE

    bf16 = jnp.bfloat16

    src = edge_index[0].astype(jnp.int32).reshape(E, 1)
    dst = edge_index[1].astype(jnp.int32).reshape(1, E)

    x_p = jnp.pad(x, ((0, N_pad - N), (0, H_pad - H)))
    ea_p = jnp.pad(edge_attr, ((0, E_pad - E), (0, G_pad - G))).astype(bf16)
    ew_p = jnp.pad(edge_weight.reshape(E, 1), ((0, E_pad - E), (0, 0)))
    # padded edges: src -> node 0 (harmless), dst -> N_pad (matches no node)
    src_p = jnp.pad(src, ((0, E_pad - E), (0, 0)))
    dst_p = jnp.pad(dst, ((0, 0), (0, E_pad - E)), constant_values=N_pad)

    bf = lambda a: a.astype(bf16)
    mlp_w1 = bf(jnp.pad(params["mlp_w1"], ((0, G_pad - G), (0, F_pad - F_))))
    mlp_b1 = jnp.pad(params["mlp_b1"], ((0, 0), (0, F_pad - F_)))
    mlp_w2 = bf(jnp.pad(params["mlp_w2"], ((0, F_pad - F_), (0, F_pad - F_))))
    mlp_b2 = jnp.pad(params["mlp_b2"], ((0, 0), (0, F_pad - F_)))
    lin1_w = bf(jnp.pad(params["lin1_w"], ((0, H_pad - H), (0, F_pad - F_))))
    lin2_w = bf(jnp.pad(params["lin2_w"], ((0, F_pad - F_), (0, H_pad - H))))
    lin2_b = jnp.pad(params["lin2_b"], ((0, 0), (0, H_pad - H)))
    lin_w = bf(jnp.pad(params["lin_w"], ((0, H_pad - H), (0, H_pad - H))))
    lin_b = jnp.pad(params["lin_b"], ((0, 0), (0, H_pad - H)))

    cutoff_arr = jnp.asarray([cutoff], jnp.float32)   # SMEM scalar, no recompile

    const2 = lambda shape: pl.BlockSpec(shape, lambda e: (0, 0))
    in_specs = [
        pl.BlockSpec(memory_space=pltpu.MemorySpace.SMEM),    # cutoff scalar
        const2((N_pad, H_pad)),                               # x (resident)
        pl.BlockSpec((TE, 1), lambda e: (e, 0)),              # src  (edge-tiled)
        pl.BlockSpec((1, TE), lambda e: (0, e)),              # dst  (edge-tiled)
        pl.BlockSpec((TE, G_pad), lambda e: (e, 0)),          # edge_attr
        pl.BlockSpec((TE, 1), lambda e: (e, 0)),              # edge_weight
        const2((G_pad, F_pad)), const2((1, F_pad)),           # mlp_w1, mlp_b1
        const2((F_pad, F_pad)), const2((1, F_pad)),           # mlp_w2, mlp_b2
        const2((H_pad, F_pad)),                               # lin1_w
        const2((F_pad, H_pad)), const2((1, H_pad)),           # lin2_w, lin2_b
        const2((H_pad, H_pad)), const2((1, H_pad)),           # lin_w, lin_b
    ]

    # advisory cost estimate
    flops = (2 * E_pad * F_pad * (G_pad + F_pad)        # edge MLP
             + 4 * E_pad * N_pad * F_pad                # gather + scatter one-hots
             + 2 * N_pad * F_pad * 2 * H_pad            # lin1 + lin2
             + 2 * N_pad * H_pad * H_pad)               # lin
    transcendentals = 2 * E_pad * F_pad + 2 * N_pad * H_pad + E_pad
    operands = (cutoff_arr, x_p, src_p, dst_p, ea_p, ew_p, mlp_w1, mlp_b1,
                mlp_w2, mlp_b2, lin1_w, lin2_w, lin2_b, lin_w, lin_b)
    bytes_accessed = sum(int(a.size) * a.dtype.itemsize for a in operands) \
        + N_pad * H_pad * 4

    out = pl.pallas_call(
        interaction_kernel,
        out_shape=jax.ShapeDtypeStruct((N_pad, H_pad), jnp.float32),
        grid=(num_e_tiles,),
        in_specs=in_specs,
        out_specs=pl.BlockSpec((N_pad, H_pad), lambda e: (0, 0)),
        scratch_shapes=[pltpu.VMEM((N_pad, F_pad), bf16),          # x1 = lin1(x)
                        pltpu.VMEM((N_pad, F_pad), jnp.float32)],  # scatter accumulator
        compiler_params=pltpu.CompilerParams(
            dimension_semantics=("arbitrary",),        # edge axis is a reduction
            vmem_limit_bytes=48 * 1024 * 1024),
        cost_estimate=pl.CostEstimate(flops=int(flops),
                                      transcendentals=int(transcendentals),
                                      bytes_accessed=int(bytes_accessed)),
    )(cutoff_arr, x_p, src_p, dst_p, ea_p, ew_p,
      mlp_w1, mlp_b1, mlp_w2, mlp_b2,
      lin1_w, lin2_w, lin2_b, lin_w, lin_b)

    return out[:N, :H]


def xavier_uniform(key, fan_out, fan_in):
    # torch.nn.init.xavier_uniform_ on a [out, in] weight
    bound = math.sqrt(6.0 / (fan_in + fan_out))
    return jax.random.uniform(key, (fan_out, fan_in), jnp.float32, -bound, bound)


def init_params(key, hidden_channels, num_gaussians, num_filters):
    ks = jax.random.split(key, 5)
    H, G, F_ = hidden_channels, num_gaussians, num_filters
    # all weights pre-transposed to [in, out] for `act @ W`
    return {
        "mlp_w1": xavier_uniform(ks[0], F_, G).T,          # [G, F]
        "mlp_b1": jnp.zeros((1, F_), jnp.float32),
        "mlp_w2": xavier_uniform(ks[1], F_, F_).T,         # [F, F]
        "mlp_b2": jnp.zeros((1, F_), jnp.float32),
        "lin1_w": xavier_uniform(ks[2], F_, H).T,          # [H, F], no bias
        "lin2_w": xavier_uniform(ks[3], H, F_).T,          # [F, H]
        "lin2_b": jnp.zeros((1, H), jnp.float32),
        "lin_w": xavier_uniform(ks[4], H, H).T,            # [H, H]
        "lin_b": jnp.zeros((1, H), jnp.float32),
    }


def reference(x, edge_index, edge_weight, edge_attr, params, cutoff):
    # plain-JAX f32 reference for correctness check
    ssp = lambda v: jnp.logaddexp(v, 0.0) - LOG2
    h = ssp(edge_attr @ params["mlp_w1"] + params["mlp_b1"]) @ params["mlp_w2"] + params["mlp_b2"]
    c = 0.5 * (jnp.cos(edge_weight * PI / cutoff) + 1.0)
    w = h * c[:, None]
    x1 = x @ params["lin1_w"]
    msg = x1[edge_index[0]] * w
    agg = jax.ops.segment_sum(msg, edge_index[1], num_segments=x.shape[0])
    x2 = agg @ params["lin2_w"] + params["lin2_b"]
    return ssp(x2) @ params["lin_w"] + params["lin_b"]


if __name__ == "__main__":
    # small SchNet-like shapes
    N = 8            # nodes
    E = 16           # edges
    hidden_channels = 32
    num_gaussians = 8
    num_filters = 16
    cutoff = 10.0

    key = jax.random.PRNGKey(0)
    kx, kei, kew, kea, kp = jax.random.split(key, 5)

    x = jax.random.normal(kx, (N, hidden_channels), jnp.float32)
    edge_index = jax.random.randint(kei, (2, E), 0, N, jnp.int32)
    edge_weight = jax.random.uniform(kew, (E,), jnp.float32, 0.1, cutoff)
    edge_attr = jax.random.normal(kea, (E, num_gaussians), jnp.float32)

    params = init_params(kp, hidden_channels, num_gaussians, num_filters)

    out = interaction_block(x, edge_index, edge_weight, edge_attr, params, cutoff)
    out = jax.block_until_ready(out)

    ref = reference(x, edge_index, edge_weight, edge_attr, params, cutoff)
    assert out.shape == (N, hidden_channels)
    # bf16 MXU operands with f32 accumulation -> relaxed tolerance vs f32 ref
    assert jnp.allclose(out, ref, atol=5e-2, rtol=5e-2), \
        f"mismatch vs reference, max abs err={float(jnp.max(jnp.abs(out - ref)))}"

    print("KERNEL_OK")
</pallas_src>

<mosaic_0001>
module attributes {stable_mosaic.version = 11 : i64} {
  func.func @interaction_kernel(%arg0: i32, %arg1: memref<1xf32, #tpu.memory_space<smem>>, %arg2: memref<8x128xf32, #tpu.memory_space<vmem>>, %arg3: memref<256x1xi32, #tpu.memory_space<vmem>>, %arg4: memref<1x256xi32, #tpu.memory_space<vmem>>, %arg5: memref<256x128xbf16, #tpu.memory_space<vmem>>, %arg6: memref<256x1xf32, #tpu.memory_space<vmem>>, %arg7: memref<128x128xbf16, #tpu.memory_space<vmem>>, %arg8: memref<1x128xf32, #tpu.memory_space<vmem>>, %arg9: memref<128x128xbf16, #tpu.memory_space<vmem>>, %arg10: memref<1x128xf32, #tpu.memory_space<vmem>>, %arg11: memref<128x128xbf16, #tpu.memory_space<vmem>>, %arg12: memref<128x128xbf16, #tpu.memory_space<vmem>>, %arg13: memref<1x128xf32, #tpu.memory_space<vmem>>, %arg14: memref<128x128xbf16, #tpu.memory_space<vmem>>, %arg15: memref<1x128xf32, #tpu.memory_space<vmem>>, %arg16: memref<8x128xf32, #tpu.memory_space<vmem>>, %arg17: memref<8x128xbf16, #tpu.memory_space<vmem>>, %arg18: memref<8x128xf32, #tpu.memory_space<vmem>>) attributes {dimension_semantics = [#tpu.dimension_semantics<arbitrary>], iteration_bounds = array<i64: 1>, scalar_prefetch = 0 : i64, scratch_operands = 2 : i64, tpu.core_type = #tpu.core_type<tc>, window_params = [{transform_indices = @transform_0, window_bounds = array<i64: 1>}, {pipeline_mode = #tpu.pipeline_mode<synchronous>, transform_indices = @transform_1, window_bounds = array<i64: 8, 128>}, {transform_indices = @transform_2, window_bounds = array<i64: 256, 1>}, {transform_indices = @transform_3, window_bounds = array<i64: 1, 256>}, {transform_indices = @transform_4, window_bounds = array<i64: 256, 128>}, {transform_indices = @transform_5, window_bounds = array<i64: 256, 1>}, {pipeline_mode = #tpu.pipeline_mode<synchronous>, transform_indices = @transform_6, window_bounds = array<i64: 128, 128>}, {pipeline_mode = #tpu.pipeline_mode<synchronous>, transform_indices = @transform_7, window_bounds = array<i64: 1, 128>}, {pipeline_mode = #tpu.pipeline_mode<synchronous>, transform_indices = @transform_8, window_bounds = array<i64: 128, 128>}, {pipeline_mode = #tpu.pipeline_mode<synchronous>, transform_indices = @transform_9, window_bounds = array<i64: 1, 128>}, {pipeline_mode = #tpu.pipeline_mode<synchronous>, transform_indices = @transform_10, window_bounds = array<i64: 128, 128>}, {pipeline_mode = #tpu.pipeline_mode<synchronous>, transform_indices = @transform_11, window_bounds = array<i64: 128, 128>}, {pipeline_mode = #tpu.pipeline_mode<synchronous>, transform_indices = @transform_12, window_bounds = array<i64: 1, 128>}, {pipeline_mode = #tpu.pipeline_mode<synchronous>, transform_indices = @transform_13, window_bounds = array<i64: 128, 128>}, {pipeline_mode = #tpu.pipeline_mode<synchronous>, transform_indices = @transform_14, window_bounds = array<i64: 1, 128>}, {pipeline_mode = #tpu.pipeline_mode<synchronous>, transform_indices = @transform_15, window_bounds = array<i64: 8, 128>}]} {
    %c0_i32 = arith.constant 0 : i32
    %0 = arith.cmpi eq, %arg0, %c0_i32 : i32
    %1 = arith.extui %0 : i1 to i32
    %c0_i32_0 = arith.constant 0 : i32
    %2 = arith.cmpi ne, %1, %c0_i32_0 : i32
    scf.if %2 {
      %c0_34 = arith.constant 0 : index
      %c0_35 = arith.constant 0 : index
      %68 = vector.load %arg2[%c0_34, %c0_35] : memref<8x128xf32, #tpu.memory_space<vmem>>, vector<8x128xf32>
      %69 = arith.truncf %68 : vector<8x128xf32> to vector<8x128xbf16>
      %c0_36 = arith.constant 0 : index
      %c0_37 = arith.constant 0 : index
      %70 = vector.load %arg11[%c0_36, %c0_37] : memref<128x128xbf16, #tpu.memory_space<vmem>>, vector<128x128xbf16>
      %cst_38 = arith.constant dense<0.000000e+00> : vector<8x128xf32>
      %71 = tpu.matmul %69, %70, %cst_38 {dimension_numbers = #tpu.dot_dimension_numbers<[1], [0], [0], [1], [0, 0, 1, 1], [], []>} : vector<8x128xbf16>, vector<128x128xbf16>, vector<8x128xf32> -> vector<8x128xf32>
      %72 = arith.truncf %71 : vector<8x128xf32> to vector<8x128xbf16>
      %c0_39 = arith.constant 0 : index
      %c0_40 = arith.constant 0 : index
      %73 = vector.load %arg17[%c0_39, %c0_40] : memref<8x128xbf16, #tpu.memory_space<vmem>>, vector<8x128xbf16>
      tpu.vector_store %arg17[%c0_39, %c0_40], %72 {strides = array<i32>} : memref<8x128xbf16, #tpu.memory_space<vmem>>, vector<8x128xbf16>,
      %cst_41 = arith.constant 0.000000e+00 : f32
      %74 = vector.broadcast %cst_41 : f32 to vector<8x128xf32>
      %c0_42 = arith.constant 0 : index
      %c0_43 = arith.constant 0 : index
      %75 = vector.load %arg18[%c0_42, %c0_43] : memref<8x128xf32, #tpu.memory_space<vmem>>, vector<8x128xf32>
      tpu.vector_store %arg18[%c0_42, %c0_43], %74 {strides = array<i32>} : memref<8x128xf32, #tpu.memory_space<vmem>>, vector<8x128xf32>,
    } else {
    }
    %c0 = arith.constant 0 : index
    %c0_1 = arith.constant 0 : index
    %3 = vector.load %arg5[%c0, %c0_1] : memref<256x128xbf16, #tpu.memory_space<vmem>>, vector<256x128xbf16>
    %c0_2 = arith.constant 0 : index
    %c0_3 = arith.constant 0 : index
    %4 = vector.load %arg7[%c0_2, %c0_3] : memref<128x128xbf16, #tpu.memory_space<vmem>>, vector<128x128xbf16>
    %cst = arith.constant dense<0.000000e+00> : vector<256x128xf32>
    %5 = tpu.matmul %3, %4, %cst {dimension_numbers = #tpu.dot_dimension_numbers<[1], [0], [0], [1], [0, 0, 1, 1], [], []>} : vector<256x128xbf16>, vector<128x128xbf16>, vector<256x128xf32> -> vector<256x128xf32>
    %c0_4 = arith.constant 0 : index
    %c0_5 = arith.constant 0 : index
    %6 = vector.load %arg8[%c0_4, %c0_5] : memref<1x128xf32, #tpu.memory_space<vmem>>, vector<1x128xf32>
    %7 = vector.broadcast %6 : vector<1x128xf32> to vector<256x128xf32>
    %8 = arith.addf %5, %7 : vector<256x128xf32>
    %cst_6 = arith.constant 0.000000e+00 : f32
    %9 = vector.broadcast %cst_6 : f32 to vector<256x128xf32>
    %10 = arith.maximumf %8, %9 : vector<256x128xf32>
    %11 = vector.broadcast %cst_6 : f32 to vector<256x128xf32>
    %12 = arith.subf %8, %11 : vector<256x128xf32>
    %13 = arith.cmpf one, %12, %12 : vector<256x128xf32>
    %14 = vector.broadcast %cst_6 : f32 to vector<256x128xf32>
    %15 = arith.addf %8, %14 : vector<256x128xf32>
    %16 = math.absf %12 : vector<256x128xf32>
    %cst_7 = arith.constant 0.000000e+00 : f32
    %17 = vector.broadcast %cst_7 : f32 to vector<256x128xf32>
    %18 = arith.subf %17, %16 : vector<256x128xf32>
    %19 = math.exp %18 : vector<256x128xf32>
    %20 = math.log1p %19 : vector<256x128xf32>
    %21 = arith.addf %10, %20 : vector<256x128xf32>
    %22 = arith.select %13, %15, %21 : vector<256x128xi1>, vector<256x128xf32>
    %cst_8 = arith.constant 0.693147182 : f32
    %23 = vector.broadcast %cst_8 : f32 to vector<256x128xf32>
    %24 = arith.subf %22, %23 : vector<256x128xf32>
    %25 = arith.truncf %24 : vector<256x128xf32> to vector<256x128xbf16>
    %c0_9 = arith.constant 0 : index
    %c0_10 = arith.constant 0 : index
    %26 = vector.load %arg9[%c0_9, %c0_10] : memref<128x128xbf16, #tpu.memory_space<vmem>>, vector<128x128xbf16>
    %cst_11 = arith.constant dense<0.000000e+00> : vector<256x128xf32>
    %27 = tpu.matmul %25, %26, %cst_11 {dimension_numbers = #tpu.dot_dimension_numbers<[1], [0], [0], [1], [0, 0, 1, 1], [], []>} : vector<256x128xbf16>, vector<128x128xbf16>, vector<256x128xf32> -> vector<256x128xf32>
    %c0_12 = arith.constant 0 : index
    %c0_13 = arith.constant 0 : index
    %28 = vector.load %arg10[%c0_12, %c0_13] : memref<1x128xf32, #tpu.memory_space<vmem>>, vector<1x128xf32>
    %29 = vector.broadcast %28 : vector<1x128xf32> to vector<256x128xf32>
    %30 = arith.addf %27, %29 : vector<256x128xf32>
    %c0_14 = arith.constant 0 : index
    %31 = memref.load %arg1[%c0_14] : memref<1xf32, #tpu.memory_space<smem>>
    %c0_15 = arith.constant 0 : index
    %c0_16 = arith.constant 0 : index
    %32 = vector.load %arg6[%c0_15, %c0_16] : memref<256x1xf32, #tpu.memory_space<vmem>>, vector<256x1xf32>
    %cst_17 = arith.constant 3.14159274 : f32
    %33 = arith.divf %cst_17, %31 : f32
    %34 = vector.broadcast %33 : f32 to vector<256x1xf32>
    %35 = arith.mulf %32, %34 : vector<256x1xf32>
    %36 = math.cos %35 : vector<256x1xf32>
    %cst_18 = arith.constant 1.000000e+00 : f32
    %37 = vector.broadcast %cst_18 : f32 to vector<256x1xf32>
    %38 = arith.addf %36, %37 : vector<256x1xf32>
    %cst_19 = arith.constant 5.000000e-01 : f32
    %39 = vector.broadcast %cst_19 : f32 to vector<256x1xf32>
    %40 = arith.mulf %39, %38 : vector<256x1xf32>
    %41 = vector.broadcast %40 : vector<256x1xf32> to vector<256x128xf32>
    %42 = arith.mulf %30, %41 : vector<256x128xf32>
    %43 = tpu.iota {dimensions = array<i32: 1>} : vector<256x8xi32>
    %c0_20 = arith.constant 0 : index
    %c0_21 = arith.constant 0 : index
    %44 = vector.load %arg3[%c0_20, %c0_21] : memref<256x1xi32, #tpu.memory_space<vmem>>, vector<256x1xi32>
    %45 = vector.broadcast %44 : vector<256x1xi32> to vector<256x8xi32>
    %46 = arith.cmpi eq, %43, %45 : vector<256x8xi32>
    %47 = arith.extui %46 : vector<256x8xi1> to vector<256x8xi32>
    %48 = arith.sitofp %47 : vector<256x8xi32> to vector<256x8xf32>
    %49 = arith.truncf %48 : vector<256x8xf32> to vector<256x8xbf16>
    %c0_22 = arith.constant 0 : index
    %c0_23 = arith.constant 0 : index
    %50 = vector.load %arg17[%c0_22, %c0_23] : memref<8x128xbf16, #tpu.memory_space<vmem>>, vector<8x128xbf16>
    %cst_24 = arith.constant dense<0.000000e+00> : vector<256x128xf32>
    %51 = tpu.matmul %49, %50, %cst_24 {dimension_numbers = #tpu.dot_dimension_numbers<[1], [0], [0], [1], [0, 0, 1, 1], [], []>} : vector<256x8xbf16>, vector<8x128xbf16>, vector<256x128xf32> -> vector<256x128xf32>
    %52 = arith.mulf %51, %42 : vector<256x128xf32>
    %53 = arith.truncf %52 : vector<256x128xf32> to vector<256x128xbf16>
    %54 = tpu.iota {dimensions = array<i32: 0>} : vector<8x256xi32>
    %c0_25 = arith.constant 0 : index
    %c0_26 = arith.constant 0 : index
    %55 = vector.load %arg4[%c0_25, %c0_26] : memref<1x256xi32, #tpu.memory_space<vmem>>, vector<1x256xi32>
    %56 = vector.broadcast %55 : vector<1x256xi32> to vector<8x256xi32>
    %57 = arith.cmpi eq, %54, %56 : vector<8x256xi32>
    %58 = arith.extui %57 : vector<8x256xi1> to vector<8x256xi32>
    %59 = arith.sitofp %58 : vector<8x256xi32> to vector<8x256xf32>
    %60 = arith.truncf %59 : vector<8x256xf32> to vector<8x256xbf16>
    %c0_27 = arith.constant 0 : index
    %c0_28 = arith.constant 0 : index
    %61 = vector.load %arg18[%c0_27, %c0_28] : memref<8x128xf32, #tpu.memory_space<vmem>>, vector<8x128xf32>
    %cst_29 = arith.constant dense<0.000000e+00> : vector<8x128xf32>
    %62 = tpu.matmul %60, %53, %cst_29 {dimension_numbers = #tpu.dot_dimension_numbers<[1], [0], [0], [1], [0, 0, 1, 1], [], []>} : vector<8x256xbf16>, vector<256x128xbf16>, vector<8x128xf32> -> vector<8x128xf32>
    %63 = arith.addf %61, %62 : vector<8x128xf32>
    %c0_30 = arith.constant 0 : index
    %c0_31 = arith.constant 0 : index
    %64 = vector.load %arg18[%c0_30, %c0_31] : memref<8x128xf32, #tpu.memory_space<vmem>>, vector<8x128xf32>
    tpu.vector_store %arg18[%c0_30, %c0_31], %63 {strides = array<i32>} : memref<8x128xf32, #tpu.memory_space<vmem>>, vector<8x128xf32>,
    %c0_i32_32 = arith.constant 0 : i32
    %65 = arith.cmpi eq, %arg0, %c0_i32_32 : i32
    %66 = arith.extui %65 : i1 to i32
    %c0_i32_33 = arith.constant 0 : i32
    %67 = arith.cmpi ne, %66, %c0_i32_33 : i32
    scf.if %67 {
      %c0_34 = arith.constant 0 : index
      %c0_35 = arith.constant 0 : index
      %68 = vector.load %arg18[%c0_34, %c0_35] : memref<8x128xf32, #tpu.memory_space<vmem>>, vector<8x128xf32>
      %69 = arith.truncf %68 : vector<8x128xf32> to vector<8x128xbf16>
      %c0_36 = arith.constant 0 : index
      %c0_37 = arith.constant 0 : index
      %70 = vector.load %arg12[%c0_36, %c0_37] : memref<128x128xbf16, #tpu.memory_space<vmem>>, vector<128x128xbf16>
      %cst_38 = arith.constant dense<0.000000e+00> : vector<8x128xf32>
      %71 = tpu.matmul %69, %70, %cst_38 {dimension_numbers = #tpu.dot_dimension_numbers<[1], [0], [0], [1], [0, 0, 1, 1], [], []>} : vector<8x128xbf16>, vector<128x128xbf16>, vector<8x128xf32> -> vector<8x128xf32>
      %c0_39 = arith.constant 0 : index
      %c0_40 = arith.constant 0 : index
      %72 = vector.load %arg13[%c0_39, %c0_40] : memref<1x128xf32, #tpu.memory_space<vmem>>, vector<1x128xf32>
      %73 = vector.broadcast %72 : vector<1x128xf32> to vector<8x128xf32>
      %74 = arith.addf %71, %73 : vector<8x128xf32>
      %cst_41 = arith.constant 0.000000e+00 : f32
      %75 = vector.broadcast %cst_41 : f32 to vector<8x128xf32>
      %76 = arith.maximumf %74, %75 : vector<8x128xf32>
      %77 = vector.broadcast %cst_41 : f32 to vector<8x128xf32>
      %78 = arith.subf %74, %77 : vector<8x128xf32>
      %79 = arith.cmpf one, %78, %78 : vector<8x128xf32>
      %80 = vector.broadcast %cst_41 : f32 to vector<8x128xf32>
      %81 = arith.addf %74, %80 : vector<8x128xf32>
      %82 = math.absf %78 : vector<8x128xf32>
      %cst_42 = arith.constant 0.000000e+00 : f32
      %83 = vector.broadcast %cst_42 : f32 to vector<8x128xf32>
      %84 = arith.subf %83, %82 : vector<8x128xf32>
      %85 = math.exp %84 : vector<8x128xf32>
      %86 = math.log1p %85 : vector<8x128xf32>
      %87 = arith.addf %76, %86 : vector<8x128xf32>
      %88 = arith.select %79, %81, %87 : vector<8x128xi1>, vector<8x128xf32>
      %cst_43 = arith.constant 0.693147182 : f32
      %89 = vector.broadcast %cst_43 : f32 to vector<8x128xf32>
      %90 = arith.subf %88, %89 : vector<8x128xf32>
      %91 = arith.truncf %90 : vector<8x128xf32> to vector<8x128xbf16>
      %c0_44 = arith.constant 0 : index
      %c0_45 = arith.constant 0 : index
      %92 = vector.load %arg14[%c0_44, %c0_45] : memref<128x128xbf16, #tpu.memory_space<vmem>>, vector<128x128xbf16>
      %cst_46 = arith.constant dense<0.000000e+00> : vector<8x128xf32>
      %93 = tpu.matmul %91, %92, %cst_46 {dimension_numbers = #tpu.dot_dimension_numbers<[1], [0], [0], [1], [0, 0, 1, 1], [], []>} : vector<8x128xbf16>, vector<128x128xbf16>, vector<8x128xf32> -> vector<8x128xf32>
      %c0_47 = arith.constant 0 : index
      %c0_48 = arith.constant 0 : index
      %94 = vector.load %arg15[%c0_47, %c0_48] : memref<1x128xf32, #tpu.memory_space<vmem>>, vector<1x128xf32>
      %95 = vector.broadcast %94 : vector<1x128xf32> to vector<8x128xf32>
      %96 = arith.addf %93, %95 : vector<8x128xf32>
      %c0_49 = arith.constant 0 : index
      %c0_50 = arith.constant 0 : index
      %97 = vector.load %arg16[%c0_49, %c0_50] : memref<8x128xf32, #tpu.memory_space<vmem>>, vector<8x128xf32>
      tpu.vector_store %arg16[%c0_49, %c0_50], %96 {strides = array<i32>} : memref<8x128xf32, #tpu.memory_space<vmem>>, vector<8x128xf32>,
    } else {
    }
    return
  }
  func.func @transform_0(%arg0: i32) -> i32 {
    %c0_i32 = arith.constant 0 : i32
    %c0_i32_0 = arith.constant 0 : i32
    return %c0_i32 : i32
  }
  func.func @transform_1(%arg0: i32) -> (i32, i32) {
    %c0_i32 = arith.constant 0 : i32
    %c0_i32_0 = arith.constant 0 : i32
    %c0_i32_1 = arith.constant 0 : i32
    return %c0_i32, %c0_i32_0 : i32, i32
  }
  func.func @transform_2(%arg0: i32) -> (i32, i32) {
    %c0_i32 = arith.constant 0 : i32
    %c0_i32_0 = arith.constant 0 : i32
    return %arg0, %c0_i32 : i32, i32
  }
  func.func @transform_3(%arg0: i32) -> (i32, i32) {
    %c0_i32 = arith.constant 0 : i32
    %c0_i32_0 = arith.constant 0 : i32
    return %c0_i32, %arg0 : i32, i32
  }
  func.func @transform_4(%arg0: i32) -> (i32, i32) {
    %c0_i32 = arith.constant 0 : i32
    %c0_i32_0 = arith.constant 0 : i32
    return %arg0, %c0_i32 : i32, i32
  }
  func.func @transform_5(%arg0: i32) -> (i32, i32) {
    %c0_i32 = arith.constant 0 : i32
    %c0_i32_0 = arith.constant 0 : i32
    return %arg0, %c0_i32 : i32, i32
  }
  func.func @transform_6(%arg0: i32) -> (i32, i32) {
    %c0_i32 = arith.constant 0 : i32
    %c0_i32_0 = arith.constant 0 : i32
    %c0_i32_1 = arith.constant 0 : i32
    return %c0_i32, %c0_i32_0 : i32, i32
  }
  func.func @transform_7(%arg0: i32) -> (i32, i32) {
    %c0_i32 = arith.constant 0 : i32
    %c0_i32_0 = arith.constant 0 : i32
    %c0_i32_1 = arith.constant 0 : i32
    return %c0_i32, %c0_i32_0 : i32, i32
  }
  func.func @transform_8(%arg0: i32) -> (i32, i32) {
    %c0_i32 = arith.constant 0 : i32
    %c0_i32_0 = arith.constant 0 : i32
    %c0_i32_1 = arith.constant 0 : i32
    return %c0_i32, %c0_i32_0 : i32, i32
  }
  func.func @transform_9(%arg0: i32) -> (i32, i32) {
    %c0_i32 = arith.constant 0 : i32
    %c0_i32_0 = arith.constant 0 : i32
    %c0_i32_1 = arith.constant 0 : i32
    return %c0_i32, %c0_i32_0 : i32, i32
  }
  func.func @transform_10(%arg0: i32) -> (i32, i32) {
    %c0_i32 = arith.constant 0 : i32
    %c0_i32_0 = arith.constant 0 : i32
    %c0_i32_1 = arith.constant 0 : i32
    return %c0_i32, %c0_i32_0 : i32, i32
  }
  func.func @transform_11(%arg0: i32) -> (i32, i32) {
    %c0_i32 = arith.constant 0 : i32
    %c0_i32_0 = arith.constant 0 : i32
    %c0_i32_1 = arith.constant 0 : i32
    return %c0_i32, %c0_i32_0 : i32, i32
  }
  func.func @transform_12(%arg0: i32) -> (i32, i32) {
    %c0_i32 = arith.constant 0 : i32
    %c0_i32_0 = arith.constant 0 : i32
    %c0_i32_1 = arith.constant 0 : i32
    return %c0_i32, %c0_i32_0 : i32, i32
  }
  func.func @transform_13(%arg0: i32) -> (i32, i32) {
    %c0_i32 = arith.constant 0 : i32
    %c0_i32_0 = arith.constant 0 : i32
    %c0_i32_1 = arith.constant 0 : i32
    return %c0_i32, %c0_i32_0 : i32, i32
  }
  func.func @transform_14(%arg0: i32) -> (i32, i32) {
    %c0_i32 = arith.constant 0 : i32
    %c0_i32_0 = arith.constant 0 : i32
    %c0_i32_1 = arith.constant 0 : i32
    return %c0_i32, %c0_i32_0 : i32, i32
  }
  func.func @transform_15(%arg0: i32) -> (i32, i32) {
    %c0_i32 = arith.constant 0 : i32
    %c0_i32_0 = arith.constant 0 : i32
    %c0_i32_1 = arith.constant 0 : i32
    return %c0_i32, %c0_i32_0 : i32, i32
  }
}

</mosaic_0001>

<llo_original>
// kernel: tpu_custom_call.1
$region0: #{tpu_custom_call.1}
  #allocation0 [shape = 'u32[]', space=smem, size = 0x4, offset = 0x4, fixed_abs, tag = 'smem constant byte address 0x4 - core index']
  #allocation1 [shape = 'u32[144,128]{1,0:T(1,128)}', space=vmem, size = 0x12000, scoped, tag = 'internal scratch']
  #allocation2 [shape = 'bf16[8,128]{1,0:T(8,128)(2,1)}', space=vmem, size = 0x800, scoped, tag = 'scratch operand']
  #allocation3 [shape = 'f32[8,128]{1,0:T(8,128)}', space=vmem, size = 0x1000, scoped, tag = 'scratch operand']
  #allocation4 [shape = 'f32[1]{0:T(128)S(6)}', space=smem, size = 0x200, scoped, tag = 'scoped memory for tpu_custom_call.1']
  %s0 = inlined_call_operand.<no memory space> [shape: f32[1], index: 0, kind: input, shape index: {}]
  %s1 = inlined_call_operand.vmem [shape: f32[8,128], index: 1, kind: input, shape index: {}]
  %s2 = inlined_call_operand.vmem [shape: s32[256,1], index: 2, kind: input, shape index: {}]
  %s3 = inlined_call_operand.vmem [shape: s32[1,256], index: 3, kind: input, shape index: {}]
  %s4 = inlined_call_operand.vmem [shape: bf16[256,128], index: 4, kind: input, shape index: {}]
  %s5 = inlined_call_operand.vmem [shape: f32[256,1], index: 5, kind: input, shape index: {}]
  %s6 = inlined_call_operand.vmem [shape: bf16[128,128], index: 6, kind: input, shape index: {}]
  %s7 = inlined_call_operand.vmem [shape: f32[1,128], index: 7, kind: input, shape index: {}]
  %s8 = inlined_call_operand.vmem [shape: bf16[128,128], index: 8, kind: input, shape index: {}]
  %s9 = inlined_call_operand.vmem [shape: f32[1,128], index: 9, kind: input, shape index: {}]
  %s10 = inlined_call_operand.vmem [shape: bf16[128,128], index: 10, kind: input, shape index: {}]
  %s11 = inlined_call_operand.vmem [shape: bf16[128,128], index: 11, kind: input, shape index: {}]
  %s12 = inlined_call_operand.vmem [shape: f32[1,128], index: 12, kind: input, shape index: {}]
  %s13 = inlined_call_operand.vmem [shape: bf16[128,128], index: 13, kind: input, shape index: {}]
  %s14 = inlined_call_operand.vmem [shape: f32[1,128], index: 14, kind: input, shape index: {}]
  %s15 = inlined_call_operand.hbm [shape: f32[8,128], index: 15, kind: output, shape index: {}]
  %s16 = sld [smem:[#allocation0]]
  $region78: #{tpu_custom_call.1} parent=0
    _
  %s18 = ssub.s32 1, %s16
  %s19 = scalar_select 0, %s18, %s16
  %20 = sst [smem:[#allocation4]] %s0
  $region1: #{tpu_custom_call.1} parent=0
    #allocation5 [shape = 'u8[4096]{0}', space=vmem, size = 0x1000, scoped, tag = 'output window, operand 0, single buffered']
    #allocation6 [shape = 's32[1]{0}', space=sflag, size = 0x4, scoped, tag = 'scoped memory for tpu_custom_call.1']
    %21 = vsyncpa [#allocation6], 0
    // Predicated region
    $region2: #{tpu_custom_call.1} parent=1 // pred_check
      _
    $region3: #{tpu_custom_call.1} parent=1 // pred_check_branch
      %23 = sbr.rel (0) target = $region5
    $region4: #{tpu_custom_call.1} parent=1 // pred_region
      _
    $region5: #{tpu_custom_call.1} parent=1 // pred_fallthru
      _
    // Predicated region
    $region6: #{tpu_custom_call.1} parent=1 // pred_check
      _
    $region7: #{tpu_custom_call.1} parent=1 // pred_check_branch
      %25 = sbr.rel (0) target = $region9
    $region8: #{tpu_custom_call.1} parent=1 // pred_region
      _
    $region9: #{tpu_custom_call.1} parent=1 // pred_fallthru
      _
    // Predicated region
    $region10: #{tpu_custom_call.1} parent=1 // pred_check
      _
    $region11: #{tpu_custom_call.1} parent=1 // pred_check_branch
      %27 = sbr.rel (0) target = $region13
    $region12: #{tpu_custom_call.1} parent=1 // pred_region
      _
    $region13: #{tpu_custom_call.1} parent=1 // pred_fallthru
      _
    // Predicated region
    $region14: #{tpu_custom_call.1} parent=1 // pred_check
      _
    $region15: #{tpu_custom_call.1} parent=1 // pred_check_branch
      %29 = sbr.rel (0) target = $region17
    $region16: #{tpu_custom_call.1} parent=1 // pred_region
      _
    $region17: #{tpu_custom_call.1} parent=1 // pred_fallthru
      _
    // Predicated region
    $region18: #{tpu_custom_call.1} parent=1 // pred_check
      _
    $region19: #{tpu_custom_call.1} parent=1 // pred_check_branch
      %31 = sbr.rel (0) target = $region21
    $region20: #{tpu_custom_call.1} parent=1 // pred_region
      _
    $region21: #{tpu_custom_call.1} parent=1 // pred_fallthru
      _
    // Predicated region
    $region22: #{tpu_custom_call.1} parent=1 // pred_check
      _
    $region23: #{tpu_custom_call.1} parent=1 // pred_check_branch
      %33 = sbr.rel (0) target = $region25
    $region24: #{tpu_custom_call.1} parent=1 // pred_region
      _
    $region25: #{tpu_custom_call.1} parent=1 // pred_fallthru
      _
    // Predicated region
    $region26: #{tpu_custom_call.1} parent=1 // pred_check
      _
    $region27: #{tpu_custom_call.1} parent=1 // pred_check_branch
      %35 = sbr.rel (0) target = $region29
    $region28: #{tpu_custom_call.1} parent=1 // pred_region
      _
    $region29: #{tpu_custom_call.1} parent=1 // pred_fallthru
      _
    // Predicated region
    $region30: #{tpu_custom_call.1} parent=1 // pred_check
      _
    $region31: #{tpu_custom_call.1} parent=1 // pred_check_branch
      %37 = sbr.rel (0) target = $region33
    $region32: #{tpu_custom_call.1} parent=1 // pred_region
      _
    $region33: #{tpu_custom_call.1} parent=1 // pred_fallthru
      _
    // Predicated region
    $region34: #{tpu_custom_call.1} parent=1 // pred_check
      _
    $region35: #{tpu_custom_call.1} parent=1 // pred_check_branch
      %39 = sbr.rel (0) target = $region37
    $region36: #{tpu_custom_call.1} parent=1 // pred_region
      _
    $region37: #{tpu_custom_call.1} parent=1 // pred_fallthru
      _
    // Predicated region
    $region38: #{tpu_custom_call.1} parent=1 // pred_check
      _
    $region39: #{tpu_custom_call.1} parent=1 // pred_check_branch
      %41 = sbr.rel (0) target = $region41
    $region40: #{tpu_custom_call.1} parent=1 // pred_region
      _
    $region41: #{tpu_custom_call.1} parent=1 // pred_fallthru
      _
    // Predicated region
    $region42: #{tpu_custom_call.1} parent=1 // pred_check
      _
    $region43: #{tpu_custom_call.1} parent=1 // pred_check_branch
      %43 = sbr.rel (0) target = $region45
    $region44: #{tpu_custom_call.1} parent=1 // pred_region
      _
    $region45: #{tpu_custom_call.1} parent=1 // pred_fallthru
      _
    // Predicated region
    $region46: #{tpu_custom_call.1} parent=1 // pred_check
      _
    $region47: #{tpu_custom_call.1} parent=1 // pred_check_branch
      %45 = sbr.rel (0) target = $region49
    $region48: #{tpu_custom_call.1} parent=1 // pred_region
      _
    $region49: #{tpu_custom_call.1} parent=1 // pred_fallthru
      _
    // Predicated region
    $region50: #{tpu_custom_call.1} parent=1 // pred_check
      _
    $region51: #{tpu_custom_call.1} parent=1 // pred_check_branch
      %47 = sbr.rel (0) target = $region53
    $region52: #{tpu_custom_call.1} parent=1 // pred_region
      _
    $region53: #{tpu_custom_call.1} parent=1 // pred_fallthru
      _
    // Predicated region
    $region54: #{tpu_custom_call.1} parent=1 // pred_check
      _
    $region55: #{tpu_custom_call.1} parent=1 // pred_check_branch
      %49 = sbr.rel (0) target = $region57
    $region56: #{tpu_custom_call.1} parent=1 // pred_region
      _
    $region57: #{tpu_custom_call.1} parent=1 // pred_fallthru
      _
    // Predicated region
    $region58: #{tpu_custom_call.1} parent=1 // pred_check
      _
    $region59: #{tpu_custom_call.1} parent=1 // pred_check_branch
      %51 = sbr.rel (0) target = $region61
    $region60: #{tpu_custom_call.1} parent=1 // pred_region
      _
    $region61: #{tpu_custom_call.1} parent=1 // pred_fallthru
      _
    %p53 = scmp.eq.s32.totalorder 0, 0
    // Predicated region
    $region62: #{tpu_custom_call.1} parent=1 // pred_check
      %p54 = pneg %p53
    $region63: #{tpu_custom_call.1} parent=1 // pred_check_branch
      %56 = sbr.rel (%p54) target = $region65
    $region64: #{tpu_custom_call.1} parent=1 // pred_region
      %v57 = vld [vmem:[%s1] sm:$0xff]
      %v58 = vpack.c.bf16 %v57, %v57
      %v59 = vld [vmem:[%s10] sm:$0xf]
      %v60 = vld [vmem:[%s10 + $0x4] sm:$0xf]
      %v61 = vld [vmem:[%s10 + $0x8] sm:$0xf]
      %v62 = vld [vmem:[%s10 + $0xc] sm:$0xf]
      %v63 = vld [vmem:[%s10 + $0x10] sm:$0xf]
      %v64 = vld [vmem:[%s10 + $0x14] sm:$0xf]
      %v65 = vld [vmem:[%s10 + $0x18] sm:$0xf]
      %v66 = vld [vmem:[%s10 + $0x1c] sm:$0xf]
      %v67 = vld [vmem:[%s10 + $0x20] sm:$0xf]
      %v68 = vld [vmem:[%s10 + $0x24] sm:$0xf]
      %v69 = vld [vmem:[%s10 + $0x28] sm:$0xf]
      %v70 = vld [vmem:[%s10 + $0x2c] sm:$0xf]
      %v71 = vld [vmem:[%s10 + $0x30] sm:$0xf]
      %v72 = vld [vmem:[%s10 + $0x34] sm:$0xf]
      %v73 = vld [vmem:[%s10 + $0x38] sm:$0xf]
      %v74 = vld [vmem:[%s10 + $0x3c] sm:$0xf]
      %v91 = vunpack.c.l.b16 %v59
      %v92 = vunpack.c.l.b16 %v60
      %v93 = vunpack.c.l.b16 %v61
      %v94 = vunpack.c.l.b16 %v62
      %v95 = vunpack.c.l.b16 %v63
      %v96 = vunpack.c.l.b16 %v64
      %v97 = vunpack.c.l.b16 %v65
      %v98 = vunpack.c.l.b16 %v66
      %v99 = vunpack.c.l.b16 %v67
      %v100 = vunpack.c.l.b16 %v68
      %v101 = vunpack.c.l.b16 %v69
      %v102 = vunpack.c.l.b16 %v70
      %v103 = vunpack.c.l.b16 %v71
      %v104 = vunpack.c.l.b16 %v72
      %v105 = vunpack.c.l.b16 %v73
      %v106 = vunpack.c.l.b16 %v74
      %v107 = vpack.c.b16 %v92, %v91
      %v108 = vpack.c.b16 %v94, %v93
      %v109 = vpack.c.b16 %v96, %v95
      %v110 = vpack.c.b16 %v98, %v97
      %v111 = vpack.c.b16 %v100, %v99
      %v112 = vpack.c.b16 %v102, %v101
      %v113 = vpack.c.b16 %v104, %v103
      %v114 = vpack.c.b16 %v106, %v105
      %123 = vmatprep.subr.bf16.mxu0 0
      %124 = vmatpush1.bf16.msra.mxu0 %v114
      %125 = vmatprep.subr.bf16.mxu0 0
      %126 = vmatpush1.bf16.msra.mxu0 %v113
      %127 = vmatprep.subr.bf16.mxu0 0
      %128 = vmatpush1.bf16.msra.mxu0 %v112
      %129 = vmatprep.subr.bf16.mxu0 0
      %130 = vmatpush1.bf16.msra.mxu0 %v111
      %131 = vmatprep.subr.bf16.mxu0 0
      %132 = vmatpush1.bf16.msra.mxu0 %v110
      %133 = vmatprep.subr.bf16.mxu0 0
      %134 = vmatpush1.bf16.msra.mxu0 %v109
      %135 = vmatprep.subr.bf16.mxu0 0
      %136 = vmatpush1.bf16.msra.mxu0 %v108
      %137 = vmatprep.subr.bf16.mxu0 0
      %138 = vmatpush1.bf16.msra.mxu0 %v107
      %139 = vmatprep.subr.bf16.mxu0 0
      %140 = vmatpush2.bf16.msra.mxu0 0
      %141 = vmatprep.subr.bf16.mxu0 0
      %142 = vmatpush2.bf16.msra.mxu0 0
      %143 = vmatprep.subr.bf16.mxu0 0
      %144 = vmatpush2.bf16.msra.mxu0 0
      %145 = vmatprep.subr.bf16.mxu0 0
      %146 = vmatpush2.bf16.msra.mxu0 0
      %147 = vmatprep.subr.bf16.mxu0 0
      %148 = vmatpush2.bf16.msra.mxu0 0
      %149 = vmatprep.subr.bf16.mxu0 0
      %150 = vmatpush2.bf16.msra.mxu0 0
      %151 = vmatprep.subr.bf16.mxu0 0
      %152 = vmatpush2.bf16.msra.mxu0 0
      %153 = vmatprep.subr.bf16.mxu0 0
      %154 = vmatpush2.bf16.msra.mxu0 0
      %155 = vmatprep.mubr.bf16.mxu0 0
      %156 = vmatmul.mubr.bf16.gmra.mxu0 %v58
      %v157 = vpop.f32.mrf.mxu0
      %v158 = vadd.f32 0.0, %v157
      %v159 = vpop.f32.mrf.mxu0
      %v160 = vpop.f32.mrf.mxu0
      %v161 = vpop.f32.mrf.mxu0
      %162 = vdwg.mxu0
      %v163 = vpack.c.bf16 %v158, %v158
      %164 = vst [vmem:[#allocation2] sm:$0xf] %v163
      %165 = vst [vmem:[#allocation3] sm:$0xff] 0.0
    $region65: #{tpu_custom_call.1} parent=1 // pred_fallthru
      _
    %v166 = vld [vmem:[%s4] sm:$0xf]
    %v167 = vld [vmem:[%s4 + $0x4] sm:$0xf]
    %v168 = vld [vmem:[%s4 + $0x8] sm:$0xf]
    %v169 = vld [vmem:[%s4 + $0xc] sm:$0xf]
    %v170 = vld [vmem:[%s4 + $0x10] sm:$0xf]
    %v171 = vld [vmem:[%s4 + $0x14] sm:$0xf]
    %v172 = vld [vmem:[%s4 + $0x18] sm:$0xf]
    %v173 = vld [vmem:[%s4 + $0x1c] sm:$0xf]
    %v174 = vld [vmem:[%s4 + $0x20] sm:$0xf]
    %v175 = vld [vmem:[%s4 + $0x24] sm:$0xf]
    %v176 = vld [vmem:[%s4 + $0x28] sm:$0xf]
    %v177 = vld [vmem:[%s4 + $0x2c] sm:$0xf]
    %v178 = vld [vmem:[%s4 + $0x30] sm:$0xf]
    %v179 = vld [vmem:[%s4 + $0x34] sm:$0xf]
    %v180 = vld [vmem:[%s4 + $0x38] sm:$0xf]
    %v181 = vld [vmem:[%s4 + $0x3c] sm:$0xf]
    %v182 = vld [vmem:[%s4 + $0x40] sm:$0xf]
    %v183 = vld [vmem:[%s4 + $0x44] sm:$0xf]
    %v184 = vld [vmem:[%s4 + $0x48] sm:$0xf]
    %v185 = vld [vmem:[%s4 + $0x4c] sm:$0xf]
    %v186 = vld [vmem:[%s4 + $0x50] sm:$0xf]
    %v187 = vld [vmem:[%s4 + $0x54] sm:$0xf]
    %v188 = vld [vmem:[%s4 + $0x58] sm:$0xf]
    %v189 = vld [vmem:[%s4 + $0x5c] sm:$0xf]
    %v190 = vld [vmem:[%s4 + $0x60] sm:$0xf]
    %v191 = vld [vmem:[%s4 + $0x64] sm:$0xf]
    %v192 = vld [vmem:[%s4 + $0x68] sm:$0xf]
    %v193 = vld [vmem:[%s4 + $0x6c] sm:$0xf]
    %v194 = vld [vmem:[%s4 + $0x70] sm:$0xf]
    %v195 = vld [vmem:[%s4 + $0x74] sm:$0xf]
    %v196 = vld [vmem:[%s4 + $0x78] sm:$0xf]
    %v197 = vld [vmem:[%s4 + $0x7c] sm:$0xf]
    %v198 = vld [vmem:[%s6] sm:$0xf]
    %v199 = vld [vmem:[%s6 + $0x4] sm:$0xf]
    %v200 = vld [vmem:[%s6 + $0x8] sm:$0xf]
    %v201 = vld [vmem:[%s6 + $0xc] sm:$0xf]
    %v202 = vld [vmem:[%s6 + $0x10] sm:$0xf]
    %v203 = vld [vmem:[%s6 + $0x14] sm:$0xf]
    %v204 = vld [vmem:[%s6 + $0x18] sm:$0xf]
    %v205 = vld [vmem:[%s6 + $0x1c] sm:$0xf]
    %v206 = vld [vmem:[%s6 + $0x20] sm:$0xf]
    %v207 = vld [vmem:[%s6 + $0x24] sm:$0xf]
    %v208 = vld [vmem:[%s6 + $0x28] sm:$0xf]
    %v209 = vld [vmem:[%s6 + $0x2c] sm:$0xf]
    %v210 = vld [vmem:[%s6 + $0x30] sm:$0xf]
    %v211 = vld [vmem:[%s6 + $0x34] sm:$0xf]
    %v212 = vld [vmem:[%s6 + $0x38] sm:$0xf]
    %v213 = vld [vmem:[%s6 + $0x3c] sm:$0xf]
    %v214 = vld [vmem:[%s7] sm:$0x1]
    %v216 = vlaneseq
    %v217 = vshrl.u32 %v216, 7
    %v218 = vsub.s32 0, %v217
    %v219 = vrot.slane %v214, %v218
    %v253 = vunpack.c.l.b16 %v166
    %v254 = vunpack.c.l.b16 %v167
    %v255 = vunpack.c.l.b16 %v168
    %v256 = vunpack.c.l.b16 %v169
    %v257 = vunpack.c.l.b16 %v170
    %v258 = vunpack.c.l.b16 %v171
    %v259 = vunpack.c.l.b16 %v172
    %v260 = vunpack.c.l.b16 %v173
    %v261 = vunpack.c.l.b16 %v174
    %v262 = vunpack.c.l.b16 %v175
    %v263 = vunpack.c.l.b16 %v176
    %v264 = vunpack.c.l.b16 %v177
    %v265 = vunpack.c.l.b16 %v178
    %v266 = vunpack.c.l.b16 %v179
    %v267 = vunpack.c.l.b16 %v180
    %v268 = vunpack.c.l.b16 %v181
    %v269 = vunpack.c.l.b16 %v182
    %v270 = vunpack.c.l.b16 %v183
    %v271 = vunpack.c.l.b16 %v184
    %v272 = vunpack.c.l.b16 %v185
    %v273 = vunpack.c.l.b16 %v186
    %v274 = vunpack.c.l.b16 %v187
    %v275 = vunpack.c.l.b16 %v188
    %v276 = vunpack.c.l.b16 %v189
    %v277 = vunpack.c.l.b16 %v190
    %v278 = vunpack.c.l.b16 %v191
    %v279 = vunpack.c.l.b16 %v192
    %v280 = vunpack.c.l.b16 %v193
    %v281 = vunpack.c.l.b16 %v194
    %v282 = vunpack.c.l.b16 %v195
    %v283 = vunpack.c.l.b16 %v196
    %v284 = vunpack.c.l.b16 %v197
    %v285 = vpack.c.b16 %v254, %v253
    %v286 = vpack.c.b16 %v256, %v255
    %v287 = vpack.c.b16 %v258, %v257
    %v288 = vpack.c.b16 %v260, %v259
    %v289 = vpack.c.b16 %v262, %v261
    %v290 = vpack.c.b16 %v264, %v263
    %v291 = vpack.c.b16 %v266, %v265
    %v292 = vpack.c.b16 %v268, %v267
    %v293 = vpack.c.b16 %v270, %v269
    %v294 = vpack.c.b16 %v272, %v271
    %v295 = vpack.c.b16 %v274, %v273
    %v296 = vpack.c.b16 %v276, %v275
    %v297 = vpack.c.b16 %v278, %v277
    %v298 = vpack.c.b16 %v280, %v279
    %v299 = vpack.c.b16 %v282, %v281
    %v300 = vpack.c.b16 %v284, %v283
    %v333 = vunpack.c.l.b16 %v198
    %v334 = vunpack.c.l.b16 %v199
    %v335 = vunpack.c.l.b16 %v200
    %v336 = vunpack.c.l.b16 %v201
    %v337 = vunpack.c.l.b16 %v202
    %v338 = vunpack.c.l.b16 %v203
    %v339 = vunpack.c.l.b16 %v204
    %v340 = vunpack.c.l.b16 %v205
    %v341 = vunpack.c.l.b16 %v206
    %v342 = vunpack.c.l.b16 %v207
    %v343 = vunpack.c.l.b16 %v208
    %v344 = vunpack.c.l.b16 %v209
    %v345 = vunpack.c.l.b16 %v210
    %v346 = vunpack.c.l.b16 %v211
    %v347 = vunpack.c.l.b16 %v212
    %v348 = vunpack.c.l.b16 %v213
    %v349 = vpack.c.b16 %v334, %v333
    %v350 = vpack.c.b16 %v336, %v335
    %v351 = vpack.c.b16 %v338, %v337
    %v352 = vpack.c.b16 %v340, %v339
    %v353 = vpack.c.b16 %v342, %v341
    %v354 = vpack.c.b16 %v344, %v343
    %v355 = vpack.c.b16 %v346, %v345
    %v356 = vpack.c.b16 %v348, %v347
    %365 = vmatprep.subr.bf16.mxu0 0
    %366 = vmatpush1.bf16.msra.mxu0 %v356
    %367 = vmatprep.subr.bf16.mxu0 0
    %368 = vmatpush1.bf16.msra.mxu0 %v355
    %369 = vmatprep.subr.bf16.mxu0 0
    %370 = vmatpush1.bf16.msra.mxu0 %v354
    %371 = vmatprep.subr.bf16.mxu0 0
    %372 = vmatpush1.bf16.msra.mxu0 %v353
    %373 = vmatprep.subr.bf16.mxu0 0
    %374 = vmatpush1.bf16.msra.mxu0 %v352
    %375 = vmatprep.subr.bf16.mxu0 0
    %376 = vmatpush1.bf16.msra.mxu0 %v351
    %377 = vmatprep.subr.bf16.mxu0 0
    %378 = vmatpush1.bf16.msra.mxu0 %v350
    %379 = vmatprep.subr.bf16.mxu0 0
    %380 = vmatpush1.bf16.msra.mxu0 %v349
    %381 = vmatprep.subr.bf16.mxu0 0
    %382 = vmatpush2.bf16.msra.mxu0 0
    %383 = vmatprep.subr.bf16.mxu0 0
    %384 = vmatpush2.bf16.msra.mxu0 0
    %385 = vmatprep.subr.bf16.mxu0 0
    %386 = vmatpush2.bf16.msra.mxu0 0
    %387 = vmatprep.subr.bf16.mxu0 0
    %388 = vmatpush2.bf16.msra.mxu0 0
    %389 = vmatprep.subr.bf16.mxu0 0
    %390 = vmatpush2.bf16.msra.mxu0 0
    %391 = vmatprep.subr.bf16.mxu0 0
    %392 = vmatpush2.bf16.msra.mxu0 0
    %393 = vmatprep.subr.bf16.mxu0 0
    %394 = vmatpush2.bf16.msra.mxu0 0
    %395 = vmatprep.subr.bf16.mxu0 0
    %396 = vmatpush2.bf16.msra.mxu0 0
    %397 = vmatprep.mubr.bf16.mxu0 0
    %398 = vmatmul.mubr.bf16.gmra.mxu0 %v285
    %v399 = vpop.f32.mrf.mxu0
    %v400 = vadd.f32 %v219, %v399
    %v401 = vpop.f32.mrf.mxu0
    %v402 = vpop.f32.mrf.mxu0
    %v403 = vadd.f32 %v219, %v402
    %v404 = vpop.f32.mrf.mxu0
    %405 = vmatprep.mubr.bf16.mxu0 0
    %406 = vmatmul.mubr.bf16.gmra.mxu0 %v286
    %v407 = vpop.f32.mrf.mxu0
    %v408 = vadd.f32 %v219, %v407
    %v409 = vpop.f32.mrf.mxu0
    %v410 = vpop.f32.mrf.mxu0
    %v411 = vadd.f32 %v219, %v410
    %v412 = vpop.f32.mrf.mxu0
    %413 = vmatprep.mubr.bf16.mxu0 0
    %414 = vmatmul.mubr.bf16.gmra.mxu0 %v287
    %v415 = vpop.f32.mrf.mxu0
    %v416 = vadd.f32 %v219, %v415
    %v417 = vpop.f32.mrf.mxu0
    %v418 = vpop.f32.mrf.mxu0
    %v419 = vadd.f32 %v219, %v418
    %v420 = vpop.f32.mrf.mxu0
    %421 = vmatprep.mubr.bf16.mxu0 0
    %422 = vmatmul.mubr.bf16.gmra.mxu0 %v288
    %v423 = vpop.f32.mrf.mxu0
    %v424 = vadd.f32 %v219, %v423
    %v425 = vpop.f32.mrf.mxu0
    %v426 = vpop.f32.mrf.mxu0
    %v427 = vadd.f32 %v219, %v426
    %v428 = vpop.f32.mrf.mxu0
    %429 = vmatprep.mubr.bf16.mxu0 0
    %430 = vmatmul.mubr.bf16.gmra.mxu0 %v289
    %v431 = vpop.f32.mrf.mxu0
    %v432 = vadd.f32 %v219, %v431
    %v433 = vpop.f32.mrf.mxu0
    %v434 = vpop.f32.mrf.mxu0
    %v435 = vadd.f32 %v219, %v434
    %v436 = vpop.f32.mrf.mxu0
    %437 = vmatprep.mubr.bf16.mxu0 0
    %438 = vmatmul.mubr.bf16.gmra.mxu0 %v290
    %v439 = vpop.f32.mrf.mxu0
    %v440 = vadd.f32 %v219, %v439
    %v441 = vpop.f32.mrf.mxu0
    %v442 = vpop.f32.mrf.mxu0
    %v443 = vadd.f32 %v219, %v442
    %v444 = vpop.f32.mrf.mxu0
    %445 = vmatprep.mubr.bf16.mxu0 0
    %446 = vmatmul.mubr.bf16.gmra.mxu0 %v291
    %v447 = vpop.f32.mrf.mxu0
    %v448 = vadd.f32 %v219, %v447
    %v449 = vpop.f32.mrf.mxu0
    %v450 = vpop.f32.mrf.mxu0
    %v451 = vadd.f32 %v219, %v450
    %v452 = vpop.f32.mrf.mxu0
    %453 = vmatprep.mubr.bf16.mxu0 0
    %454 = vmatmul.mubr.bf16.gmra.mxu0 %v292
    %v455 = vpop.f32.mrf.mxu0
    %v456 = vadd.f32 %v219, %v455
    %v457 = vpop.f32.mrf.mxu0
    %v458 = vpop.f32.mrf.mxu0
    %v459 = vadd.f32 %v219, %v458
    %v460 = vpop.f32.mrf.mxu0
    %461 = vmatprep.mubr.bf16.mxu0 0
    %462 = vmatmul.mubr.bf16.gmra.mxu0 %v293
    %v463 = vpop.f32.mrf.mxu0
    %v464 = vadd.f32 %v219, %v463
    %v465 = vpop.f32.mrf.mxu0
    %v466 = vpop.f32.mrf.mxu0
    %v467 = vadd.f32 %v219, %v466
    %v468 = vpop.f32.mrf.mxu0
    %469 = vmatprep.mubr.bf16.mxu0 0
    %470 = vmatmul.mubr.bf16.gmra.mxu0 %v294
    %v471 = vpop.f32.mrf.mxu0
    %v472 = vadd.f32 %v219, %v471
    %v473 = vpop.f32.mrf.mxu0
    %v474 = vpop.f32.mrf.mxu0
    %v475 = vadd.f32 %v219, %v474
    %v476 = vpop.f32.mrf.mxu0
    %477 = vmatprep.mubr.bf16.mxu0 0
    %478 = vmatmul.mubr.bf16.gmra.mxu0 %v295
    %v479 = vpop.f32.mrf.mxu0
    %v480 = vadd.f32 %v219, %v479
    %v481 = vpop.f32.mrf.mxu0
    %v482 = vpop.f32.mrf.mxu0
    %v483 = vadd.f32 %v219, %v482
    %v484 = vpop.f32.mrf.mxu0
    %485 = vmatprep.mubr.bf16.mxu0 0
    %486 = vmatmul.mubr.bf16.gmra.mxu0 %v296
    %v487 = vpop.f32.mrf.mxu0
    %v488 = vadd.f32 %v219, %v487
    %v489 = vpop.f32.mrf.mxu0
    %v490 = vpop.f32.mrf.mxu0
    %v491 = vadd.f32 %v219, %v490
    %v492 = vpop.f32.mrf.mxu0
    %493 = vmatprep.mubr.bf16.mxu0 0
    %494 = vmatmul.mubr.bf16.gmra.mxu0 %v297
    %v495 = vpop.f32.mrf.mxu0
    %v496 = vadd.f32 %v219, %v495
    %v497 = vpop.f32.mrf.mxu0
    %v498 = vpop.f32.mrf.mxu0
    %v499 = vadd.f32 %v219, %v498
    %v500 = vpop.f32.mrf.mxu0
    %501 = vmatprep.mubr.bf16.mxu0 0
    %502 = vmatmul.mubr.bf16.gmra.mxu0 %v298
    %v503 = vpop.f32.mrf.mxu0
    %v504 = vadd.f32 %v219, %v503
    %v505 = vpop.f32.mrf.mxu0
    %v506 = vpop.f32.mrf.mxu0
    %v507 = vadd.f32 %v219, %v506
    %v508 = vpop.f32.mrf.mxu0
    %509 = vmatprep.mubr.bf16.mxu0 0
    %510 = vmatmul.mubr.bf16.gmra.mxu0 %v299
    %v511 = vpop.f32.mrf.mxu0
    %v512 = vadd.f32 %v219, %v511
    %v513 = vpop.f32.mrf.mxu0
    %v514 = vpop.f32.mrf.mxu0
    %v515 = vadd.f32 %v219, %v514
    %v516 = vpop.f32.mrf.mxu0
    %517 = vmatprep.mubr.bf16.mxu0 0
    %518 = vmatmul.mubr.bf16.gmra.mxu0 %v300
    %v519 = vpop.f32.mrf.mxu0
    %v520 = vadd.f32 %v219, %v519
    %v521 = vpop.f32.mrf.mxu0
    %v522 = vpop.f32.mrf.mxu0
    %v523 = vadd.f32 %v219, %v522
    %v524 = vpop.f32.mrf.mxu0
    %525 = vdwg.mxu0
    %v526 = vmax.f32 %v400, 0.0
    %v527 = vmax.f32 %v403, 0.0
    %v528 = vmax.f32 %v408, 0.0
    %v529 = vmax.f32 %v411, 0.0
    %v530 = vmax.f32 %v416, 0.0
    %v531 = vmax.f32 %v419, 0.0
    %v532 = vmax.f32 %v424, 0.0
    %v533 = vmax.f32 %v427, 0.0
    %v534 = vmax.f32 %v432, 0.0
    %v535 = vmax.f32 %v435, 0.0
    %v536 = vmax.f32 %v440, 0.0
    %v537 = vmax.f32 %v443, 0.0
    %v538 = vmax.f32 %v448, 0.0
    %v539 = vmax.f32 %v451, 0.0
    %v540 = vmax.f32 %v456, 0.0
    %v541 = vmax.f32 %v459, 0.0
    %v542 = vmax.f32 %v464, 0.0
    %v543 = vmax.f32 %v467, 0.0
    %v544 = vmax.f32 %v472, 0.0
    %v545 = vmax.f32 %v475, 0.0
    %v546 = vmax.f32 %v480, 0.0
    %v547 = vmax.f32 %v483, 0.0
    %v548 = vmax.f32 %v488, 0.0
    %v549 = vmax.f32 %v491, 0.0
    %v550 = vmax.f32 %v496, 0.0
    %v551 = vmax.f32 %v499, 0.0
    %v552 = vmax.f32 %v504, 0.0
    %v553 = vmax.f32 %v507, 0.0
    %v554 = vmax.f32 %v512, 0.0
    %v555 = vmax.f32 %v515, 0.0
    %v556 = vmax.f32 %v520, 0.0
    %v557 = vmax.f32 %v523, 0.0
    %vm558 = vcmp.ne.f32.partialorder %v400, %v400
    %vm559 = vcmp.ne.f32.partialorder %v403, %v403
    %vm560 = vcmp.ne.f32.partialorder %v408, %v408
    %vm561 = vcmp.ne.f32.partialorder %v411, %v411
    %vm562 = vcmp.ne.f32.partialorder %v416, %v416
    %vm563 = vcmp.ne.f32.partialorder %v419, %v419
    %vm564 = vcmp.ne.f32.partialorder %v424, %v424
    %vm565 = vcmp.ne.f32.partialorder %v427, %v427
    %vm566 = vcmp.ne.f32.partialorder %v432, %v432
    %vm567 = vcmp.ne.f32.partialorder %v435, %v435
    %vm568 = vcmp.ne.f32.partialorder %v440, %v440
    %vm569 = vcmp.ne.f32.partialorder %v443, %v443
    %vm570 = vcmp.ne.f32.partialorder %v448, %v448
    %vm571 = vcmp.ne.f32.partialorder %v451, %v451
    %vm572 = vcmp.ne.f32.partialorder %v456, %v456
    %vm573 = vcmp.ne.f32.partialorder %v459, %v459
    %vm574 = vcmp.ne.f32.partialorder %v464, %v464
    %vm575 = vcmp.ne.f32.partialorder %v467, %v467
    %vm576 = vcmp.ne.f32.partialorder %v472, %v472
    %vm577 = vcmp.ne.f32.partialorder %v475, %v475
    %vm578 = vcmp.ne.f32.partialorder %v480, %v480
    %vm579 = vcmp.ne.f32.partialorder %v483, %v483
    %vm580 = vcmp.ne.f32.partialorder %v488, %v488
    %vm581 = vcmp.ne.f32.partialorder %v491, %v491
    %vm582 = vcmp.ne.f32.partialorder %v496, %v496
    %vm583 = vcmp.ne.f32.partialorder %v499, %v499
    %vm584 = vcmp.ne.f32.partialorder %v504, %v504
    %vm585 = vcmp.ne.f32.partialorder %v507, %v507
    %vm586 = vcmp.ne.f32.partialorder %v512, %v512
    %vm587 = vcmp.ne.f32.partialorder %v515, %v515
    %vm588 = vcmp.ne.f32.partialorder %v520, %v520
    %vm589 = vcmp.ne.f32.partialorder %v523, %v523
    %v590 = vadd.f32 %v400, 0.0
    %v591 = vadd.f32 %v403, 0.0
    %v592 = vadd.f32 %v408, 0.0
    %v593 = vadd.f32 %v411, 0.0
    %v594 = vadd.f32 %v416, 0.0
    %v595 = vadd.f32 %v419, 0.0
    %v596 = vadd.f32 %v424, 0.0
    %v597 = vadd.f32 %v427, 0.0
    %v598 = vadd.f32 %v432, 0.0
    %v599 = vadd.f32 %v435, 0.0
    %v600 = vadd.f32 %v440, 0.0
    %v601 = vadd.f32 %v443, 0.0
    %v602 = vadd.f32 %v448, 0.0
    %v603 = vadd.f32 %v451, 0.0
    %v604 = vadd.f32 %v456, 0.0
    %v605 = vadd.f32 %v459, 0.0
    %v606 = vadd.f32 %v464, 0.0
    %v607 = vadd.f32 %v467, 0.0
    %v608 = vadd.f32 %v472, 0.0
    %v609 = vadd.f32 %v475, 0.0
    %v610 = vadd.f32 %v480, 0.0
    %v611 = vadd.f32 %v483, 0.0
    %v612 = vadd.f32 %v488, 0.0
    %v613 = vadd.f32 %v491, 0.0
    %v614 = vadd.f32 %v496, 0.0
    %v615 = vadd.f32 %v499, 0.0
    %v616 = vadd.f32 %v504, 0.0
    %v617 = vadd.f32 %v507, 0.0
    %v618 = vadd.f32 %v512, 0.0
    %v619 = vadd.f32 %v515, 0.0
    %v620 = vadd.f32 %v520, 0.0
    %v621 = vadd.f32 %v523, 0.0
    %v622 = vand.u32 2147483647, %v400
    %v623 = vand.u32 2147483647, %v403
    %v624 = vand.u32 2147483647, %v408
    %v625 = vand.u32 2147483647, %v411
    %v626 = vand.u32 2147483647, %v416
    %v627 = vand.u32 2147483647, %v419
    %v628 = vand.u32 2147483647, %v424
    %v629 = vand.u32 2147483647, %v427
    %v630 = vand.u32 2147483647, %v432
    %v631 = vand.u32 2147483647, %v435
    %v632 = vand.u32 2147483647, %v440
    %v633 = vand.u32 2147483647, %v443
    %v634 = vand.u32 2147483647, %v448
    %v635 = vand.u32 2147483647, %v451
    %v636 = vand.u32 2147483647, %v456
    %v637 = vand.u32 2147483647, %v459
    %v638 = vand.u32 2147483647, %v464
    %v639 = vand.u32 2147483647, %v467
    %v640 = vand.u32 2147483647, %v472
    %v641 = vand.u32 2147483647, %v475
    %v642 = vand.u32 2147483647, %v480
    %v643 = vand.u32 2147483647, %v483
    %v644 = vand.u32 2147483647, %v488
    %v645 = vand.u32 2147483647, %v491
    %v646 = vand.u32 2147483647, %v496
    %v647 = vand.u32 2147483647, %v499
    %v648 = vand.u32 2147483647, %v504
    %v649 = vand.u32 2147483647, %v507
    %v650 = vand.u32 2147483647, %v512
    %v651 = vand.u32 2147483647, %v515
    %v652 = vand.u32 2147483647, %v520
    %v653 = vand.u32 2147483647, %v523
    %v654 = vsub.f32 0.0, %v622
    %v655 = vsub.f32 0.0, %v623
    %v656 = vsub.f32 0.0, %v624
    %v657 = vsub.f32 0.0, %v625
    %v658 = vsub.f32 0.0, %v626
    %v659 = vsub.f32 0.0, %v627
    %v660 = vsub.f32 0.0, %v628
    %v661 = vsub.f32 0.0, %v629
    %v662 = vsub.f32 0.0, %v630
    %v663 = vsub.f32 0.0, %v631
    %v664 = vsub.f32 0.0, %v632
    %v665 = vsub.f32 0.0, %v633
    %v666 = vsub.f32 0.0, %v634
    %v667 = vsub.f32 0.0, %v635
    %v668 = vsub.f32 0.0, %v636
    %v669 = vsub.f32 0.0, %v637
    %v670 = vsub.f32 0.0, %v638
    %v671 = vsub.f32 0.0, %v639
    %v672 = vsub.f32 0.0, %v640
    %v673 = vsub.f32 0.0, %v641
    %v674 = vsub.f32 0.0, %v642
    %v675 = vsub.f32 0.0, %v643
    %v676 = vsub.f32 0.0, %v644
    %v677 = vsub.f32 0.0, %v645
    %v678 = vsub.f32 0.0, %v646
    %v679 = vsub.f32 0.0, %v647
    %v680 = vsub.f32 0.0, %v648
    %v681 = vsub.f32 0.0, %v649
    %v682 = vsub.f32 0.0, %v650
    %v683 = vsub.f32 0.0, %v651
    %v684 = vsub.f32 0.0, %v652
    %v685 = vsub.f32 0.0, %v653
    %v686 = vmul.f32 %v654, 1.442695
    %v687 = vpow.pop %v686
    %v688 = vmul.f32 %v655, 1.442695
    %v689 = vpow.pop %v688
    %v690 = vmul.f32 %v656, 1.442695
    %v691 = vpow.pop %v690
    %v692 = vmul.f32 %v657, 1.442695
    %v693 = vpow.pop %v692
    %v694 = vmul.f32 %v658, 1.442695
    %v695 = vpow.pop %v694
    %v696 = vmul.f32 %v659, 1.442695
    %v697 = vpow.pop %v696
    %v698 = vmul.f32 %v660, 1.442695
    %v699 = vpow.pop %v698
    %v700 = vmul.f32 %v661, 1.442695
    %v701 = vpow.pop %v700
    %v702 = vmul.f32 %v662, 1.442695
    %v703 = vpow.pop %v702
    %v704 = vmul.f32 %v663, 1.442695
    %v705 = vpow.pop %v704
    %v706 = vmul.f32 %v664, 1.442695
    %v707 = vpow.pop %v706
    %v708 = vmul.f32 %v665, 1.442695
    %v709 = vpow.pop %v708
    %v710 = vmul.f32 %v666, 1.442695
    %v711 = vpow.pop %v710
    %v712 = vmul.f32 %v667, 1.442695
    %v713 = vpow.pop %v712
    %v714 = vmul.f32 %v668, 1.442695
    %v715 = vpow.pop %v714
    %v716 = vmul.f32 %v669, 1.442695
    %v717 = vpow.pop %v716
    %v718 = vmul.f32 %v670, 1.442695
    %v719 = vpow.pop %v718
    %v720 = vmul.f32 %v671, 1.442695
    %v721 = vpow.pop %v720
    %v722 = vmul.f32 %v672, 1.442695
    %v723 = vpow.pop %v722
    %v724 = vmul.f32 %v673, 1.442695
    %v725 = vpow.pop %v724
    %v726 = vmul.f32 %v674, 1.442695
    %v727 = vpow.pop %v726
    %v728 = vmul.f32 %v675, 1.442695
    %v729 = vpow.pop %v728
    %v730 = vmul.f32 %v676, 1.442695
    %v731 = vpow.pop %v730
    %v732 = vmul.f32 %v677, 1.442695
    %v733 = vpow.pop %v732
    %v734 = vmul.f32 %v678, 1.442695
    %v735 = vpow.pop %v734
    %v736 = vmul.f32 %v679, 1.442695
    %v737 = vpow.pop %v736
    %v738 = vmul.f32 %v680, 1.442695
    %v739 = vpow.pop %v738
    %v740 = vmul.f32 %v681, 1.442695
    %v741 = vpow.pop %v740
    %v742 = vmul.f32 %v682, 1.442695
    %v743 = vpow.pop %v742
    %v744 = vmul.f32 %v683, 1.442695
    %v745 = vpow.pop %v744
    %v746 = vmul.f32 %v684, 1.442695
    %v747 = vpow.pop %v746
    %v748 = vmul.f32 %v685, 1.442695
    %v749 = vpow.pop %v748
    %v750 = vadd.f32 %v687, 1.0
    %v751 = vlog2.pop %v750
    %v752 = vmul.f32 %v751, 0.6931472
    %v753 = vmul.f32 -0.5, %v687
    %v754 = vadd.f32 %v753, 1.0
    %v755 = vmul.f32 %v754, %v687
    %v756 = vand.u32 2147483647, %v687
    %vm757 = vcmp.lt.f32.partialorder %v756, 0.0004427343
    %v758 = vsel %vm757, %v755, %v752
    %v759 = vadd.f32 %v689, 1.0
    %v760 = vlog2.pop %v759
    %v761 = vmul.f32 %v760, 0.6931472
    %v762 = vmul.f32 -0.5, %v689
    %v763 = vadd.f32 %v762, 1.0
    %v764 = vmul.f32 %v763, %v689
    %v765 = vand.u32 2147483647, %v689
    %vm766 = vcmp.lt.f32.partialorder %v765, 0.0004427343
    %v767 = vsel %vm766, %v764, %v761
    %v768 = vadd.f32 %v691, 1.0
    %v769 = vlog2.pop %v768
    %v770 = vmul.f32 %v769, 0.6931472
    %v771 = vmul.f32 -0.5, %v691
    %v772 = vadd.f32 %v771, 1.0
    %v773 = vmul.f32 %v772, %v691
    %v774 = vand.u32 2147483647, %v691
    %vm775 = vcmp.lt.f32.partialorder %v774, 0.0004427343
    %v776 = vsel %vm775, %v773, %v770
    %v777 = vadd.f32 %v693, 1.0
    %v778 = vlog2.pop %v777
    %v779 = vmul.f32 %v778, 0.6931472
    %v780 = vmul.f32 -0.5, %v693
    %v781 = vadd.f32 %v780, 1.0
    %v782 = vmul.f32 %v781, %v693
    %v783 = vand.u32 2147483647, %v693
    %vm784 = vcmp.lt.f32.partialorder %v783, 0.0004427343
    %v785 = vsel %vm784, %v782, %v779
    %v786 = vadd.f32 %v695, 1.0
    %v787 = vlog2.pop %v786
    %v788 = vmul.f32 %v787, 0.6931472
    %v789 = vmul.f32 -0.5, %v695
    %v790 = vadd.f32 %v789, 1.0
    %v791 = vmul.f32 %v790, %v695
    %v792 = vand.u32 2147483647, %v695
    %vm793 = vcmp.lt.f32.partialorder %v792, 0.0004427343
    %v794 = vsel %vm793, %v791, %v788
    %v795 = vadd.f32 %v697, 1.0
    %v796 = vlog2.pop %v795
    %v797 = vmul.f32 %v796, 0.6931472
    %v798 = vmul.f32 -0.5, %v697
    %v799 = vadd.f32 %v798, 1.0
    %v800 = vmul.f32 %v799, %v697
    %v801 = vand.u32 2147483647, %v697
    %vm802 = vcmp.lt.f32.partialorder %v801, 0.0004427343
    %v803 = vsel %vm802, %v800, %v797
    %v804 = vadd.f32 %v699, 1.0
    %v805 = vlog2.pop %v804
    %v806 = vmul.f32 %v805, 0.6931472
    %v807 = vmul.f32 -0.5, %v699
    %v808 = vadd.f32 %v807, 1.0
    %v809 = vmul.f32 %v808, %v699
    %v810 = vand.u32 2147483647, %v699
    %vm811 = vcmp.lt.f32.partialorder %v810, 0.0004427343
    %v812 = vsel %vm811, %v809, %v806
    %v813 = vadd.f32 %v701, 1.0
    %v814 = vlog2.pop %v813
    %v815 = vmul.f32 %v814, 0.6931472
    %v816 = vmul.f32 -0.5, %v701
    %v817 = vadd.f32 %v816, 1.0
    %v818 = vmul.f32 %v817, %v701
    %v819 = vand.u32 2147483647, %v701
    %vm820 = vcmp.lt.f32.partialorder %v819, 0.0004427343
    %v821 = vsel %vm820, %v818, %v815
    %v822 = vadd.f32 %v703, 1.0
    %v823 = vlog2.pop %v822
    %v824 = vmul.f32 %v823, 0.6931472
    %v825 = vmul.f32 -0.5, %v703
    %v826 = vadd.f32 %v825, 1.0
    %v827 = vmul.f32 %v826, %v703
    %v828 = vand.u32 2147483647, %v703
    %vm829 = vcmp.lt.f32.partialorder %v828, 0.0004427343
    %v830 = vsel %vm829, %v827, %v824
    %v831 = vadd.f32 %v705, 1.0
    %v832 = vlog2.pop %v831
    %v833 = vmul.f32 %v832, 0.6931472
    %v834 = vmul.f32 -0.5, %v705
    %v835 = vadd.f32 %v834, 1.0
    %v836 = vmul.f32 %v835, %v705
    %v837 = vand.u32 2147483647, %v705
    %vm838 = vcmp.lt.f32.partialorder %v837, 0.0004427343
    %v839 = vsel %vm838, %v836, %v833
    %v840 = vadd.f32 %v707, 1.0
    %v841 = vlog2.pop %v840
    %v842 = vmul.f32 %v841, 0.6931472
    %v843 = vmul.f32 -0.5, %v707
    %v844 = vadd.f32 %v843, 1.0
    %v845 = vmul.f32 %v844, %v707
    %v846 = vand.u32 2147483647, %v707
    %vm847 = vcmp.lt.f32.partialorder %v846, 0.0004427343
    %v848 = vsel %vm847, %v845, %v842
    %v849 = vadd.f32 %v709, 1.0
    %v850 = vlog2.pop %v849
    %v851 = vmul.f32 %v850, 0.6931472
    %v852 = vmul.f32 -0.5, %v709
    %v853 = vadd.f32 %v852, 1.0
    %v854 = vmul.f32 %v853, %v709
    %v855 = vand.u32 2147483647, %v709
    %vm856 = vcmp.lt.f32.partialorder %v855, 0.0004427343
    %v857 = vsel %vm856, %v854, %v851
    %v858 = vadd.f32 %v711, 1.0
    %v859 = vlog2.pop %v858
    %v860 = vmul.f32 %v859, 0.6931472
    %v861 = vmul.f32 -0.5, %v711
    %v862 = vadd.f32 %v861, 1.0
    %v863 = vmul.f32 %v862, %v711
    %v864 = vand.u32 2147483647, %v711
    %vm865 = vcmp.lt.f32.partialorder %v864, 0.0004427343
    %v866 = vsel %vm865, %v863, %v860
    %v867 = vadd.f32 %v713, 1.0
    %v868 = vlog2.pop %v867
    %v869 = vmul.f32 %v868, 0.6931472
    %v870 = vmul.f32 -0.5, %v713
    %v871 = vadd.f32 %v870, 1.0
    %v872 = vmul.f32 %v871, %v713
    %v873 = vand.u32 2147483647, %v713
    %vm874 = vcmp.lt.f32.partialorder %v873, 0.0004427343
    %v875 = vsel %vm874, %v872, %v869
    %v876 = vadd.f32 %v715, 1.0
    %v877 = vlog2.pop %v876
    %v878 = vmul.f32 %v877, 0.6931472
    %v879 = vmul.f32 -0.5, %v715
    %v880 = vadd.f32 %v879, 1.0
    %v881 = vmul.f32 %v880, %v715
    %v882 = vand.u32 2147483647, %v715
    %vm883 = vcmp.lt.f32.partialorder %v882, 0.0004427343
    %v884 = vsel %vm883, %v881, %v878
    %v885 = vadd.f32 %v717, 1.0
    %v886 = vlog2.pop %v885
    %v887 = vmul.f32 %v886, 0.6931472
    %v888 = vmul.f32 -0.5, %v717
    %v889 = vadd.f32 %v888, 1.0
    %v890 = vmul.f32 %v889, %v717
    %v891 = vand.u32 2147483647, %v717
    %vm892 = vcmp.lt.f32.partialorder %v891, 0.0004427343
    %v893 = vsel %vm892, %v890, %v887
    %v894 = vadd.f32 %v719, 1.0
    %v895 = vlog2.pop %v894
    %v896 = vmul.f32 %v895, 0.6931472
    %v897 = vmul.f32 -0.5, %v719
    %v898 = vadd.f32 %v897, 1.0
    %v899 = vmul.f32 %v898, %v719
    %v900 = vand.u32 2147483647, %v719
    %vm901 = vcmp.lt.f32.partialorder %v900, 0.0004427343
    %v902 = vsel %vm901, %v899, %v896
    %v903 = vadd.f32 %v721, 1.0
    %v904 = vlog2.pop %v903
    %v905 = vmul.f32 %v904, 0.6931472
    %v906 = vmul.f32 -0.5, %v721
    %v907 = vadd.f32 %v906, 1.0
    %v908 = vmul.f32 %v907, %v721
    %v909 = vand.u32 2147483647, %v721
    %vm910 = vcmp.lt.f32.partialorder %v909, 0.0004427343
    %v911 = vsel %vm910, %v908, %v905
    %v912 = vadd.f32 %v723, 1.0
    %v913 = vlog2.pop %v912
    %v914 = vmul.f32 %v913, 0.6931472
    %v915 = vmul.f32 -0.5, %v723
    %v916 = vadd.f32 %v915, 1.0
    %v917 = vmul.f32 %v916, %v723
    %v918 = vand.u32 2147483647, %v723
    %vm919 = vcmp.lt.f32.partialorder %v918, 0.0004427343
    %v920 = vsel %vm919, %v917, %v914
    %v921 = vadd.f32 %v725, 1.0
    %v922 = vlog2.pop %v921
    %v923 = vmul.f32 %v922, 0.6931472
    %v924 = vmul.f32 -0.5, %v725
    %v925 = vadd.f32 %v924, 1.0
    %v926 = vmul.f32 %v925, %v725
    %v927 = vand.u32 2147483647, %v725
    %vm928 = vcmp.lt.f32.partialorder %v927, 0.0004427343
    %v929 = vsel %vm928, %v926, %v923
    %v930 = vadd.f32 %v727, 1.0
    %v931 = vlog2.pop %v930
    %v932 = vmul.f32 %v931, 0.6931472
    %v933 = vmul.f32 -0.5, %v727
    %v934 = vadd.f32 %v933, 1.0
    %v935 = vmul.f32 %v934, %v727
    %v936 = vand.u32 2147483647, %v727
    %vm937 = vcmp.lt.f32.partialorder %v936, 0.0004427343
    %v938 = vsel %vm937, %v935, %v932
    %v939 = vadd.f32 %v729, 1.0
    %v940 = vlog2.pop %v939
    %v941 = vmul.f32 %v940, 0.6931472
    %v942 = vmul.f32 -0.5, %v729
    %v943 = vadd.f32 %v942, 1.0
    %v944 = vmul.f32 %v943, %v729
    %v945 = vand.u32 2147483647, %v729
    %vm946 = vcmp.lt.f32.partialorder %v945, 0.0004427343
    %v947 = vsel %vm946, %v944, %v941
    %v948 = vadd.f32 %v731, 1.0
    %v949 = vlog2.pop %v948
    %v950 = vmul.f32 %v949, 0.6931472
    %v951 = vmul.f32 -0.5, %v731
    %v952 = vadd.f32 %v951, 1.0
    %v953 = vmul.f32 %v952, %v731
    %v954 = vand.u32 2147483647, %v731
    %vm955 = vcmp.lt.f32.partialorder %v954, 0.0004427343
    %v956 = vsel %vm955, %v953, %v950
    %v957 = vadd.f32 %v733, 1.0
    %v958 = vlog2.pop %v957
    %v959 = vmul.f32 %v958, 0.6931472
    %v960 = vmul.f32 -0.5, %v733
    %v961 = vadd.f32 %v960, 1.0
    %v962 = vmul.f32 %v961, %v733
    %v963 = vand.u32 2147483647, %v733
    %vm964 = vcmp.lt.f32.partialorder %v963, 0.0004427343
    %v965 = vsel %vm964, %v962, %v959
    %v966 = vadd.f32 %v735, 1.0
    %v967 = vlog2.pop %v966
    %v968 = vmul.f32 %v967, 0.6931472
    %v969 = vmul.f32 -0.5, %v735
    %v970 = vadd.f32 %v969, 1.0
    %v971 = vmul.f32 %v970, %v735
    %v972 = vand.u32 2147483647, %v735
    %vm973 = vcmp.lt.f32.partialorder %v972, 0.0004427343
    %v974 = vsel %vm973, %v971, %v968
    %v975 = vadd.f32 %v737, 1.0
    %v976 = vlog2.pop %v975
    %v977 = vmul.f32 %v976, 0.6931472
    %v978 = vmul.f32 -0.5, %v737
    %v979 = vadd.f32 %v978, 1.0
    %v980 = vmul.f32 %v979, %v737
    %v981 = vand.u32 2147483647, %v737
    %vm982 = vcmp.lt.f32.partialorder %v981, 0.0004427343
    %v983 = vsel %vm982, %v980, %v977
    %v984 = vadd.f32 %v739, 1.0
    %v985 = vlog2.pop %v984
    %v986 = vmul.f32 %v985, 0.6931472
    %v987 = vmul.f32 -0.5, %v739
    %v988 = vadd.f32 %v987, 1.0
    %v989 = vmul.f32 %v988, %v739
    %v990 = vand.u32 2147483647, %v739
    %vm991 = vcmp.lt.f32.partialorder %v990, 0.0004427343
    %v992 = vsel %vm991, %v989, %v986
    %v993 = vadd.f32 %v741, 1.0
    %v994 = vlog2.pop %v993
    %v995 = vmul.f32 %v994, 0.6931472
    %v996 = vmul.f32 -0.5, %v741
    %v997 = vadd.f32 %v996, 1.0
    %v998 = vmul.f32 %v997, %v741
    %v999 = vand.u32 2147483647, %v741
    %vm1000 = vcmp.lt.f32.partialorder %v999, 0.0004427343
    %v1001 = vsel %vm1000, %v998, %v995
    %v1002 = vadd.f32 %v743, 1.0
    %v1003 = vlog2.pop %v1002
    %v1004 = vmul.f32 %v1003, 0.6931472
    %v1005 = vmul.f32 -0.5, %v743
    %v1006 = vadd.f32 %v1005, 1.0
    %v1007 = vmul.f32 %v1006, %v743
    %v1008 = vand.u32 2147483647, %v743
    %vm1009 = vcmp.lt.f32.partialorder %v1008, 0.0004427343
    %v1010 = vsel %vm1009, %v1007, %v1004
    %v1011 = vadd.f32 %v745, 1.0
    %v1012 = vlog2.pop %v1011
    %v1013 = vmul.f32 %v1012, 0.6931472
    %v1014 = vmul.f32 -0.5, %v745
    %v1015 = vadd.f32 %v1014, 1.0
    %v1016 = vmul.f32 %v1015, %v745
    %v1017 = vand.u32 2147483647, %v745
    %vm1018 = vcmp.lt.f32.partialorder %v1017, 0.0004427343
    %v1019 = vsel %vm1018, %v1016, %v1013
    %v1020 = vadd.f32 %v747, 1.0
    %v1021 = vlog2.pop %v1020
    %v1022 = vmul.f32 %v1021, 0.6931472
    %v1023 = vmul.f32 -0.5, %v747
    %v1024 = vadd.f32 %v1023, 1.0
    %v1025 = vmul.f32 %v1024, %v747
    %v1026 = vand.u32 2147483647, %v747
    %vm1027 = vcmp.lt.f32.partialorder %v1026, 0.0004427343
    %v1028 = vsel %vm1027, %v1025, %v1022
    %v1029 = vadd.f32 %v749, 1.0
    %v1030 = vlog2.pop %v1029
    %v1031 = vmul.f32 %v1030, 0.6931472
    %v1032 = vmul.f32 -0.5, %v749
    %v1033 = vadd.f32 %v1032, 1.0
    %v1034 = vmul.f32 %v1033, %v749
    %v1035 = vand.u32 2147483647, %v749
    %vm1036 = vcmp.lt.f32.partialorder %v1035, 0.0004427343
    %v1037 = vsel %vm1036, %v1034, %v1031
    %v1038 = vadd.f32 %v526, %v758
    %v1039 = vadd.f32 %v527, %v767
    %v1040 = vadd.f32 %v528, %v776
    %v1041 = vadd.f32 %v529, %v785
    %v1042 = vadd.f32 %v530, %v794
    %v1043 = vadd.f32 %v531, %v803
    %v1044 = vadd.f32 %v532, %v812
    %v1045 = vadd.f32 %v533, %v821
    %v1046 = vadd.f32 %v534, %v830
    %v1047 = vadd.f32 %v535, %v839
    %v1048 = vadd.f32 %v536, %v848
    %v1049 = vadd.f32 %v537, %v857
    %v1050 = vadd.f32 %v538, %v866
    %v1051 = vadd.f32 %v539, %v875
    %v1052 = vadd.f32 %v540, %v884
    %v1053 = vadd.f32 %v541, %v893
    %v1054 = vadd.f32 %v542, %v902
    %v1055 = vadd.f32 %v543, %v911
    %v1056 = vadd.f32 %v544, %v920
    %v1057 = vadd.f32 %v545, %v929
    %v1058 = vadd.f32 %v546, %v938
    %v1059 = vadd.f32 %v547, %v947
    %v1060 = vadd.f32 %v548, %v956
    %v1061 = vadd.f32 %v549, %v965
    %v1062 = vadd.f32 %v550, %v974
    %v1063 = vadd.f32 %v551, %v983
    %v1064 = vadd.f32 %v552, %v992
    %v1065 = vadd.f32 %v553, %v1001
    %v1066 = vadd.f32 %v554, %v1010
    %v1067 = vadd.f32 %v555, %v1019
    %v1068 = vadd.f32 %v556, %v1028
    %v1069 = vadd.f32 %v557, %v1037
    %v1070 = vsel %vm558, %v590, %v1038
    %v1071 = vsel %vm559, %v591, %v1039
    %v1072 = vsel %vm560, %v592, %v1040
    %v1073 = vsel %vm561, %v593, %v1041
    %v1074 = vsel %vm562, %v594, %v1042
    %v1075 = vsel %vm563, %v595, %v1043
    %v1076 = vsel %vm564, %v596, %v1044
    %v1077 = vsel %vm565, %v597, %v1045
    %v1078 = vsel %vm566, %v598, %v1046
    %v1079 = vsel %vm567, %v599, %v1047
    %v1080 = vsel %vm568, %v600, %v1048
    %v1081 = vsel %vm569, %v601, %v1049
    %v1082 = vsel %vm570, %v602, %v1050
    %v1083 = vsel %vm571, %v603, %v1051
    %v1084 = vsel %vm572, %v604, %v1052
    %v1085 = vsel %vm573, %v605, %v1053
    %v1086 = vsel %vm574, %v606, %v1054
    %v1087 = vsel %vm575, %v607, %v1055
    %v1088 = vsel %vm576, %v608, %v1056
    %v1089 = vsel %vm577, %v609, %v1057
    %v1090 = vsel %vm578, %v610, %v1058
    %v1091 = vsel %vm579, %v611, %v1059
    %v1092 = vsel %vm580, %v612, %v1060
    %v1093 = vsel %vm581, %v613, %v1061
    %v1094 = vsel %vm582, %v614, %v1062
    %v1095 = vsel %vm583, %v615, %v1063
    %v1096 = vsel %vm584, %v616, %v1064
    %v1097 = vsel %vm585, %v617, %v1065
    %v1098 = vsel %vm586, %v618, %v1066
    %v1099 = vsel %vm587, %v619, %v1067
    %v1100 = vsel %vm588, %v620, %v1068
    %v1101 = vsel %vm589, %v621, %v1069
    %v1102 = vsub.f32 %v1070, 0.6931472
    %v1103 = vsub.f32 %v1071, 0.6931472
    %v1104 = vsub.f32 %v1072, 0.6931472
    %v1105 = vsub.f32 %v1073, 0.6931472
    %v1106 = vsub.f32 %v1074, 0.6931472
    %v1107 = vsub.f32 %v1075, 0.6931472
    %v1108 = vsub.f32 %v1076, 0.6931472
    %v1109 = vsub.f32 %v1077, 0.6931472
    %v1110 = vsub.f32 %v1078, 0.6931472
    %v1111 = vsub.f32 %v1079, 0.6931472
    %v1112 = vsub.f32 %v1080, 0.6931472
    %v1113 = vsub.f32 %v1081, 0.6931472
    %v1114 = vsub.f32 %v1082, 0.6931472
    %v1115 = vsub.f32 %v1083, 0.6931472
    %v1116 = vsub.f32 %v1084, 0.6931472
    %v1117 = vsub.f32 %v1085, 0.6931472
    %v1118 = vsub.f32 %v1086, 0.6931472
    %v1119 = vsub.f32 %v1087, 0.6931472
    %v1120 = vsub.f32 %v1088, 0.6931472
    %v1121 = vsub.f32 %v1089, 0.6931472
    %v1122 = vsub.f32 %v1090, 0.6931472
    %v1123 = vsub.f32 %v1091, 0.6931472
    %v1124 = vsub.f32 %v1092, 0.6931472
    %v1125 = vsub.f32 %v1093, 0.6931472
    %v1126 = vsub.f32 %v1094, 0.6931472
    %v1127 = vsub.f32 %v1095, 0.6931472
    %v1128 = vsub.f32 %v1096, 0.6931472
    %v1129 = vsub.f32 %v1097, 0.6931472
    %v1130 = vsub.f32 %v1098, 0.6931472
    %v1131 = vsub.f32 %v1099, 0.6931472
    %v1132 = vsub.f32 %v1100, 0.6931472
    %v1133 = vsub.f32 %v1101, 0.6931472
    %v1134 = vpack.c.bf16 %v1103, %v1102
    %v1135 = vpack.c.bf16 %v1105, %v1104
    %v1136 = vpack.c.bf16 %v1107, %v1106
    %v1137 = vpack.c.bf16 %v1109, %v1108
    %v1138 = vpack.c.bf16 %v1111, %v1110
    %v1139 = vpack.c.bf16 %v1113, %v1112
    %v1140 = vpack.c.bf16 %v1115, %v1114
    %v1141 = vpack.c.bf16 %v1117, %v1116
    %v1142 = vpack.c.bf16 %v1119, %v1118
    %v1143 = vpack.c.bf16 %v1121, %v1120
    %v1144 = vpack.c.bf16 %v1123, %v1122
    %v1145 = vpack.c.bf16 %v1125, %v1124
    %v1146 = vpack.c.bf16 %v1127, %v1126
    %v1147 = vpack.c.bf16 %v1129, %v1128
    %v1148 = vpack.c.bf16 %v1131, %v1130
    %v1149 = vpack.c.bf16 %v1133, %v1132
    %v1150 = vld [vmem:[%s8] sm:$0xf]
    %v1151 = vld [vmem:[%s8 + $0x4] sm:$0xf]
    %v1152 = vld [vmem:[%s8 + $0x8] sm:$0xf]
    %v1153 = vld [vmem:[%s8 + $0xc] sm:$0xf]
    %v1154 = vld [vmem:[%s8 + $0x10] sm:$0xf]
    %v1155 = vld [vmem:[%s8 + $0x14] sm:$0xf]
    %v1156 = vld [vmem:[%s8 + $0x18] sm:$0xf]
    %v1157 = vld [vmem:[%s8 + $0x1c] sm:$0xf]
    %v1158 = vld [vmem:[%s8 + $0x20] sm:$0xf]
    %v1159 = vld [vmem:[%s8 + $0x24] sm:$0xf]
    %v1160 = vld [vmem:[%s8 + $0x28] sm:$0xf]
    %v1161 = vld [vmem:[%s8 + $0x2c] sm:$0xf]
    %v1162 = vld [vmem:[%s8 + $0x30] sm:$0xf]
    %v1163 = vld [vmem:[%s8 + $0x34] sm:$0xf]
    %v1164 = vld [vmem:[%s8 + $0x38] sm:$0xf]
    %v1165 = vld [vmem:[%s8 + $0x3c] sm:$0xf]
    %v1166 = vld [vmem:[%s9] sm:$0x1]
    %v1168 = vlaneseq
    %v1169 = vshrl.u32 %v1168, 7
    %v1170 = vsub.s32 0, %v1169
    %v1171 = vrot.slane %v1166, %v1170
    %v1189 = vunpack.c.l.b16 %v1150
    %v1190 = vunpack.c.l.b16 %v1151
    %v1191 = vunpack.c.l.b16 %v1152
    %v1192 = vunpack.c.l.b16 %v1153
    %v1193 = vunpack.c.l.b16 %v1154
    %v1194 = vunpack.c.l.b16 %v1155
    %v1195 = vunpack.c.l.b16 %v1156
    %v1196 = vunpack.c.l.b16 %v1157
    %v1197 = vunpack.c.l.b16 %v1158
    %v1198 = vunpack.c.l.b16 %v1159
    %v1199 = vunpack.c.l.b16 %v1160
    %v1200 = vunpack.c.l.b16 %v1161
    %v1201 = vunpack.c.l.b16 %v1162
    %v1202 = vunpack.c.l.b16 %v1163
    %v1203 = vunpack.c.l.b16 %v1164
    %v1204 = vunpack.c.l.b16 %v1165
    %v1205 = vpack.c.b16 %v1190, %v1189
    %v1206 = vpack.c.b16 %v1192, %v1191
    %v1207 = vpack.c.b16 %v1194, %v1193
    %v1208 = vpack.c.b16 %v1196, %v1195
    %v1209 = vpack.c.b16 %v1198, %v1197
    %v1210 = vpack.c.b16 %v1200, %v1199
    %v1211 = vpack.c.b16 %v1202, %v1201
    %v1212 = vpack.c.b16 %v1204, %v1203
    %1221 = vmatprep.subr.bf16.mxu0 0
    %1222 = vmatpush1.bf16.msra.mxu0 %v1212
    %1223 = vmatprep.subr.bf16.mxu0 0
    %1224 = vmatpush1.bf16.msra.mxu0 %v1211
    %1225 = vmatprep.subr.bf16.mxu0 0
    %1226 = vmatpush1.bf16.msra.mxu0 %v1210
    %1227 = vmatprep.subr.bf16.mxu0 0
    %1228 = vmatpush1.bf16.msra.mxu0 %v1209
    %1229 = vmatprep.subr.bf16.mxu0 0
    %1230 = vmatpush1.bf16.msra.mxu0 %v1208
    %1231 = vmatprep.subr.bf16.mxu0 0
    %1232 = vmatpush1.bf16.msra.mxu0 %v1207
    %1233 = vmatprep.subr.bf16.mxu0 0
    %1234 = vmatpush1.bf16.msra.mxu0 %v1206
    %1235 = vmatprep.subr.bf16.mxu0 0
    %1236 = vmatpush1.bf16.msra.mxu0 %v1205
    %1237 = vmatprep.subr.bf16.mxu0 0
    %1238 = vmatpush2.bf16.msra.mxu0 0
    %1239 = vmatprep.subr.bf16.mxu0 0
    %1240 = vmatpush2.bf16.msra.mxu0 0
    %1241 = vmatprep.subr.bf16.mxu0 0
    %1242 = vmatpush2.bf16.msra.mxu0 0
    %1243 = vmatprep.subr.bf16.mxu0 0
    %1244 = vmatpush2.bf16.msra.mxu0 0
    %1245 = vmatprep.subr.bf16.mxu0 0
    %1246 = vmatpush2.bf16.msra.mxu0 0
    %1247 = vmatprep.subr.bf16.mxu0 0
    %1248 = vmatpush2.bf16.msra.mxu0 0
    %1249 = vmatprep.subr.bf16.mxu0 0
    %1250 = vmatpush2.bf16.msra.mxu0 0
    %1251 = vmatprep.subr.bf16.mxu0 0
    %1252 = vmatpush2.bf16.msra.mxu0 0
    %1253 = vmatprep.mubr.bf16.mxu0 0
    %1254 = vmatmul.mubr.bf16.gmra.mxu0 %v1134
    %v1255 = vpop.f32.mrf.mxu0
    %v1256 = vadd.f32 %v1171, %v1255
    %v1257 = vpop.f32.mrf.mxu0
    %v1258 = vpop.f32.mrf.mxu0
    %v1259 = vadd.f32 %v1171, %v1258
    %v1260 = vpop.f32.mrf.mxu0
    %1261 = vmatprep.mubr.bf16.mxu0 0
    %1262 = vmatmul.mubr.bf16.gmra.mxu0 %v1135
    %v1263 = vpop.f32.mrf.mxu0
    %v1264 = vadd.f32 %v1171, %v1263
    %v1265 = vpop.f32.mrf.mxu0
    %v1266 = vpop.f32.mrf.mxu0
    %v1267 = vadd.f32 %v1171, %v1266
    %v1268 = vpop.f32.mrf.mxu0
    %1269 = vmatprep.mubr.bf16.mxu0 0
    %1270 = vmatmul.mubr.bf16.gmra.mxu0 %v1136
    %v1271 = vpop.f32.mrf.mxu0
    %v1272 = vadd.f32 %v1171, %v1271
    %v1273 = vpop.f32.mrf.mxu0
    %v1274 = vpop.f32.mrf.mxu0
    %v1275 = vadd.f32 %v1171, %v1274
    %v1276 = vpop.f32.mrf.mxu0
    %1277 = vmatprep.mubr.bf16.mxu0 0
    %1278 = vmatmul.mubr.bf16.gmra.mxu0 %v1137
    %v1279 = vpop.f32.mrf.mxu0
    %v1280 = vadd.f32 %v1171, %v1279
    %v1281 = vpop.f32.mrf.mxu0
    %v1282 = vpop.f32.mrf.mxu0
    %v1283 = vadd.f32 %v1171, %v1282
    %v1284 = vpop.f32.mrf.mxu0
    %1285 = vmatprep.mubr.bf16.mxu0 0
    %1286 = vmatmul.mubr.bf16.gmra.mxu0 %v1138
    %v1287 = vpop.f32.mrf.mxu0
    %v1288 = vadd.f32 %v1171, %v1287
    %v1289 = vpop.f32.mrf.mxu0
    %v1290 = vpop.f32.mrf.mxu0
    %v1291 = vadd.f32 %v1171, %v1290
    %v1292 = vpop.f32.mrf.mxu0
    %1293 = vmatprep.mubr.bf16.mxu0 0
    %1294 = vmatmul.mubr.bf16.gmra.mxu0 %v1139
    %v1295 = vpop.f32.mrf.mxu0
    %v1296 = vadd.f32 %v1171, %v1295
    %v1297 = vpop.f32.mrf.mxu0
    %v1298 = vpop.f32.mrf.mxu0
    %v1299 = vadd.f32 %v1171, %v1298
    %v1300 = vpop.f32.mrf.mxu0
    %1301 = vmatprep.mubr.bf16.mxu0 0
    %1302 = vmatmul.mubr.bf16.gmra.mxu0 %v1140
    %v1303 = vpop.f32.mrf.mxu0
    %v1304 = vadd.f32 %v1171, %v1303
    %v1305 = vpop.f32.mrf.mxu0
    %v1306 = vpop.f32.mrf.mxu0
    %v1307 = vadd.f32 %v1171, %v1306
    %v1308 = vpop.f32.mrf.mxu0
    %1309 = vmatprep.mubr.bf16.mxu0 0
    %1310 = vmatmul.mubr.bf16.gmra.mxu0 %v1141
    %v1311 = vpop.f32.mrf.mxu0
    %v1312 = vadd.f32 %v1171, %v1311
    %v1313 = vpop.f32.mrf.mxu0
    %v1314 = vpop.f32.mrf.mxu0
    %v1315 = vadd.f32 %v1171, %v1314
    %v1316 = vpop.f32.mrf.mxu0
    %1317 = vmatprep.mubr.bf16.mxu0 0
    %1318 = vmatmul.mubr.bf16.gmra.mxu0 %v1142
    %v1319 = vpop.f32.mrf.mxu0
    %v1320 = vadd.f32 %v1171, %v1319
    %v1321 = vpop.f32.mrf.mxu0
    %v1322 = vpop.f32.mrf.mxu0
    %v1323 = vadd.f32 %v1171, %v1322
    %v1324 = vpop.f32.mrf.mxu0
    %1325 = vmatprep.mubr.bf16.mxu0 0
    %1326 = vmatmul.mubr.bf16.gmra.mxu0 %v1143
    %v1327 = vpop.f32.mrf.mxu0
    %v1328 = vadd.f32 %v1171, %v1327
    %v1329 = vpop.f32.mrf.mxu0
    %v1330 = vpop.f32.mrf.mxu0
    %v1331 = vadd.f32 %v1171, %v1330
    %v1332 = vpop.f32.mrf.mxu0
    %1333 = vmatprep.mubr.bf16.mxu0 0
    %1334 = vmatmul.mubr.bf16.gmra.mxu0 %v1144
    %v1335 = vpop.f32.mrf.mxu0
    %v1336 = vadd.f32 %v1171, %v1335
    %v1337 = vpop.f32.mrf.mxu0
    %v1338 = vpop.f32.mrf.mxu0
    %v1339 = vadd.f32 %v1171, %v1338
    %v1340 = vpop.f32.mrf.mxu0
    %1341 = vmatprep.mubr.bf16.mxu0 0
    %1342 = vmatmul.mubr.bf16.gmra.mxu0 %v1145
    %v1343 = vpop.f32.mrf.mxu0
    %v1344 = vadd.f32 %v1171, %v1343
    %v1345 = vpop.f32.mrf.mxu0
    %v1346 = vpop.f32.mrf.mxu0
    %v1347 = vadd.f32 %v1171, %v1346
    %v1348 = vpop.f32.mrf.mxu0
    %1349 = vmatprep.mubr.bf16.mxu0 0
    %1350 = vmatmul.mubr.bf16.gmra.mxu0 %v1146
    %v1351 = vpop.f32.mrf.mxu0
    %v1352 = vadd.f32 %v1171, %v1351
    %v1353 = vpop.f32.mrf.mxu0
    %v1354 = vpop.f32.mrf.mxu0
    %v1355 = vadd.f32 %v1171, %v1354
    %v1356 = vpop.f32.mrf.mxu0
    %1357 = vmatprep.mubr.bf16.mxu0 0
    %1358 = vmatmul.mubr.bf16.gmra.mxu0 %v1147
    %v1359 = vpop.f32.mrf.mxu0
    %v1360 = vadd.f32 %v1171, %v1359
    %v1361 = vpop.f32.mrf.mxu0
    %v1362 = vpop.f32.mrf.mxu0
    %v1363 = vadd.f32 %v1171, %v1362
    %v1364 = vpop.f32.mrf.mxu0
    %1365 = vmatprep.mubr.bf16.mxu0 0
    %1366 = vmatmul.mubr.bf16.gmra.mxu0 %v1148
    %v1367 = vpop.f32.mrf.mxu0
    %v1368 = vadd.f32 %v1171, %v1367
    %v1369 = vpop.f32.mrf.mxu0
    %v1370 = vpop.f32.mrf.mxu0
    %v1371 = vadd.f32 %v1171, %v1370
    %v1372 = vpop.f32.mrf.mxu0
    %1373 = vmatprep.mubr.bf16.mxu0 0
    %1374 = vmatmul.mubr.bf16.gmra.mxu0 %v1149
    %v1375 = vpop.f32.mrf.mxu0
    %v1376 = vadd.f32 %v1171, %v1375
    %v1377 = vpop.f32.mrf.mxu0
    %v1378 = vpop.f32.mrf.mxu0
    %v1379 = vadd.f32 %v1171, %v1378
    %v1380 = vpop.f32.mrf.mxu0
    %1381 = vdwg.mxu0
    %s1382 = sld [smem:[#allocation4]]
    %v1383 = vld [vmem:[%s5] sm:$0xff]
    %v1384 = vld [vmem:[%s5 + $0x8] sm:$0xff]
    %v1385 = vld [vmem:[%s5 + $0x10] sm:$0xff]
    %v1386 = vld [vmem:[%s5 + $0x18] sm:$0xff]
    %v1387 = vld [vmem:[%s5 + $0x20] sm:$0xff]
    %v1388 = vld [vmem:[%s5 + $0x28] sm:$0xff]
    %v1389 = vld [vmem:[%s5 + $0x30] sm:$0xff]
    %v1390 = vld [vmem:[%s5 + $0x38] sm:$0xff]
    %v1391 = vld [vmem:[%s5 + $0x40] sm:$0xff]
    %v1392 = vld [vmem:[%s5 + $0x48] sm:$0xff]
    %v1393 = vld [vmem:[%s5 + $0x50] sm:$0xff]
    %v1394 = vld [vmem:[%s5 + $0x58] sm:$0xff]
    %v1395 = vld [vmem:[%s5 + $0x60] sm:$0xff]
    %v1396 = vld [vmem:[%s5 + $0x68] sm:$0xff]
    %v1397 = vld [vmem:[%s5 + $0x70] sm:$0xff]
    %v1398 = vld [vmem:[%s5 + $0x78] sm:$0xff]
    %v1399 = vld [vmem:[%s5 + $0x80] sm:$0xff]
    %v1400 = vld [vmem:[%s5 + $0x88] sm:$0xff]
    %v1401 = vld [vmem:[%s5 + $0x90] sm:$0xff]
    %v1402 = vld [vmem:[%s5 + $0x98] sm:$0xff]
    %v1403 = vld [vmem:[%s5 + $0xa0] sm:$0xff]
    %v1404 = vld [vmem:[%s5 + $0xa8] sm:$0xff]
    %v1405 = vld [vmem:[%s5 + $0xb0] sm:$0xff]
    %v1406 = vld [vmem:[%s5 + $0xb8] sm:$0xff]
    %v1407 = vld [vmem:[%s5 + $0xc0] sm:$0xff]
    %v1408 = vld [vmem:[%s5 + $0xc8] sm:$0xff]
    %v1409 = vld [vmem:[%s5 + $0xd0] sm:$0xff]
    %v1410 = vld [vmem:[%s5 + $0xd8] sm:$0xff]
    %v1411 = vld [vmem:[%s5 + $0xe0] sm:$0xff]
    %v1412 = vld [vmem:[%s5 + $0xe8] sm:$0xff]
    %v1413 = vld [vmem:[%s5 + $0xf0] sm:$0xff]
    %v1414 = vld [vmem:[%s5 + $0xf8] sm:$0xff]
    %v1415 = vstv %s1382
    %v1416 = vrcp.pop %v1415
    %s1417 = vtos %v1416
    %s1418 = smul.f32 3.1415927, %s1417
    %v1419 = vstv %s1418
    %v1420 = vmul.f32 %v1383, %v1419
    %v1421 = vmul.f32 %v1384, %v1419
    %v1422 = vmul.f32 %v1385, %v1419
    %v1423 = vmul.f32 %v1386, %v1419
    %v1424 = vmul.f32 %v1387, %v1419
    %v1425 = vmul.f32 %v1388, %v1419
    %v1426 = vmul.f32 %v1389, %v1419
    %v1427 = vmul.f32 %v1390, %v1419
    %v1428 = vmul.f32 %v1391, %v1419
    %v1429 = vmul.f32 %v1392, %v1419
    %v1430 = vmul.f32 %v1393, %v1419
    %v1431 = vmul.f32 %v1394, %v1419
    %v1432 = vmul.f32 %v1395, %v1419
    %v1433 = vmul.f32 %v1396, %v1419
    %v1434 = vmul.f32 %v1397, %v1419
    %v1435 = vmul.f32 %v1398, %v1419
    %v1436 = vmul.f32 %v1399, %v1419
    %v1437 = vmul.f32 %v1400, %v1419
    %v1438 = vmul.f32 %v1401, %v1419
    %v1439 = vmul.f32 %v1402, %v1419
    %v1440 = vmul.f32 %v1403, %v1419
    %v1441 = vmul.f32 %v1404, %v1419
    %v1442 = vmul.f32 %v1405, %v1419
    %v1443 = vmul.f32 %v1406, %v1419
    %v1444 = vmul.f32 %v1407, %v1419
    %v1445 = vmul.f32 %v1408, %v1419
    %v1446 = vmul.f32 %v1409, %v1419
    %v1447 = vmul.f32 %v1410, %v1419
    %v1448 = vmul.f32 %v1411, %v1419
    %v1449 = vmul.f32 %v1412, %v1419
    %v1450 = vmul.f32 %v1413, %v1419
    %v1451 = vmul.f32 %v1414, %v1419
    %v1452 = vand.u32 2147483647, %v1420
    %vm1453 = vcmp.le.f32.partialorder %v1452, 0.7853982
    %vm1454 = vcmp.lt.s32.totalorder %v1420, 0
    %v1455 = vand.u32 %v1420, 2139095040
    %v1456 = vshrl.u32 %v1455, 23
    %v1457 = vsub.s32 %v1456, 127
    %v1458 = vand.u32 2147483647, %v1420
    %v1459 = vand.u32 %v1458, 8388607
    %v1460 = vor.u32 %v1459, 8388608
    %v1461 = vsub.s32 0, %v1460
    %v1462 = vadd.s32 %v1457, 1
    %vm1463 = vcmp.gt.s32.totalorder %v1462, 0
    %v1464 = vsel %vm1463, %v1462, 0
    %v1465 = vshrl.u32 %v1464, 5
    %v1466 = vand.u32 %v1464, 31
    %v1467 = vsub.s32 32, %v1466
    %v1468 = vshrl.u32 683565275, %v1467
    %v1469 = vshll.u32 683565275, %v1466
    %v1470 = vshrl.u32 2475754826, %v1467
    %v1471 = vor.u32 %v1469, %v1470
    %v1472 = vshll.u32 2475754826, %v1466
    %v1473 = vshrl.u32 2131351028, %v1467
    %v1474 = vor.u32 %v1472, %v1473
    %v1475 = vshll.u32 2131351028, %v1466
    %v1476 = vshrl.u32 2102212464, %v1467
    %v1477 = vor.u32 %v1475, %v1476
    %v1478 = vshll.u32 2102212464, %v1466
    %v1479 = vshrl.u32 920167782, %v1467
    %v1480 = vor.u32 %v1478, %v1479
    %v1481 = vshll.u32 920167782, %v1466
    %v1482 = vshrl.u32 1326507024, %v1467
    %v1483 = vor.u32 %v1481, %v1482
    %vm1484 = vcmp.lt.s32.totalorder %v1465, 1
    %vm1485 = vcmp.lt.s32.totalorder %v1465, 2
    %vm1486 = vcmp.lt.s32.totalorder %v1465, 3
    %vm1487 = vcmp.lt.s32.totalorder %v1465, 4
    %v1488 = vsel %vm1484, %v1468, %v1471
    %v1489 = vsel %vm1487, %v1477, 2102212464
    %v1490 = vsel %vm1486, %v1474, %v1489
    %v1491 = vsel %vm1485, %v1488, %v1490
    %v1492 = vsel %vm1484, %v1471, %v1474
    %v1493 = vsel %vm1487, %v1480, 920167782
    %v1494 = vsel %vm1486, %v1477, %v1493
    %v1495 = vsel %vm1485, %v1492, %v1494
    %v1496 = vsel %vm1484, %v1474, %v1477
    %v1497 = vsel %vm1487, %v1483, 1326507024
    %v1498 = vsel %vm1486, %v1480, %v1497
    %v1499 = vsel %vm1485, %v1496, %v1498
    %v1500 = vshll.u32 %v1460, 8
    %v1501 = vmul.u32.u64.compose %v1500, %v1499
    %v1502 = vextract.low.u32 %v1501
    %v1503 = vextract.high.u32 %v1501
    %v1504 = vmul.u32.u64.compose %v1500, %v1495
    %v1505 = vextract.low.u32 %v1504
    %v1506 = vextract.high.u32 %v1504
    %v1507 = vmul.u32 %v1500, %v1491
    %v1508 = vadd.s32 %v1503, %v1505
    %vm1509 = vc.u32 %v1503, %v1505
    %v1510 = vadd.s32 %v1506, 1
    %v1511 = vsel %vm1509, %v1510, %v1506
    %v1512 = vadd.s32 %v1507, %v1511
    %v1513 = vadd.s32 %v1512, 536870912
    %v1514 = vshrl.u32 %v1513, 30
    %v1515 = vshll.u32 %v1514, 30
    %v1516 = vsub.s32 %v1512, %v1515
    %vm1517 = vcmp.lt.s32.totalorder %v1516, 0
    %v1518 = vsub.s32 0, %v1516
    %v1519 = vsel %vm1517, %v1518, %v1516
    %v1520 = vclz %v1519
    %v1521 = vsub.s32 %v1520, 2
    %vm1522 = vcmp.gt.s32.totalorder 0, %v1521
    %v1523 = vsel %vm1522, 0, %v1521
    %v1524 = vsub.s32 32, %v1523
    %v1525 = vshll.u32 %v1516, %v1523
    %v1526 = vshrl.u32 %v1508, %v1524
    %v1527 = vor.u32 %v1525, %v1526
    %v1528 = vsub.s32 4294967266, %v1523
    %v1529 = vadd.s32 %v1528, 127
    %v1530 = vshll.u32 %v1529, 23
    %v1531 = vor.u32 4788187, %v1530
    %v1532 = vand.u32 2147483647, %v1531
    %v1534 = vcvt.s32.f32 %v1527
    %v1535 = vmul.f32 %v1534, %v1532
    %v1536 = vxor.u32 %v1535, 2147483648
    %v1537 = vsel %vm1454, %v1536, %v1535
    %v1538 = vsub.s32 4, %v1514
    %v1539 = vsel %vm1454, %v1538, %v1514
    %v1540 = vsel %vm1453, %v1420, %v1537
    %v1541 = vsel %vm1453, 0, %v1539
    %v1542 = vcosq.f32.pop %v1540
    %v1543 = vsinq.f32.pop %v1540
    %vm1544 = vweird.f32 %v1420
    %v1545 = vand.u32 %v1541, 3
    %vm1546 = vcmp.lt.s32.totalorder %v1545, 2
    %vm1547 = vcmp.eq.s32.totalorder %v1545, 0
    %v1548 = vxor.u32 %v1543, 2147483648
    %v1549 = vsel %vm1547, %v1542, %v1548
    %vm1550 = vcmp.eq.s32.totalorder %v1545, 2
    %v1551 = vxor.u32 %v1542, 2147483648
    %v1552 = vsel %vm1550, %v1551, %v1543
    %v1553 = vsel %vm1546, %v1549, %v1552
    %v1554 = vsel %vm1544, nan, %v1553
    %v1555 = vand.u32 2147483647, %v1421
    %vm1556 = vcmp.le.f32.partialorder %v1555, 0.7853982
    %vm1557 = vcmp.lt.s32.totalorder %v1421, 0
    %v1558 = vand.u32 %v1421, 2139095040
    %v1559 = vshrl.u32 %v1558, 23
    %v1560 = vsub.s32 %v1559, 127
    %v1561 = vand.u32 2147483647, %v1421
    %v1562 = vand.u32 %v1561, 8388607
    %v1563 = vor.u32 %v1562, 8388608
    %v1564 = vsub.s32 0, %v1563
    %v1565 = vadd.s32 %v1560, 1
    %vm1566 = vcmp.gt.s32.totalorder %v1565, 0
    %v1567 = vsel %vm1566, %v1565, 0
    %v1568 = vshrl.u32 %v1567, 5
    %v1569 = vand.u32 %v1567, 31
    %v1570 = vsub.s32 32, %v1569
    %v1571 = vshrl.u32 683565275, %v1570
    %v1572 = vshll.u32 683565275, %v1569
    %v1573 = vshrl.u32 2475754826, %v1570
    %v1574 = vor.u32 %v1572, %v1573
    %v1575 = vshll.u32 2475754826, %v1569
    %v1576 = vshrl.u32 2131351028, %v1570
    %v1577 = vor.u32 %v1575, %v1576
    %v1578 = vshll.u32 2131351028, %v1569
    %v1579 = vshrl.u32 2102212464, %v1570
    %v1580 = vor.u32 %v1578, %v1579
    %v1581 = vshll.u32 2102212464, %v1569
    %v1582 = vshrl.u32 920167782, %v1570
    %v1583 = vor.u32 %v1581, %v1582
    %v1584 = vshll.u32 920167782, %v1569
    %v1585 = vshrl.u32 1326507024, %v1570
    %v1586 = vor.u32 %v1584, %v1585
    %vm1587 = vcmp.lt.s32.totalorder %v1568, 1
    %vm1588 = vcmp.lt.s32.totalorder %v1568, 2
    %vm1589 = vcmp.lt.s32.totalorder %v1568, 3
    %vm1590 = vcmp.lt.s32.totalorder %v1568, 4
    %v1591 = vsel %vm1587, %v1571, %v1574
    %v1592 = vsel %vm1590, %v1580, 2102212464
    %v1593 = vsel %vm1589, %v1577, %v1592
    %v1594 = vsel %vm1588, %v1591, %v1593
    %v1595 = vsel %vm1587, %v1574, %v1577
    %v1596 = vsel %vm1590, %v1583, 920167782
    %v1597 = vsel %vm1589, %v1580, %v1596
    %v1598 = vsel %vm1588, %v1595, %v1597
    %v1599 = vsel %vm1587, %v1577, %v1580
    %v1600 = vsel %vm1590, %v1586, 1326507024
    %v1601 = vsel %vm1589, %v1583, %v1600
    %v1602 = vsel %vm1588, %v1599, %v1601
    %v1603 = vshll.u32 %v1563, 8
    %v1604 = vmul.u32.u64.compose %v1603, %v1602
    %v1605 = vextract.low.u32 %v1604
    %v1606 = vextract.high.u32 %v1604
    %v1607 = vmul.u32.u64.compose %v1603, %v1598
    %v1608 = vextract.low.u32 %v1607
    %v1609 = vextract.high.u32 %v1607
    %v1610 = vmul.u32 %v1603, %v1594
    %v1611 = vadd.s32 %v1606, %v1608
    %vm1612 = vc.u32 %v1606, %v1608
    %v1613 = vadd.s32 %v1609, 1
    %v1614 = vsel %vm1612, %v1613, %v1609
    %v1615 = vadd.s32 %v1610, %v1614
    %v1616 = vadd.s32 %v1615, 536870912
    %v1617 = vshrl.u32 %v1616, 30
    %v1618 = vshll.u32 %v1617, 30
    %v1619 = vsub.s32 %v1615, %v1618
    %vm1620 = vcmp.lt.s32.totalorder %v1619, 0
    %v1621 = vsub.s32 0, %v1619
    %v1622 = vsel %vm1620, %v1621, %v1619
    %v1623 = vclz %v1622
    %v1624 = vsub.s32 %v1623, 2
    %vm1625 = vcmp.gt.s32.totalorder 0, %v1624
    %v1626 = vsel %vm1625, 0, %v1624
    %v1627 = vsub.s32 32, %v1626
    %v1628 = vshll.u32 %v1619, %v1626
    %v1629 = vshrl.u32 %v1611, %v1627
    %v1630 = vor.u32 %v1628, %v1629
    %v1631 = vsub.s32 4294967266, %v1626
    %v1632 = vadd.s32 %v1631, 127
    %v1633 = vshll.u32 %v1632, 23
    %v1634 = vor.u32 4788187, %v1633
    %v1635 = vand.u32 2147483647, %v1634
    %v1637 = vcvt.s32.f32 %v1630
    %v1638 = vmul.f32 %v1637, %v1635
    %v1639 = vxor.u32 %v1638, 2147483648
    %v1640 = vsel %vm1557, %v1639, %v1638
    %v1641 = vsub.s32 4, %v1617
    %v1642 = vsel %vm1557, %v1641, %v1617
    %v1643 = vsel %vm1556, %v1421, %v1640
    %v1644 = vsel %vm1556, 0, %v1642
    %v1645 = vcosq.f32.pop %v1643
    %v1646 = vsinq.f32.pop %v1643
    %vm1647 = vweird.f32 %v1421
    %v1648 = vand.u32 %v1644, 3
    %vm1649 = vcmp.lt.s32.totalorder %v1648, 2
    %vm1650 = vcmp.eq.s32.totalorder %v1648, 0
    %v1651 = vxor.u32 %v1646, 2147483648
    %v1652 = vsel %vm1650, %v1645, %v1651
    %vm1653 = vcmp.eq.s32.totalorder %v1648, 2
    %v1654 = vxor.u32 %v1645, 2147483648
    %v1655 = vsel %vm1653, %v1654, %v1646
    %v1656 = vsel %vm1649, %v1652, %v1655
    %v1657 = vsel %vm1647, nan, %v1656
    %v1658 = vand.u32 2147483647, %v1422
    %vm1659 = vcmp.le.f32.partialorder %v1658, 0.7853982
    %vm1660 = vcmp.lt.s32.totalorder %v1422, 0
    %v1661 = vand.u32 %v1422, 2139095040
    %v1662 = vshrl.u32 %v1661, 23
    %v1663 = vsub.s32 %v1662, 127
    %v1664 = vand.u32 2147483647, %v1422
    %v1665 = vand.u32 %v1664, 8388607
    %v1666 = vor.u32 %v1665, 8388608
    %v1667 = vsub.s32 0, %v1666
    %v1668 = vadd.s32 %v1663, 1
    %vm1669 = vcmp.gt.s32.totalorder %v1668, 0
    %v1670 = vsel %vm1669, %v1668, 0
    %v1671 = vshrl.u32 %v1670, 5
    %v1672 = vand.u32 %v1670, 31
    %v1673 = vsub.s32 32, %v1672
    %v1674 = vshrl.u32 683565275, %v1673
    %v1675 = vshll.u32 683565275, %v1672
    %v1676 = vshrl.u32 2475754826, %v1673
    %v1677 = vor.u32 %v1675, %v1676
    %v1678 = vshll.u32 2475754826, %v1672
    %v1679 = vshrl.u32 2131351028, %v1673
    %v1680 = vor.u32 %v1678, %v1679
    %v1681 = vshll.u32 2131351028, %v1672
    %v1682 = vshrl.u32 2102212464, %v1673
    %v1683 = vor.u32 %v1681, %v1682
    %v1684 = vshll.u32 2102212464, %v1672
    %v1685 = vshrl.u32 920167782, %v1673
    %v1686 = vor.u32 %v1684, %v1685
    %v1687 = vshll.u32 920167782, %v1672
    %v1688 = vshrl.u32 1326507024, %v1673
    %v1689 = vor.u32 %v1687, %v1688
    %vm1690 = vcmp.lt.s32.totalorder %v1671, 1
    %vm1691 = vcmp.lt.s32.totalorder %v1671, 2
    %vm1692 = vcmp.lt.s32.totalorder %v1671, 3
    %vm1693 = vcmp.lt.s32.totalorder %v1671, 4
    %v1694 = vsel %vm1690, %v1674, %v1677
    %v1695 = vsel %vm1693, %v1683, 2102212464
    %v1696 = vsel %vm1692, %v1680, %v1695
    %v1697 = vsel %vm1691, %v1694, %v1696
    %v1698 = vsel %vm1690, %v1677, %v1680
    %v1699 = vsel %vm1693, %v1686, 920167782
    %v1700 = vsel %vm1692, %v1683, %v1699
    %v1701 = vsel %vm1691, %v1698, %v1700
    %v1702 = vsel %vm1690, %v1680, %v1683
    %v1703 = vsel %vm1693, %v1689, 1326507024
    %v1704 = vsel %vm1692, %v1686, %v1703
    %v1705 = vsel %vm1691, %v1702, %v1704
    %v1706 = vshll.u32 %v1666, 8
    %v1707 = vmul.u32.u64.compose %v1706, %v1705
    %v1708 = vextract.low.u32 %v1707
    %v1709 = vextract.high.u32 %v1707
    %v1710 = vmul.u32.u64.compose %v1706, %v1701
    %v1711 = vextract.low.u32 %v1710
    %v1712 = vextract.high.u32 %v1710
    %v1713 = vmul.u32 %v1706, %v1697
    %v1714 = vadd.s32 %v1709, %v1711
    %vm1715 = vc.u32 %v1709, %v1711
    %v1716 = vadd.s32 %v1712, 1
    %v1717 = vsel %vm1715, %v1716, %v1712
    %v1718 = vadd.s32 %v1713, %v1717
    %v1719 = vadd.s32 %v1718, 536870912
    %v1720 = vshrl.u32 %v1719, 30
    %v1721 = vshll.u32 %v1720, 30
    %v1722 = vsub.s32 %v1718, %v1721
    %vm1723 = vcmp.lt.s32.totalorder %v1722, 0
    %v1724 = vsub.s32 0, %v1722
    %v1725 = vsel %vm1723, %v1724, %v1722
    %v1726 = vclz %v1725
    %v1727 = vsub.s32 %v1726, 2
    %vm1728 = vcmp.gt.s32.totalorder 0, %v1727
    %v1729 = vsel %vm1728, 0, %v1727
    %v1730 = vsub.s32 32, %v1729
    %v1731 = vshll.u32 %v1722, %v1729
    %v1732 = vshrl.u32 %v1714, %v1730
    %v1733 = vor.u32 %v1731, %v1732
    %v1734 = vsub.s32 4294967266, %v1729
    %v1735 = vadd.s32 %v1734, 127
    %v1736 = vshll.u32 %v1735, 23
    %v1737 = vor.u32 4788187, %v1736
    %v1738 = vand.u32 2147483647, %v1737
    %v1740 = vcvt.s32.f32 %v1733
    %v1741 = vmul.f32 %v1740, %v1738
    %v1742 = vxor.u32 %v1741, 2147483648
    %v1743 = vsel %vm1660, %v1742, %v1741
    %v1744 = vsub.s32 4, %v1720
    %v1745 = vsel %vm1660, %v1744, %v1720
    %v1746 = vsel %vm1659, %v1422, %v1743
    %v1747 = vsel %vm1659, 0, %v1745
    %v1748 = vcosq.f32.pop %v1746
    %v1749 = vsinq.f32.pop %v1746
    %vm1750 = vweird.f32 %v1422
    %v1751 = vand.u32 %v1747, 3
    %vm1752 = vcmp.lt.s32.totalorder %v1751, 2
    %vm1753 = vcmp.eq.s32.totalorder %v1751, 0
    %v1754 = vxor.u32 %v1749, 2147483648
    %v1755 = vsel %vm1753, %v1748, %v1754
    %vm1756 = vcmp.eq.s32.totalorder %v1751, 2
    %v1757 = vxor.u32 %v1748, 2147483648
    %v1758 = vsel %vm1756, %v1757, %v1749
    %v1759 = vsel %vm1752, %v1755, %v1758
    %v1760 = vsel %vm1750, nan, %v1759
    %v1761 = vand.u32 2147483647, %v1423
    %vm1762 = vcmp.le.f32.partialorder %v1761, 0.7853982
    %vm1763 = vcmp.lt.s32.totalorder %v1423, 0
    %v1764 = vand.u32 %v1423, 2139095040
    %v1765 = vshrl.u32 %v1764, 23
    %v1766 = vsub.s32 %v1765, 127
    %v1767 = vand.u32 2147483647, %v1423
    %v1768 = vand.u32 %v1767, 8388607
    %v1769 = vor.u32 %v1768, 8388608
    %v1770 = vsub.s32 0, %v1769
    %v1771 = vadd.s32 %v1766, 1
    %vm1772 = vcmp.gt.s32.totalorder %v1771, 0
    %v1773 = vsel %vm1772, %v1771, 0
    %v1774 = vshrl.u32 %v1773, 5
    %v1775 = vand.u32 %v1773, 31
    %v1776 = vsub.s32 32, %v1775
    %v1777 = vshrl.u32 683565275, %v1776
    %v1778 = vshll.u32 683565275, %v1775
    %v1779 = vshrl.u32 2475754826, %v1776
    %v1780 = vor.u32 %v1778, %v1779
    %v1781 = vshll.u32 2475754826, %v1775
    %v1782 = vshrl.u32 2131351028, %v1776
    %v1783 = vor.u32 %v1781, %v1782
    %v1784 = vshll.u32 2131351028, %v1775
    %v1785 = vshrl.u32 2102212464, %v1776
    %v1786 = vor.u32 %v1784, %v1785
    %v1787 = vshll.u32 2102212464, %v1775
    %v1788 = vshrl.u32 920167782, %v1776
    %v1789 = vor.u32 %v1787, %v1788
    %v1790 = vshll.u32 920167782, %v1775
    %v1791 = vshrl.u32 1326507024, %v1776
    %v1792 = vor.u32 %v1790, %v1791
    %vm1793 = vcmp.lt.s32.totalorder %v1774, 1
    %vm1794 = vcmp.lt.s32.totalorder %v1774, 2
    %vm1795 = vcmp.lt.s32.totalorder %v1774, 3
    %vm1796 = vcmp.lt.s32.totalorder %v1774, 4
    %v1797 = vsel %vm1793, %v1777, %v1780
    %v1798 = vsel %vm1796, %v1786, 2102212464
    %v1799 = vsel %vm1795, %v1783, %v1798
    %v1800 = vsel %vm1794, %v1797, %v1799
    %v1801 = vsel %vm1793, %v1780, %v1783
    %v1802 = vsel %vm1796, %v1789, 920167782
    %v1803 = vsel %vm1795, %v1786, %v1802
    %v1804 = vsel %vm1794, %v1801, %v1803
    %v1805 = vsel %vm1793, %v1783, %v1786
    %v1806 = vsel %vm1796, %v1792, 1326507024
    %v1807 = vsel %vm1795, %v1789, %v1806
    %v1808 = vsel %vm1794, %v1805, %v1807
    %v1809 = vshll.u32 %v1769, 8
    %v1810 = vmul.u32.u64.compose %v1809, %v1808
    %v1811 = vextract.low.u32 %v1810
    %v1812 = vextract.high.u32 %v1810
    %v1813 = vmul.u32.u64.compose %v1809, %v1804
    %v1814 = vextract.low.u32 %v1813
    %v1815 = vextract.high.u32 %v1813
    %v1816 = vmul.u32 %v1809, %v1800
    %v1817 = vadd.s32 %v1812, %v1814
    %vm1818 = vc.u32 %v1812, %v1814
    %v1819 = vadd.s32 %v1815, 1
    %v1820 = vsel %vm1818, %v1819, %v1815
    %v1821 = vadd.s32 %v1816, %v1820
    %v1822 = vadd.s32 %v1821, 536870912
    %v1823 = vshrl.u32 %v1822, 30
    %v1824 = vshll.u32 %v1823, 30
    %v1825 = vsub.s32 %v1821, %v1824
    %vm1826 = vcmp.lt.s32.totalorder %v1825, 0
    %v1827 = vsub.s32 0, %v1825
    %v1828 = vsel %vm1826, %v1827, %v1825
    %v1829 = vclz %v1828
    %v1830 = vsub.s32 %v1829, 2
    %vm1831 = vcmp.gt.s32.totalorder 0, %v1830
    %v1832 = vsel %vm1831, 0, %v1830
    %v1833 = vsub.s32 32, %v1832
    %v1834 = vshll.u32 %v1825, %v1832
    %v1835 = vshrl.u32 %v1817, %v1833
    %v1836 = vor.u32 %v1834, %v1835
    %v1837 = vsub.s32 4294967266, %v1832
    %v1838 = vadd.s32 %v1837, 127
    %v1839 = vshll.u32 %v1838, 23
    %v1840 = vor.u32 4788187, %v1839
    %v1841 = vand.u32 2147483647, %v1840
    %v1843 = vcvt.s32.f32 %v1836
    %v1844 = vmul.f32 %v1843, %v1841
    %v1845 = vxor.u32 %v1844, 2147483648
    %v1846 = vsel %vm1763, %v1845, %v1844
    %v1847 = vsub.s32 4, %v1823
    %v1848 = vsel %vm1763, %v1847, %v1823
    %v1849 = vsel %vm1762, %v1423, %v1846
    %v1850 = vsel %vm1762, 0, %v1848
    %v1851 = vcosq.f32.pop %v1849
    %v1852 = vsinq.f32.pop %v1849
    %vm1853 = vweird.f32 %v1423
    %v1854 = vand.u32 %v1850, 3
    %vm1855 = vcmp.lt.s32.totalorder %v1854, 2
    %vm1856 = vcmp.eq.s32.totalorder %v1854, 0
    %v1857 = vxor.u32 %v1852, 2147483648
    %v1858 = vsel %vm1856, %v1851, %v1857
    %vm1859 = vcmp.eq.s32.totalorder %v1854, 2
    %v1860 = vxor.u32 %v1851, 2147483648
    %v1861 = vsel %vm1859, %v1860, %v1852
    %v1862 = vsel %vm1855, %v1858, %v1861
    %v1863 = vsel %vm1853, nan, %v1862
    %v1864 = vand.u32 2147483647, %v1424
    %vm1865 = vcmp.le.f32.partialorder %v1864, 0.7853982
    %vm1866 = vcmp.lt.s32.totalorder %v1424, 0
    %v1867 = vand.u32 %v1424, 2139095040
    %v1868 = vshrl.u32 %v1867, 23
    %v1869 = vsub.s32 %v1868, 127
    %v1870 = vand.u32 2147483647, %v1424
    %v1871 = vand.u32 %v1870, 8388607
    %v1872 = vor.u32 %v1871, 8388608
    %v1873 = vsub.s32 0, %v1872
    %v1874 = vadd.s32 %v1869, 1
    %vm1875 = vcmp.gt.s32.totalorder %v1874, 0
    %v1876 = vsel %vm1875, %v1874, 0
    %v1877 = vshrl.u32 %v1876, 5
    %v1878 = vand.u32 %v1876, 31
    %v1879 = vsub.s32 32, %v1878
    %v1880 = vshrl.u32 683565275, %v1879
    %v1881 = vshll.u32 683565275, %v1878
    %v1882 = vshrl.u32 2475754826, %v1879
    %v1883 = vor.u32 %v1881, %v1882
    %v1884 = vshll.u32 2475754826, %v1878
    %v1885 = vshrl.u32 2131351028, %v1879
    %v1886 = vor.u32 %v1884, %v1885
    %v1887 = vshll.u32 2131351028, %v1878
    %v1888 = vshrl.u32 2102212464, %v1879
    %v1889 = vor.u32 %v1887, %v1888
    %v1890 = vshll.u32 2102212464, %v1878
    %v1891 = vshrl.u32 920167782, %v1879
    %v1892 = vor.u32 %v1890, %v1891
    %v1893 = vshll.u32 920167782, %v1878
    %v1894 = vshrl.u32 1326507024, %v1879
    %v1895 = vor.u32 %v1893, %v1894
    %vm1896 = vcmp.lt.s32.totalorder %v1877, 1
    %vm1897 = vcmp.lt.s32.totalorder %v1877, 2
    %vm1898 = vcmp.lt.s32.totalorder %v1877, 3
    %vm1899 = vcmp.lt.s32.totalorder %v1877, 4
    %v1900 = vsel %vm1896, %v1880, %v1883
    %v1901 = vsel %vm1899, %v1889, 2102212464
    %v1902 = vsel %vm1898, %v1886, %v1901
    %v1903 = vsel %vm1897, %v1900, %v1902
    %v1904 = vsel %vm1896, %v1883, %v1886
    %v1905 = vsel %vm1899, %v1892, 920167782
    %v1906 = vsel %vm1898, %v1889, %v1905
    %v1907 = vsel %vm1897, %v1904, %v1906
    %v1908 = vsel %vm1896, %v1886, %v1889
    %v1909 = vsel %vm1899, %v1895, 1326507024
    %v1910 = vsel %vm1898, %v1892, %v1909
    %v1911 = vsel %vm1897, %v1908, %v1910
    %v1912 = vshll.u32 %v1872, 8
    %v1913 = vmul.u32.u64.compose %v1912, %v1911
    %v1914 = vextract.low.u32 %v1913
    %v1915 = vextract.high.u32 %v1913
    %v1916 = vmul.u32.u64.compose %v1912, %v1907
    %v1917 = vextract.low.u32 %v1916
    %v1918 = vextract.high.u32 %v1916
    %v1919 = vmul.u32 %v1912, %v1903
    %v1920 = vadd.s32 %v1915, %v1917
    %vm1921 = vc.u32 %v1915, %v1917
    %v1922 = vadd.s32 %v1918, 1
    %v1923 = vsel %vm1921, %v1922, %v1918
    %v1924 = vadd.s32 %v1919, %v1923
    %v1925 = vadd.s32 %v1924, 536870912
    %v1926 = vshrl.u32 %v1925, 30
    %v1927 = vshll.u32 %v1926, 30
    %v1928 = vsub.s32 %v1924, %v1927
    %vm1929 = vcmp.lt.s32.totalorder %v1928, 0
    %v1930 = vsub.s32 0, %v1928
    %v1931 = vsel %vm1929, %v1930, %v1928
    %v1932 = vclz %v1931
    %v1933 = vsub.s32 %v1932, 2
    %vm1934 = vcmp.gt.s32.totalorder 0, %v1933
    %v1935 = vsel %vm1934, 0, %v1933
    %v1936 = vsub.s32 32, %v1935
    %v1937 = vshll.u32 %v1928, %v1935
    %v1938 = vshrl.u32 %v1920, %v1936
    %v1939 = vor.u32 %v1937, %v1938
    %v1940 = vsub.s32 4294967266, %v1935
    %v1941 = vadd.s32 %v1940, 127
    %v1942 = vshll.u32 %v1941, 23
    %v1943 = vor.u32 4788187, %v1942
    %v1944 = vand.u32 2147483647, %v1943
    %v1946 = vcvt.s32.f32 %v1939
    %v1947 = vmul.f32 %v1946, %v1944
    %v1948 = vxor.u32 %v1947, 2147483648
    %v1949 = vsel %vm1866, %v1948, %v1947
    %v1950 = vsub.s32 4, %v1926
    %v1951 = vsel %vm1866, %v1950, %v1926
    %v1952 = vsel %vm1865, %v1424, %v1949
    %v1953 = vsel %vm1865, 0, %v1951
    %v1954 = vcosq.f32.pop %v1952
    %v1955 = vsinq.f32.pop %v1952
    %vm1956 = vweird.f32 %v1424
    %v1957 = vand.u32 %v1953, 3
    %vm1958 = vcmp.lt.s32.totalorder %v1957, 2
    %vm1959 = vcmp.eq.s32.totalorder %v1957, 0
    %v1960 = vxor.u32 %v1955, 2147483648
    %v1961 = vsel %vm1959, %v1954, %v1960
    %vm1962 = vcmp.eq.s32.totalorder %v1957, 2
    %v1963 = vxor.u32 %v1954, 2147483648
    %v1964 = vsel %vm1962, %v1963, %v1955
    %v1965 = vsel %vm1958, %v1961, %v1964
    %v1966 = vsel %vm1956, nan, %v1965
    %v1967 = vand.u32 2147483647, %v1425
    %vm1968 = vcmp.le.f32.partialorder %v1967, 0.7853982
    %vm1969 = vcmp.lt.s32.totalorder %v1425, 0
    %v1970 = vand.u32 %v1425, 2139095040
    %v1971 = vshrl.u32 %v1970, 23
    %v1972 = vsub.s32 %v1971, 127
    %v1973 = vand.u32 2147483647, %v1425
    %v1974 = vand.u32 %v1973, 8388607
    %v1975 = vor.u32 %v1974, 8388608
    %v1976 = vsub.s32 0, %v1975
    %v1977 = vadd.s32 %v1972, 1
    %vm1978 = vcmp.gt.s32.totalorder %v1977, 0
    %v1979 = vsel %vm1978, %v1977, 0
    %v1980 = vshrl.u32 %v1979, 5
    %v1981 = vand.u32 %v1979, 31
    %v1982 = vsub.s32 32, %v1981
    %v1983 = vshrl.u32 683565275, %v1982
    %v1984 = vshll.u32 683565275, %v1981
    %v1985 = vshrl.u32 2475754826, %v1982
    %v1986 = vor.u32 %v1984, %v1985
    %v1987 = vshll.u32 2475754826, %v1981
    %v1988 = vshrl.u32 2131351028, %v1982
    %v1989 = vor.u32 %v1987, %v1988
    %v1990 = vshll.u32 2131351028, %v1981
    %v1991 = vshrl.u32 2102212464, %v1982
    %v1992 = vor.u32 %v1990, %v1991
    %v1993 = vshll.u32 2102212464, %v1981
    %v1994 = vshrl.u32 920167782, %v1982
    %v1995 = vor.u32 %v1993, %v1994
    %v1996 = vshll.u32 920167782, %v1981
    %v1997 = vshrl.u32 1326507024, %v1982
    %v1998 = vor.u32 %v1996, %v1997
    %vm1999 = vcmp.lt.s32.totalorder %v1980, 1
    %vm2000 = vcmp.lt.s32.totalorder %v1980, 2
    %vm2001 = vcmp.lt.s32.totalorder %v1980, 3
    %vm2002 = vcmp.lt.s32.totalorder %v1980, 4
    %v2003 = vsel %vm1999, %v1983, %v1986
    %v2004 = vsel %vm2002, %v1992, 2102212464
    %v2005 = vsel %vm2001, %v1989, %v2004
    %v2006 = vsel %vm2000, %v2003, %v2005
    %v2007 = vsel %vm1999, %v1986, %v1989
    %v2008 = vsel %vm2002, %v1995, 920167782
    %v2009 = vsel %vm2001, %v1992, %v2008
    %v2010 = vsel %vm2000, %v2007, %v2009
    %v2011 = vsel %vm1999, %v1989, %v1992
    %v2012 = vsel %vm2002, %v1998, 1326507024
    %v2013 = vsel %vm2001, %v1995, %v2012
    %v2014 = vsel %vm2000, %v2011, %v2013
    %v2015 = vshll.u32 %v1975, 8
    %v2016 = vmul.u32.u64.compose %v2015, %v2014
    %v2017 = vextract.low.u32 %v2016
    %v2018 = vextract.high.u32 %v2016
    %v2019 = vmul.u32.u64.compose %v2015, %v2010
    %v2020 = vextract.low.u32 %v2019
    %v2021 = vextract.high.u32 %v2019
    %v2022 = vmul.u32 %v2015, %v2006
    %v2023 = vadd.s32 %v2018, %v2020
    %vm2024 = vc.u32 %v2018, %v2020
    %v2025 = vadd.s32 %v2021, 1
    %v2026 = vsel %vm2024, %v2025, %v2021
    %v2027 = vadd.s32 %v2022, %v2026
    %v2028 = vadd.s32 %v2027, 536870912
    %v2029 = vshrl.u32 %v2028, 30
    %v2030 = vshll.u32 %v2029, 30
    %v2031 = vsub.s32 %v2027, %v2030
    %vm2032 = vcmp.lt.s32.totalorder %v2031, 0
    %v2033 = vsub.s32 0, %v2031
    %v2034 = vsel %vm2032, %v2033, %v2031
    %v2035 = vclz %v2034
    %v2036 = vsub.s32 %v2035, 2
    %vm2037 = vcmp.gt.s32.totalorder 0, %v2036
    %v2038 = vsel %vm2037, 0, %v2036
    %v2039 = vsub.s32 32, %v2038
    %v2040 = vshll.u32 %v2031, %v2038
    %v2041 = vshrl.u32 %v2023, %v2039
    %v2042 = vor.u32 %v2040, %v2041
    %v2043 = vsub.s32 4294967266, %v2038
    %v2044 = vadd.s32 %v2043, 127
    %v2045 = vshll.u32 %v2044, 23
    %v2046 = vor.u32 4788187, %v2045
    %v2047 = vand.u32 2147483647, %v2046
    %v2049 = vcvt.s32.f32 %v2042
    %v2050 = vmul.f32 %v2049, %v2047
    %v2051 = vxor.u32 %v2050, 2147483648
    %v2052 = vsel %vm1969, %v2051, %v2050
    %v2053 = vsub.s32 4, %v2029
    %v2054 = vsel %vm1969, %v2053, %v2029
    %v2055 = vsel %vm1968, %v1425, %v2052
    %v2056 = vsel %vm1968, 0, %v2054
    %v2057 = vcosq.f32.pop %v2055
    %v2058 = vsinq.f32.pop %v2055
    %vm2059 = vweird.f32 %v1425
    %v2060 = vand.u32 %v2056, 3
    %vm2061 = vcmp.lt.s32.totalorder %v2060, 2
    %vm2062 = vcmp.eq.s32.totalorder %v2060, 0
    %v2063 = vxor.u32 %v2058, 2147483648
    %v2064 = vsel %vm2062, %v2057, %v2063
    %vm2065 = vcmp.eq.s32.totalorder %v2060, 2
    %v2066 = vxor.u32 %v2057, 2147483648
    %v2067 = vsel %vm2065, %v2066, %v2058
    %v2068 = vsel %vm2061, %v2064, %v2067
    %v2069 = vsel %vm2059, nan, %v2068
    %v2070 = vand.u32 2147483647, %v1426
    %vm2071 = vcmp.le.f32.partialorder %v2070, 0.7853982
    %vm2072 = vcmp.lt.s32.totalorder %v1426, 0
    %v2073 = vand.u32 %v1426, 2139095040
    %v2074 = vshrl.u32 %v2073, 23
    %v2075 = vsub.s32 %v2074, 127
    %v2076 = vand.u32 2147483647, %v1426
    %v2077 = vand.u32 %v2076, 8388607
    %v2078 = vor.u32 %v2077, 8388608
    %v2079 = vsub.s32 0, %v2078
    %v2080 = vadd.s32 %v2075, 1
    %vm2081 = vcmp.gt.s32.totalorder %v2080, 0
    %v2082 = vsel %vm2081, %v2080, 0
    %v2083 = vshrl.u32 %v2082, 5
    %v2084 = vand.u32 %v2082, 31
    %v2085 = vsub.s32 32, %v2084
    %v2086 = vshrl.u32 683565275, %v2085
    %v2087 = vshll.u32 683565275, %v2084
    %v2088 = vshrl.u32 2475754826, %v2085
    %v2089 = vor.u32 %v2087, %v2088
    %v2090 = vshll.u32 2475754826, %v2084
    %v2091 = vshrl.u32 2131351028, %v2085
    %v2092 = vor.u32 %v2090, %v2091
    %v2093 = vshll.u32 2131351028, %v2084
    %v2094 = vshrl.u32 2102212464, %v2085
    %v2095 = vor.u32 %v2093, %v2094
    %v2096 = vshll.u32 2102212464, %v2084
    %v2097 = vshrl.u32 920167782, %v2085
    %v2098 = vor.u32 %v2096, %v2097
    %v2099 = vshll.u32 920167782, %v2084
    %v2100 = vshrl.u32 1326507024, %v2085
    %v2101 = vor.u32 %v2099, %v2100
    %vm2102 = vcmp.lt.s32.totalorder %v2083, 1
    %vm2103 = vcmp.lt.s32.totalorder %v2083, 2
    %vm2104 = vcmp.lt.s32.totalorder %v2083, 3
    %vm2105 = vcmp.lt.s32.totalorder %v2083, 4
    %v2106 = vsel %vm2102, %v2086, %v2089
    %v2107 = vsel %vm2105, %v2095, 2102212464
    %v2108 = vsel %vm2104, %v2092, %v2107
    %v2109 = vsel %vm2103, %v2106, %v2108
    %v2110 = vsel %vm2102, %v2089, %v2092
    %v2111 = vsel %vm2105, %v2098, 920167782
    %v2112 = vsel %vm2104, %v2095, %v2111
    %v2113 = vsel %vm2103, %v2110, %v2112
    %v2114 = vsel %vm2102, %v2092, %v2095
    %v2115 = vsel %vm2105, %v2101, 1326507024
    %v2116 = vsel %vm2104, %v2098, %v2115
    %v2117 = vsel %vm2103, %v2114, %v2116
    %v2118 = vshll.u32 %v2078, 8
    %v2119 = vmul.u32.u64.compose %v2118, %v2117
    %v2120 = vextract.low.u32 %v2119
    %v2121 = vextract.high.u32 %v2119
    %v2122 = vmul.u32.u64.compose %v2118, %v2113
    %v2123 = vextract.low.u32 %v2122
    %v2124 = vextract.high.u32 %v2122
    %v2125 = vmul.u32 %v2118, %v2109
    %v2126 = vadd.s32 %v2121, %v2123
    %vm2127 = vc.u32 %v2121, %v2123
    %v2128 = vadd.s32 %v2124, 1
    %v2129 = vsel %vm2127, %v2128, %v2124
    %v2130 = vadd.s32 %v2125, %v2129
    %v2131 = vadd.s32 %v2130, 536870912
    %v2132 = vshrl.u32 %v2131, 30
    %v2133 = vshll.u32 %v2132, 30
    %v2134 = vsub.s32 %v2130, %v2133
    %vm2135 = vcmp.lt.s32.totalorder %v2134, 0
    %v2136 = vsub.s32 0, %v2134
    %v2137 = vsel %vm2135, %v2136, %v2134
    %v2138 = vclz %v2137
    %v2139 = vsub.s32 %v2138, 2
    %vm2140 = vcmp.gt.s32.totalorder 0, %v2139
    %v2141 = vsel %vm2140, 0, %v2139
    %v2142 = vsub.s32 32, %v2141
    %v2143 = vshll.u32 %v2134, %v2141
    %v2144 = vshrl.u32 %v2126, %v2142
    %v2145 = vor.u32 %v2143, %v2144
    %v2146 = vsub.s32 4294967266, %v2141
    %v2147 = vadd.s32 %v2146, 127
    %v2148 = vshll.u32 %v2147, 23
    %v2149 = vor.u32 4788187, %v2148
    %v2150 = vand.u32 2147483647, %v2149
    %v2152 = vcvt.s32.f32 %v2145
    %v2153 = vmul.f32 %v2152, %v2150
    %v2154 = vxor.u32 %v2153, 2147483648
    %v2155 = vsel %vm2072, %v2154, %v2153
    %v2156 = vsub.s32 4, %v2132
    %v2157 = vsel %vm2072, %v2156, %v2132
    %v2158 = vsel %vm2071, %v1426, %v2155
    %v2159 = vsel %vm2071, 0, %v2157
    %v2160 = vcosq.f32.pop %v2158
    %v2161 = vsinq.f32.pop %v2158
    %vm2162 = vweird.f32 %v1426
    %v2163 = vand.u32 %v2159, 3
    %vm2164 = vcmp.lt.s32.totalorder %v2163, 2
    %vm2165 = vcmp.eq.s32.totalorder %v2163, 0
    %v2166 = vxor.u32 %v2161, 2147483648
    %v2167 = vsel %vm2165, %v2160, %v2166
    %vm2168 = vcmp.eq.s32.totalorder %v2163, 2
    %v2169 = vxor.u32 %v2160, 2147483648
    %v2170 = vsel %vm2168, %v2169, %v2161
    %v2171 = vsel %vm2164, %v2167, %v2170
    %v2172 = vsel %vm2162, nan, %v2171
    %v2173 = vand.u32 2147483647, %v1427
    %vm2174 = vcmp.le.f32.partialorder %v2173, 0.7853982
    %vm2175 = vcmp.lt.s32.totalorder %v1427, 0
    %v2176 = vand.u32 %v1427, 2139095040
    %v2177 = vshrl.u32 %v2176, 23
    %v2178 = vsub.s32 %v2177, 127
    %v2179 = vand.u32 2147483647, %v1427
    %v2180 = vand.u32 %v2179, 8388607
    %v2181 = vor.u32 %v2180, 8388608
    %v2182 = vsub.s32 0, %v2181
    %v2183 = vadd.s32 %v2178, 1
    %vm2184 = vcmp.gt.s32.totalorder %v2183, 0
    %v2185 = vsel %vm2184, %v2183, 0
    %v2186 = vshrl.u32 %v2185, 5
    %v2187 = vand.u32 %v2185, 31
    %v2188 = vsub.s32 32, %v2187
    %v2189 = vshrl.u32 683565275, %v2188
    %v2190 = vshll.u32 683565275, %v2187
    %v2191 = vshrl.u32 2475754826, %v2188
    %v2192 = vor.u32 %v2190, %v2191
    %v2193 = vshll.u32 2475754826, %v2187
    %v2194 = vshrl.u32 2131351028, %v2188
    %v2195 = vor.u32 %v2193, %v2194
    %v2196 = vshll.u32 2131351028, %v2187
    %v2197 = vshrl.u32 2102212464, %v2188
    %v2198 = vor.u32 %v2196, %v2197
    %v2199 = vshll.u32 2102212464, %v2187
    %v2200 = vshrl.u32 920167782, %v2188
    %v2201 = vor.u32 %v2199, %v2200
    %v2202 = vshll.u32 920167782, %v2187
    %v2203 = vshrl.u32 1326507024, %v2188
    %v2204 = vor.u32 %v2202, %v2203
    %vm2205 = vcmp.lt.s32.totalorder %v2186, 1
    %vm2206 = vcmp.lt.s32.totalorder %v2186, 2
    %vm2207 = vcmp.lt.s32.totalorder %v2186, 3
    %vm2208 = vcmp.lt.s32.totalorder %v2186, 4
    %v2209 = vsel %vm2205, %v2189, %v2192
    %v2210 = vsel %vm2208, %v2198, 2102212464
    %v2211 = vsel %vm2207, %v2195, %v2210
    %v2212 = vsel %vm2206, %v2209, %v2211
    %v2213 = vsel %vm2205, %v2192, %v2195
    %v2214 = vsel %vm2208, %v2201, 920167782
    %v2215 = vsel %vm2207, %v2198, %v2214
    %v2216 = vsel %vm2206, %v2213, %v2215
    %v2217 = vsel %vm2205, %v2195, %v2198
    %v2218 = vsel %vm2208, %v2204, 1326507024
    %v2219 = vsel %vm2207, %v2201, %v2218
    %v2220 = vsel %vm2206, %v2217, %v2219
    %v2221 = vshll.u32 %v2181, 8
    %v2222 = vmul.u32.u64.compose %v2221, %v2220
    %v2223 = vextract.low.u32 %v2222
    %v2224 = vextract.high.u32 %v2222
    %v2225 = vmul.u32.u64.compose %v2221, %v2216
    %v2226 = vextract.low.u32 %v2225
    %v2227 = vextract.high.u32 %v2225
    %v2228 = vmul.u32 %v2221, %v2212
    %v2229 = vadd.s32 %v2224, %v2226
    %vm2230 = vc.u32 %v2224, %v2226
    %v2231 = vadd.s32 %v2227, 1
    %v2232 = vsel %vm2230, %v2231, %v2227
    %v2233 = vadd.s32 %v2228, %v2232
    %v2234 = vadd.s32 %v2233, 536870912
    %v2235 = vshrl.u32 %v2234, 30
    %v2236 = vshll.u32 %v2235, 30
    %v2237 = vsub.s32 %v2233, %v2236
    %vm2238 = vcmp.lt.s32.totalorder %v2237, 0
    %v2239 = vsub.s32 0, %v2237
    %v2240 = vsel %vm2238, %v2239, %v2237
    %v2241 = vclz %v2240
    %v2242 = vsub.s32 %v2241, 2
    %vm2243 = vcmp.gt.s32.totalorder 0, %v2242
    %v2244 = vsel %vm2243, 0, %v2242
    %v2245 = vsub.s32 32, %v2244
    %v2246 = vshll.u32 %v2237, %v2244
    %v2247 = vshrl.u32 %v2229, %v2245
    %v2248 = vor.u32 %v2246, %v2247
    %v2249 = vsub.s32 4294967266, %v2244
    %v2250 = vadd.s32 %v2249, 127
    %v2251 = vshll.u32 %v2250, 23
    %v2252 = vor.u32 4788187, %v2251
    %v2253 = vand.u32 2147483647, %v2252
    %v2255 = vcvt.s32.f32 %v2248
    %v2256 = vmul.f32 %v2255, %v2253
    %v2257 = vxor.u32 %v2256, 2147483648
    %v2258 = vsel %vm2175, %v2257, %v2256
    %v2259 = vsub.s32 4, %v2235
    %v2260 = vsel %vm2175, %v2259, %v2235
    %v2261 = vsel %vm2174, %v1427, %v2258
    %v2262 = vsel %vm2174, 0, %v2260
    %v2263 = vcosq.f32.pop %v2261
    %v2264 = vsinq.f32.pop %v2261
    %vm2265 = vweird.f32 %v1427
    %v2266 = vand.u32 %v2262, 3
    %vm2267 = vcmp.lt.s32.totalorder %v2266, 2
    %vm2268 = vcmp.eq.s32.totalorder %v2266, 0
    %v2269 = vxor.u32 %v2264, 2147483648
    %v2270 = vsel %vm2268, %v2263, %v2269
    %vm2271 = vcmp.eq.s32.totalorder %v2266, 2
    %v2272 = vxor.u32 %v2263, 2147483648
    %v2273 = vsel %vm2271, %v2272, %v2264
    %v2274 = vsel %vm2267, %v2270, %v2273
    %v2275 = vsel %vm2265, nan, %v2274
    %v2276 = vand.u32 2147483647, %v1428
    %vm2277 = vcmp.le.f32.partialorder %v2276, 0.7853982
    %vm2278 = vcmp.lt.s32.totalorder %v1428, 0
    %v2279 = vand.u32 %v1428, 2139095040
    %v2280 = vshrl.u32 %v2279, 23
    %v2281 = vsub.s32 %v2280, 127
    %v2282 = vand.u32 2147483647, %v1428
    %v2283 = vand.u32 %v2282, 8388607
    %v2284 = vor.u32 %v2283, 8388608
    %v2285 = vsub.s32 0, %v2284
    %v2286 = vadd.s32 %v2281, 1
    %vm2287 = vcmp.gt.s32.totalorder %v2286, 0
    %v2288 = vsel %vm2287, %v2286, 0
    %v2289 = vshrl.u32 %v2288, 5
    %v2290 = vand.u32 %v2288, 31
    %v2291 = vsub.s32 32, %v2290
    %v2292 = vshrl.u32 683565275, %v2291
    %v2293 = vshll.u32 683565275, %v2290
    %v2294 = vshrl.u32 2475754826, %v2291
    %v2295 = vor.u32 %v2293, %v2294
    %v2296 = vshll.u32 2475754826, %v2290
    %v2297 = vshrl.u32 2131351028, %v2291
    %v2298 = vor.u32 %v2296, %v2297
    %v2299 = vshll.u32 2131351028, %v2290
    %v2300 = vshrl.u32 2102212464, %v2291
    %v2301 = vor.u32 %v2299, %v2300
    %v2302 = vshll.u32 2102212464, %v2290
    %v2303 = vshrl.u32 920167782, %v2291
    %v2304 = vor.u32 %v2302, %v2303
    %v2305 = vshll.u32 920167782, %v2290
    %v2306 = vshrl.u32 1326507024, %v2291
    %v2307 = vor.u32 %v2305, %v2306
    %vm2308 = vcmp.lt.s32.totalorder %v2289, 1
    %vm2309 = vcmp.lt.s32.totalorder %v2289, 2
    %vm2310 = vcmp.lt.s32.totalorder %v2289, 3
    %vm2311 = vcmp.lt.s32.totalorder %v2289, 4
    %v2312 = vsel %vm2308, %v2292, %v2295
    %v2313 = vsel %vm2311, %v2301, 2102212464
    %v2314 = vsel %vm2310, %v2298, %v2313
    %v2315 = vsel %vm2309, %v2312, %v2314
    %v2316 = vsel %vm2308, %v2295, %v2298
    %v2317 = vsel %vm2311, %v2304, 920167782
    %v2318 = vsel %vm2310, %v2301, %v2317
    %v2319 = vsel %vm2309, %v2316, %v2318
    %v2320 = vsel %vm2308, %v2298, %v2301
    %v2321 = vsel %vm2311, %v2307, 1326507024
    %v2322 = vsel %vm2310, %v2304, %v2321
    %v2323 = vsel %vm2309, %v2320, %v2322
    %v2324 = vshll.u32 %v2284, 8
    %v2325 = vmul.u32.u64.compose %v2324, %v2323
    %v2326 = vextract.low.u32 %v2325
    %v2327 = vextract.high.u32 %v2325
    %v2328 = vmul.u32.u64.compose %v2324, %v2319
    %v2329 = vextract.low.u32 %v2328
    %v2330 = vextract.high.u32 %v2328
    %v2331 = vmul.u32 %v2324, %v2315
    %v2332 = vadd.s32 %v2327, %v2329
    %vm2333 = vc.u32 %v2327, %v2329
    %v2334 = vadd.s32 %v2330, 1
    %v2335 = vsel %vm2333, %v2334, %v2330
    %v2336 = vadd.s32 %v2331, %v2335
    %v2337 = vadd.s32 %v2336, 536870912
    %v2338 = vshrl.u32 %v2337, 30
    %v2339 = vshll.u32 %v2338, 30
    %v2340 = vsub.s32 %v2336, %v2339
    %vm2341 = vcmp.lt.s32.totalorder %v2340, 0
    %v2342 = vsub.s32 0, %v2340
    %v2343 = vsel %vm2341, %v2342, %v2340
    %v2344 = vclz %v2343
    %v2345 = vsub.s32 %v2344, 2
    %vm2346 = vcmp.gt.s32.totalorder 0, %v2345
    %v2347 = vsel %vm2346, 0, %v2345
    %v2348 = vsub.s32 32, %v2347
    %v2349 = vshll.u32 %v2340, %v2347
    %v2350 = vshrl.u32 %v2332, %v2348
    %v2351 = vor.u32 %v2349, %v2350
    %v2352 = vsub.s32 4294967266, %v2347
    %v2353 = vadd.s32 %v2352, 127
    %v2354 = vshll.u32 %v2353, 23
    %v2355 = vor.u32 4788187, %v2354
    %v2356 = vand.u32 2147483647, %v2355
    %v2358 = vcvt.s32.f32 %v2351
    %v2359 = vmul.f32 %v2358, %v2356
    %v2360 = vxor.u32 %v2359, 2147483648
    %v2361 = vsel %vm2278, %v2360, %v2359
    %v2362 = vsub.s32 4, %v2338
    %v2363 = vsel %vm2278, %v2362, %v2338
    %v2364 = vsel %vm2277, %v1428, %v2361
    %v2365 = vsel %vm2277, 0, %v2363
    %v2366 = vcosq.f32.pop %v2364
    %v2367 = vsinq.f32.pop %v2364
    %vm2368 = vweird.f32 %v1428
    %v2369 = vand.u32 %v2365, 3
    %vm2370 = vcmp.lt.s32.totalorder %v2369, 2
    %vm2371 = vcmp.eq.s32.totalorder %v2369, 0
    %v2372 = vxor.u32 %v2367, 2147483648
    %v2373 = vsel %vm2371, %v2366, %v2372
    %vm2374 = vcmp.eq.s32.totalorder %v2369, 2
    %v2375 = vxor.u32 %v2366, 2147483648
    %v2376 = vsel %vm2374, %v2375, %v2367
    %v2377 = vsel %vm2370, %v2373, %v2376
    %v2378 = vsel %vm2368, nan, %v2377
    %v2379 = vand.u32 2147483647, %v1429
    %vm2380 = vcmp.le.f32.partialorder %v2379, 0.7853982
    %vm2381 = vcmp.lt.s32.totalorder %v1429, 0
    %v2382 = vand.u32 %v1429, 2139095040
    %v2383 = vshrl.u32 %v2382, 23
    %v2384 = vsub.s32 %v2383, 127
    %v2385 = vand.u32 2147483647, %v1429
    %v2386 = vand.u32 %v2385, 8388607
    %v2387 = vor.u32 %v2386, 8388608
    %v2388 = vsub.s32 0, %v2387
    %v2389 = vadd.s32 %v2384, 1
    %vm2390 = vcmp.gt.s32.totalorder %v2389, 0
    %v2391 = vsel %vm2390, %v2389, 0
    %v2392 = vshrl.u32 %v2391, 5
    %v2393 = vand.u32 %v2391, 31
    %v2394 = vsub.s32 32, %v2393
    %v2395 = vshrl.u32 683565275, %v2394
    %v2396 = vshll.u32 683565275, %v2393
    %v2397 = vshrl.u32 2475754826, %v2394
    %v2398 = vor.u32 %v2396, %v2397
    %v2399 = vshll.u32 2475754826, %v2393
    %v2400 = vshrl.u32 2131351028, %v2394
    %v2401 = vor.u32 %v2399, %v2400
    %v2402 = vshll.u32 2131351028, %v2393
    %v2403 = vshrl.u32 2102212464, %v2394
    %v2404 = vor.u32 %v2402, %v2403
    %v2405 = vshll.u32 2102212464, %v2393
    %v2406 = vshrl.u32 920167782, %v2394
    %v2407 = vor.u32 %v2405, %v2406
    %v2408 = vshll.u32 920167782, %v2393
    %v2409 = vshrl.u32 1326507024, %v2394
    %v2410 = vor.u32 %v2408, %v2409
    %vm2411 = vcmp.lt.s32.totalorder %v2392, 1
    %vm2412 = vcmp.lt.s32.totalorder %v2392, 2
    %vm2413 = vcmp.lt.s32.totalorder %v2392, 3
    %vm2414 = vcmp.lt.s32.totalorder %v2392, 4
    %v2415 = vsel %vm2411, %v2395, %v2398
    %v2416 = vsel %vm2414, %v2404, 2102212464
    %v2417 = vsel %vm2413, %v2401, %v2416
    %v2418 = vsel %vm2412, %v2415, %v2417
    %v2419 = vsel %vm2411, %v2398, %v2401
    %v2420 = vsel %vm2414, %v2407, 920167782
    %v2421 = vsel %vm2413, %v2404, %v2420
    %v2422 = vsel %vm2412, %v2419, %v2421
    %v2423 = vsel %vm2411, %v2401, %v2404
    %v2424 = vsel %vm2414, %v2410, 1326507024
    %v2425 = vsel %vm2413, %v2407, %v2424
    %v2426 = vsel %vm2412, %v2423, %v2425
    %v2427 = vshll.u32 %v2387, 8
    %v2428 = vmul.u32.u64.compose %v2427, %v2426
    %v2429 = vextract.low.u32 %v2428
    %v2430 = vextract.high.u32 %v2428
    %v2431 = vmul.u32.u64.compose %v2427, %v2422
    %v2432 = vextract.low.u32 %v2431
    %v2433 = vextract.high.u32 %v2431
    %v2434 = vmul.u32 %v2427, %v2418
    %v2435 = vadd.s32 %v2430, %v2432
    %vm2436 = vc.u32 %v2430, %v2432
    %v2437 = vadd.s32 %v2433, 1
    %v2438 = vsel %vm2436, %v2437, %v2433
    %v2439 = vadd.s32 %v2434, %v2438
    %v2440 = vadd.s32 %v2439, 536870912
    %v2441 = vshrl.u32 %v2440, 30
    %v2442 = vshll.u32 %v2441, 30
    %v2443 = vsub.s32 %v2439, %v2442
    %vm2444 = vcmp.lt.s32.totalorder %v2443, 0
    %v2445 = vsub.s32 0, %v2443
    %v2446 = vsel %vm2444, %v2445, %v2443
    %v2447 = vclz %v2446
    %v2448 = vsub.s32 %v2447, 2
    %vm2449 = vcmp.gt.s32.totalorder 0, %v2448
    %v2450 = vsel %vm2449, 0, %v2448
    %v2451 = vsub.s32 32, %v2450
    %v2452 = vshll.u32 %v2443, %v2450
    %v2453 = vshrl.u32 %v2435, %v2451
    %v2454 = vor.u32 %v2452, %v2453
    %v2455 = vsub.s32 4294967266, %v2450
    %v2456 = vadd.s32 %v2455, 127
    %v2457 = vshll.u32 %v2456, 23
    %v2458 = vor.u32 4788187, %v2457
    %v2459 = vand.u32 2147483647, %v2458
    %v2461 = vcvt.s32.f32 %v2454
    %v2462 = vmul.f32 %v2461, %v2459
    %v2463 = vxor.u32 %v2462, 2147483648
    %v2464 = vsel %vm2381, %v2463, %v2462
    %v2465 = vsub.s32 4, %v2441
    %v2466 = vsel %vm2381, %v2465, %v2441
    %v2467 = vsel %vm2380, %v1429, %v2464
    %v2468 = vsel %vm2380, 0, %v2466
    %v2469 = vcosq.f32.pop %v2467
    %v2470 = vsinq.f32.pop %v2467
    %vm2471 = vweird.f32 %v1429
    %v2472 = vand.u32 %v2468, 3
    %vm2473 = vcmp.lt.s32.totalorder %v2472, 2
    %vm2474 = vcmp.eq.s32.totalorder %v2472, 0
    %v2475 = vxor.u32 %v2470, 2147483648
    %v2476 = vsel %vm2474, %v2469, %v2475
    %vm2477 = vcmp.eq.s32.totalorder %v2472, 2
    %v2478 = vxor.u32 %v2469, 2147483648
    %v2479 = vsel %vm2477, %v2478, %v2470
    %v2480 = vsel %vm2473, %v2476, %v2479
    %v2481 = vsel %vm2471, nan, %v2480
    %v2482 = vand.u32 2147483647, %v1430
    %vm2483 = vcmp.le.f32.partialorder %v2482, 0.7853982
    %vm2484 = vcmp.lt.s32.totalorder %v1430, 0
    %v2485 = vand.u32 %v1430, 2139095040
    %v2486 = vshrl.u32 %v2485, 23
    %v2487 = vsub.s32 %v2486, 127
    %v2488 = vand.u32 2147483647, %v1430
    %v2489 = vand.u32 %v2488, 8388607
    %v2490 = vor.u32 %v2489, 8388608
    %v2491 = vsub.s32 0, %v2490
    %v2492 = vadd.s32 %v2487, 1
    %vm2493 = vcmp.gt.s32.totalorder %v2492, 0
    %v2494 = vsel %vm2493, %v2492, 0
    %v2495 = vshrl.u32 %v2494, 5
    %v2496 = vand.u32 %v2494, 31
    %v2497 = vsub.s32 32, %v2496
    %v2498 = vshrl.u32 683565275, %v2497
    %v2499 = vshll.u32 683565275, %v2496
    %v2500 = vshrl.u32 2475754826, %v2497
    %v2501 = vor.u32 %v2499, %v2500
    %v2502 = vshll.u32 2475754826, %v2496
    %v2503 = vshrl.u32 2131351028, %v2497
    %v2504 = vor.u32 %v2502, %v2503
    %v2505 = vshll.u32 2131351028, %v2496
    %v2506 = vshrl.u32 2102212464, %v2497
    %v2507 = vor.u32 %v2505, %v2506
    %v2508 = vshll.u32 2102212464, %v2496
    %v2509 = vshrl.u32 920167782, %v2497
    %v2510 = vor.u32 %v2508, %v2509
    %v2511 = vshll.u32 920167782, %v2496
    %v2512 = vshrl.u32 1326507024, %v2497
    %v2513 = vor.u32 %v2511, %v2512
    %vm2514 = vcmp.lt.s32.totalorder %v2495, 1
    %vm2515 = vcmp.lt.s32.totalorder %v2495, 2
    %vm2516 = vcmp.lt.s32.totalorder %v2495, 3
    %vm2517 = vcmp.lt.s32.totalorder %v2495, 4
    %v2518 = vsel %vm2514, %v2498, %v2501
    %v2519 = vsel %vm2517, %v2507, 2102212464
    %v2520 = vsel %vm2516, %v2504, %v2519
    %v2521 = vsel %vm2515, %v2518, %v2520
    %v2522 = vsel %vm2514, %v2501, %v2504
    %v2523 = vsel %vm2517, %v2510, 920167782
    %v2524 = vsel %vm2516, %v2507, %v2523
    %v2525 = vsel %vm2515, %v2522, %v2524
    %v2526 = vsel %vm2514, %v2504, %v2507
    %v2527 = vsel %vm2517, %v2513, 1326507024
    %v2528 = vsel %vm2516, %v2510, %v2527
    %v2529 = vsel %vm2515, %v2526, %v2528
    %v2530 = vshll.u32 %v2490, 8
    %v2531 = vmul.u32.u64.compose %v2530, %v2529
    %v2532 = vextract.low.u32 %v2531
    %v2533 = vextract.high.u32 %v2531
    %v2534 = vmul.u32.u64.compose %v2530, %v2525
    %v2535 = vextract.low.u32 %v2534
    %v2536 = vextract.high.u32 %v2534
    %v2537 = vmul.u32 %v2530, %v2521
    %v2538 = vadd.s32 %v2533, %v2535
    %vm2539 = vc.u32 %v2533, %v2535
    %v2540 = vadd.s32 %v2536, 1
    %v2541 = vsel %vm2539, %v2540, %v2536
    %v2542 = vadd.s32 %v2537, %v2541
    %v2543 = vadd.s32 %v2542, 536870912
    %v2544 = vshrl.u32 %v2543, 30
    %v2545 = vshll.u32 %v2544, 30
    %v2546 = vsub.s32 %v2542, %v2545
    %vm2547 = vcmp.lt.s32.totalorder %v2546, 0
    %v2548 = vsub.s32 0, %v2546
    %v2549 = vsel %vm2547, %v2548, %v2546
    %v2550 = vclz %v2549
    %v2551 = vsub.s32 %v2550, 2
    %vm2552 = vcmp.gt.s32.totalorder 0, %v2551
    %v2553 = vsel %vm2552, 0, %v2551
    %v2554 = vsub.s32 32, %v2553
    %v2555 = vshll.u32 %v2546, %v2553
    %v2556 = vshrl.u32 %v2538, %v2554
    %v2557 = vor.u32 %v2555, %v2556
    %v2558 = vsub.s32 4294967266, %v2553
    %v2559 = vadd.s32 %v2558, 127
    %v2560 = vshll.u32 %v2559, 23
    %v2561 = vor.u32 4788187, %v2560
    %v2562 = vand.u32 2147483647, %v2561
    %v2564 = vcvt.s32.f32 %v2557
    %v2565 = vmul.f32 %v2564, %v2562
    %v2566 = vxor.u32 %v2565, 2147483648
    %v2567 = vsel %vm2484, %v2566, %v2565
    %v2568 = vsub.s32 4, %v2544
    %v2569 = vsel %vm2484, %v2568, %v2544
    %v2570 = vsel %vm2483, %v1430, %v2567
    %v2571 = vsel %vm2483, 0, %v2569
    %v2572 = vcosq.f32.pop %v2570
    %v2573 = vsinq.f32.pop %v2570
    %vm2574 = vweird.f32 %v1430
    %v2575 = vand.u32 %v2571, 3
    %vm2576 = vcmp.lt.s32.totalorder %v2575, 2
    %vm2577 = vcmp.eq.s32.totalorder %v2575, 0
    %v2578 = vxor.u32 %v2573, 2147483648
    %v2579 = vsel %vm2577, %v2572, %v2578
    %vm2580 = vcmp.eq.s32.totalorder %v2575, 2
    %v2581 = vxor.u32 %v2572, 2147483648
    %v2582 = vsel %vm2580, %v2581, %v2573
    %v2583 = vsel %vm2576, %v2579, %v2582
    %v2584 = vsel %vm2574, nan, %v2583
    %v2585 = vand.u32 2147483647, %v1431
    %vm2586 = vcmp.le.f32.partialorder %v2585, 0.7853982
    %vm2587 = vcmp.lt.s32.totalorder %v1431, 0
    %v2588 = vand.u32 %v1431, 2139095040
    %v2589 = vshrl.u32 %v2588, 23
    %v2590 = vsub.s32 %v2589, 127
    %v2591 = vand.u32 2147483647, %v1431
    %v2592 = vand.u32 %v2591, 8388607
    %v2593 = vor.u32 %v2592, 8388608
    %v2594 = vsub.s32 0, %v2593
    %v2595 = vadd.s32 %v2590, 1
    %vm2596 = vcmp.gt.s32.totalorder %v2595, 0
    %v2597 = vsel %vm2596, %v2595, 0
    %v2598 = vshrl.u32 %v2597, 5
    %v2599 = vand.u32 %v2597, 31
    %v2600 = vsub.s32 32, %v2599
    %v2601 = vshrl.u32 683565275, %v2600
    %v2602 = vshll.u32 683565275, %v2599
    %v2603 = vshrl.u32 2475754826, %v2600
    %v2604 = vor.u32 %v2602, %v2603
    %v2605 = vshll.u32 2475754826, %v2599
    %v2606 = vshrl.u32 2131351028, %v2600
    %v2607 = vor.u32 %v2605, %v2606
    %v2608 = vshll.u32 2131351028, %v2599
    %v2609 = vshrl.u32 2102212464, %v2600
    %v2610 = vor.u32 %v2608, %v2609
    %v2611 = vshll.u32 2102212464, %v2599
    %v2612 = vshrl.u32 920167782, %v2600
    %v2613 = vor.u32 %v2611, %v2612
    %v2614 = vshll.u32 920167782, %v2599
    %v2615 = vshrl.u32 1326507024, %v2600
    %v2616 = vor.u32 %v2614, %v2615
    %vm2617 = vcmp.lt.s32.totalorder %v2598, 1
    %vm2618 = vcmp.lt.s32.totalorder %v2598, 2
    %vm2619 = vcmp.lt.s32.totalorder %v2598, 3
    %vm2620 = vcmp.lt.s32.totalorder %v2598, 4
    %v2621 = vsel %vm2617, %v2601, %v2604
    %v2622 = vsel %vm2620, %v2610, 2102212464
    %v2623 = vsel %vm2619, %v2607, %v2622
    %v2624 = vsel %vm2618, %v2621, %v2623
    %v2625 = vsel %vm2617, %v2604, %v2607
    %v2626 = vsel %vm2620, %v2613, 920167782
    %v2627 = vsel %vm2619, %v2610, %v2626
    %v2628 = vsel %vm2618, %v2625, %v2627
    %v2629 = vsel %vm2617, %v2607, %v2610
    %v2630 = vsel %vm2620, %v2616, 1326507024
    %v2631 = vsel %vm2619, %v2613, %v2630
    %v2632 = vsel %vm2618, %v2629, %v2631
    %v2633 = vshll.u32 %v2593, 8
    %v2634 = vmul.u32.u64.compose %v2633, %v2632
    %v2635 = vextract.low.u32 %v2634
    %v2636 = vextract.high.u32 %v2634
    %v2637 = vmul.u32.u64.compose %v2633, %v2628
    %v2638 = vextract.low.u32 %v2637
    %v2639 = vextract.high.u32 %v2637
    %v2640 = vmul.u32 %v2633, %v2624
    %v2641 = vadd.s32 %v2636, %v2638
    %vm2642 = vc.u32 %v2636, %v2638
    %v2643 = vadd.s32 %v2639, 1
    %v2644 = vsel %vm2642, %v2643, %v2639
    %v2645 = vadd.s32 %v2640, %v2644
    %v2646 = vadd.s32 %v2645, 536870912
    %v2647 = vshrl.u32 %v2646, 30
    %v2648 = vshll.u32 %v2647, 30
    %v2649 = vsub.s32 %v2645, %v2648
    %vm2650 = vcmp.lt.s32.totalorder %v2649, 0
    %v2651 = vsub.s32 0, %v2649
    %v2652 = vsel %vm2650, %v2651, %v2649
    %v2653 = vclz %v2652
    %v2654 = vsub.s32 %v2653, 2
    %vm2655 = vcmp.gt.s32.totalorder 0, %v2654
    %v2656 = vsel %vm2655, 0, %v2654
    %v2657 = vsub.s32 32, %v2656
    %v2658 = vshll.u32 %v2649, %v2656
    %v2659 = vshrl.u32 %v2641, %v2657
    %v2660 = vor.u32 %v2658, %v2659
    %v2661 = vsub.s32 4294967266, %v2656
    %v2662 = vadd.s32 %v2661, 127
    %v2663 = vshll.u32 %v2662, 23
    %v2664 = vor.u32 4788187, %v2663
    %v2665 = vand.u32 2147483647, %v2664
    %v2667 = vcvt.s32.f32 %v2660
    %v2668 = vmul.f32 %v2667, %v2665
    %v2669 = vxor.u32 %v2668, 2147483648
    %v2670 = vsel %vm2587, %v2669, %v2668
    %v2671 = vsub.s32 4, %v2647
    %v2672 = vsel %vm2587, %v2671, %v2647
    %v2673 = vsel %vm2586, %v1431, %v2670
    %v2674 = vsel %vm2586, 0, %v2672
    %v2675 = vcosq.f32.pop %v2673
    %v2676 = vsinq.f32.pop %v2673
    %vm2677 = vweird.f32 %v1431
    %v2678 = vand.u32 %v2674, 3
    %vm2679 = vcmp.lt.s32.totalorder %v2678, 2
    %vm2680 = vcmp.eq.s32.totalorder %v2678, 0
    %v2681 = vxor.u32 %v2676, 2147483648
    %v2682 = vsel %vm2680, %v2675, %v2681
    %vm2683 = vcmp.eq.s32.totalorder %v2678, 2
    %v2684 = vxor.u32 %v2675, 2147483648
    %v2685 = vsel %vm2683, %v2684, %v2676
    %v2686 = vsel %vm2679, %v2682, %v2685
    %v2687 = vsel %vm2677, nan, %v2686
    %v2688 = vand.u32 2147483647, %v1432
    %vm2689 = vcmp.le.f32.partialorder %v2688, 0.7853982
    %vm2690 = vcmp.lt.s32.totalorder %v1432, 0
    %v2691 = vand.u32 %v1432, 2139095040
    %v2692 = vshrl.u32 %v2691, 23
    %v2693 = vsub.s32 %v2692, 127
    %v2694 = vand.u32 2147483647, %v1432
    %v2695 = vand.u32 %v2694, 8388607
    %v2696 = vor.u32 %v2695, 8388608
    %v2697 = vsub.s32 0, %v2696
    %v2698 = vadd.s32 %v2693, 1
    %vm2699 = vcmp.gt.s32.totalorder %v2698, 0
    %v2700 = vsel %vm2699, %v2698, 0
    %v2701 = vshrl.u32 %v2700, 5
    %v2702 = vand.u32 %v2700, 31
    %v2703 = vsub.s32 32, %v2702
    %v2704 = vshrl.u32 683565275, %v2703
    %v2705 = vshll.u32 683565275, %v2702
    %v2706 = vshrl.u32 2475754826, %v2703
    %v2707 = vor.u32 %v2705, %v2706
    %v2708 = vshll.u32 2475754826, %v2702
    %v2709 = vshrl.u32 2131351028, %v2703
    %v2710 = vor.u32 %v2708, %v2709
    %v2711 = vshll.u32 2131351028, %v2702
    %v2712 = vshrl.u32 2102212464, %v2703
    %v2713 = vor.u32 %v2711, %v2712
    %v2714 = vshll.u32 2102212464, %v2702
    %v2715 = vshrl.u32 920167782, %v2703
    %v2716 = vor.u32 %v2714, %v2715
    %v2717 = vshll.u32 920167782, %v2702
    %v2718 = vshrl.u32 1326507024, %v2703
    %v2719 = vor.u32 %v2717, %v2718
    %vm2720 = vcmp.lt.s32.totalorder %v2701, 1
    %vm2721 = vcmp.lt.s32.totalorder %v2701, 2
    %vm2722 = vcmp.lt.s32.totalorder %v2701, 3
    %vm2723 = vcmp.lt.s32.totalorder %v2701, 4
    %v2724 = vsel %vm2720, %v2704, %v2707
    %v2725 = vsel %vm2723, %v2713, 2102212464
    %v2726 = vsel %vm2722, %v2710, %v2725
    %v2727 = vsel %vm2721, %v2724, %v2726
    %v2728 = vsel %vm2720, %v2707, %v2710
    %v2729 = vsel %vm2723, %v2716, 920167782
    %v2730 = vsel %vm2722, %v2713, %v2729
    %v2731 = vsel %vm2721, %v2728, %v2730
    %v2732 = vsel %vm2720, %v2710, %v2713
    %v2733 = vsel %vm2723, %v2719, 1326507024
    %v2734 = vsel %vm2722, %v2716, %v2733
    %v2735 = vsel %vm2721, %v2732, %v2734
    %v2736 = vshll.u32 %v2696, 8
    %v2737 = vmul.u32.u64.compose %v2736, %v2735
    %v2738 = vextract.low.u32 %v2737
    %v2739 = vextract.high.u32 %v2737
    %v2740 = vmul.u32.u64.compose %v2736, %v2731
    %v2741 = vextract.low.u32 %v2740
    %v2742 = vextract.high.u32 %v2740
    %v2743 = vmul.u32 %v2736, %v2727
    %v2744 = vadd.s32 %v2739, %v2741
    %vm2745 = vc.u32 %v2739, %v2741
    %v2746 = vadd.s32 %v2742, 1
    %v2747 = vsel %vm2745, %v2746, %v2742
    %v2748 = vadd.s32 %v2743, %v2747
    %v2749 = vadd.s32 %v2748, 536870912
    %v2750 = vshrl.u32 %v2749, 30
    %v2751 = vshll.u32 %v2750, 30
    %v2752 = vsub.s32 %v2748, %v2751
    %vm2753 = vcmp.lt.s32.totalorder %v2752, 0
    %v2754 = vsub.s32 0, %v2752
    %v2755 = vsel %vm2753, %v2754, %v2752
    %v2756 = vclz %v2755
    %v2757 = vsub.s32 %v2756, 2
    %vm2758 = vcmp.gt.s32.totalorder 0, %v2757
    %v2759 = vsel %vm2758, 0, %v2757
    %v2760 = vsub.s32 32, %v2759
    %v2761 = vshll.u32 %v2752, %v2759
    %v2762 = vshrl.u32 %v2744, %v2760
    %v2763 = vor.u32 %v2761, %v2762
    %v2764 = vsub.s32 4294967266, %v2759
    %v2765 = vadd.s32 %v2764, 127
    %v2766 = vshll.u32 %v2765, 23
    %v2767 = vor.u32 4788187, %v2766
    %v2768 = vand.u32 2147483647, %v2767
    %v2770 = vcvt.s32.f32 %v2763
    %v2771 = vmul.f32 %v2770, %v2768
    %v2772 = vxor.u32 %v2771, 2147483648
    %v2773 = vsel %vm2690, %v2772, %v2771
    %v2774 = vsub.s32 4, %v2750
    %v2775 = vsel %vm2690, %v2774, %v2750
    %v2776 = vsel %vm2689, %v1432, %v2773
    %v2777 = vsel %vm2689, 0, %v2775
    %v2778 = vcosq.f32.pop %v2776
    %v2779 = vsinq.f32.pop %v2776
    %vm2780 = vweird.f32 %v1432
    %v2781 = vand.u32 %v2777, 3
    %vm2782 = vcmp.lt.s32.totalorder %v2781, 2
    %vm2783 = vcmp.eq.s32.totalorder %v2781, 0
    %v2784 = vxor.u32 %v2779, 2147483648
    %v2785 = vsel %vm2783, %v2778, %v2784
    %vm2786 = vcmp.eq.s32.totalorder %v2781, 2
    %v2787 = vxor.u32 %v2778, 2147483648
    %v2788 = vsel %vm2786, %v2787, %v2779
    %v2789 = vsel %vm2782, %v2785, %v2788
    %v2790 = vsel %vm2780, nan, %v2789
    %v2791 = vand.u32 2147483647, %v1433
    %vm2792 = vcmp.le.f32.partialorder %v2791, 0.7853982
    %vm2793 = vcmp.lt.s32.totalorder %v1433, 0
    %v2794 = vand.u32 %v1433, 2139095040
    %v2795 = vshrl.u32 %v2794, 23
    %v2796 = vsub.s32 %v2795, 127
    %v2797 = vand.u32 2147483647, %v1433
    %v2798 = vand.u32 %v2797, 8388607
    %v2799 = vor.u32 %v2798, 8388608
    %v2800 = vsub.s32 0, %v2799
    %v2801 = vadd.s32 %v2796, 1
    %vm2802 = vcmp.gt.s32.totalorder %v2801, 0
    %v2803 = vsel %vm2802, %v2801, 0
    %v2804 = vshrl.u32 %v2803, 5
    %v2805 = vand.u32 %v2803, 31
    %v2806 = vsub.s32 32, %v2805
    %v2807 = vshrl.u32 683565275, %v2806
    %v2808 = vshll.u32 683565275, %v2805
    %v2809 = vshrl.u32 2475754826, %v2806
    %v2810 = vor.u32 %v2808, %v2809
    %v2811 = vshll.u32 2475754826, %v2805
    %v2812 = vshrl.u32 2131351028, %v2806
    %v2813 = vor.u32 %v2811, %v2812
    %v2814 = vshll.u32 2131351028, %v2805
    %v2815 = vshrl.u32 2102212464, %v2806
    %v2816 = vor.u32 %v2814, %v2815
    %v2817 = vshll.u32 2102212464, %v2805
    %v2818 = vshrl.u32 920167782, %v2806
    %v2819 = vor.u32 %v2817, %v2818
    %v2820 = vshll.u32 920167782, %v2805
    %v2821 = vshrl.u32 1326507024, %v2806
    %v2822 = vor.u32 %v2820, %v2821
    %vm2823 = vcmp.lt.s32.totalorder %v2804, 1
    %vm2824 = vcmp.lt.s32.totalorder %v2804, 2
    %vm2825 = vcmp.lt.s32.totalorder %v2804, 3
    %vm2826 = vcmp.lt.s32.totalorder %v2804, 4
    %v2827 = vsel %vm2823, %v2807, %v2810
    %v2828 = vsel %vm2826, %v2816, 2102212464
    %v2829 = vsel %vm2825, %v2813, %v2828
    %v2830 = vsel %vm2824, %v2827, %v2829
    %v2831 = vsel %vm2823, %v2810, %v2813
    %v2832 = vsel %vm2826, %v2819, 920167782
    %v2833 = vsel %vm2825, %v2816, %v2832
    %v2834 = vsel %vm2824, %v2831, %v2833
    %v2835 = vsel %vm2823, %v2813, %v2816
    %v2836 = vsel %vm2826, %v2822, 1326507024
    %v2837 = vsel %vm2825, %v2819, %v2836
    %v2838 = vsel %vm2824, %v2835, %v2837
    %v2839 = vshll.u32 %v2799, 8
    %v2840 = vmul.u32.u64.compose %v2839, %v2838
    %v2841 = vextract.low.u32 %v2840
    %v2842 = vextract.high.u32 %v2840
    %v2843 = vmul.u32.u64.compose %v2839, %v2834
    %v2844 = vextract.low.u32 %v2843
    %v2845 = vextract.high.u32 %v2843
    %v2846 = vmul.u32 %v2839, %v2830
    %v2847 = vadd.s32 %v2842, %v2844
    %vm2848 = vc.u32 %v2842, %v2844
    %v2849 = vadd.s32 %v2845, 1
    %v2850 = vsel %vm2848, %v2849, %v2845
    %v2851 = vadd.s32 %v2846, %v2850
    %v2852 = vadd.s32 %v2851, 536870912
    %v2853 = vshrl.u32 %v2852, 30
    %v2854 = vshll.u32 %v2853, 30
    %v2855 = vsub.s32 %v2851, %v2854
    %vm2856 = vcmp.lt.s32.totalorder %v2855, 0
    %v2857 = vsub.s32 0, %v2855
    %v2858 = vsel %vm2856, %v2857, %v2855
    %v2859 = vclz %v2858
    %v2860 = vsub.s32 %v2859, 2
    %vm2861 = vcmp.gt.s32.totalorder 0, %v2860
    %v2862 = vsel %vm2861, 0, %v2860
    %v2863 = vsub.s32 32, %v2862
    %v2864 = vshll.u32 %v2855, %v2862
    %v2865 = vshrl.u32 %v2847, %v2863
    %v2866 = vor.u32 %v2864, %v2865
    %v2867 = vsub.s32 4294967266, %v2862
    %v2868 = vadd.s32 %v2867, 127
    %v2869 = vshll.u32 %v2868, 23
    %v2870 = vor.u32 4788187, %v2869
    %v2871 = vand.u32 2147483647, %v2870
    %v2873 = vcvt.s32.f32 %v2866
    %v2874 = vmul.f32 %v2873, %v2871
    %v2875 = vxor.u32 %v2874, 2147483648
    %v2876 = vsel %vm2793, %v2875, %v2874
    %v2877 = vsub.s32 4, %v2853
    %v2878 = vsel %vm2793, %v2877, %v2853
    %v2879 = vsel %vm2792, %v1433, %v2876
    %v2880 = vsel %vm2792, 0, %v2878
    %v2881 = vcosq.f32.pop %v2879
    %v2882 = vsinq.f32.pop %v2879
    %vm2883 = vweird.f32 %v1433
    %v2884 = vand.u32 %v2880, 3
    %vm2885 = vcmp.lt.s32.totalorder %v2884, 2
    %vm2886 = vcmp.eq.s32.totalorder %v2884, 0
    %v2887 = vxor.u32 %v2882, 2147483648
    %v2888 = vsel %vm2886, %v2881, %v2887
    %vm2889 = vcmp.eq.s32.totalorder %v2884, 2
    %v2890 = vxor.u32 %v2881, 2147483648
    %v2891 = vsel %vm2889, %v2890, %v2882
    %v2892 = vsel %vm2885, %v2888, %v2891
    %v2893 = vsel %vm2883, nan, %v2892
    %v2894 = vand.u32 2147483647, %v1434
    %vm2895 = vcmp.le.f32.partialorder %v2894, 0.7853982
    %vm2896 = vcmp.lt.s32.totalorder %v1434, 0
    %v2897 = vand.u32 %v1434, 2139095040
    %v2898 = vshrl.u32 %v2897, 23
    %v2899 = vsub.s32 %v2898, 127
    %v2900 = vand.u32 2147483647, %v1434
    %v2901 = vand.u32 %v2900, 8388607
    %v2902 = vor.u32 %v2901, 8388608
    %v2903 = vsub.s32 0, %v2902
    %v2904 = vadd.s32 %v2899, 1
    %vm2905 = vcmp.gt.s32.totalorder %v2904, 0
    %v2906 = vsel %vm2905, %v2904, 0
    %v2907 = vshrl.u32 %v2906, 5
    %v2908 = vand.u32 %v2906, 31
    %v2909 = vsub.s32 32, %v2908
    %v2910 = vshrl.u32 683565275, %v2909
    %v2911 = vshll.u32 683565275, %v2908
    %v2912 = vshrl.u32 2475754826, %v2909
    %v2913 = vor.u32 %v2911, %v2912
    %v2914 = vshll.u32 2475754826, %v2908
    %v2915 = vshrl.u32 2131351028, %v2909
    %v2916 = vor.u32 %v2914, %v2915
    %v2917 = vshll.u32 2131351028, %v2908
    %v2918 = vshrl.u32 2102212464, %v2909
    %v2919 = vor.u32 %v2917, %v2918
    %v2920 = vshll.u32 2102212464, %v2908
    %v2921 = vshrl.u32 920167782, %v2909
    %v2922 = vor.u32 %v2920, %v2921
    %v2923 = vshll.u32 920167782, %v2908
    %v2924 = vshrl.u32 1326507024, %v2909
    %v2925 = vor.u32 %v2923, %v2924
    %vm2926 = vcmp.lt.s32.totalorder %v2907, 1
    %vm2927 = vcmp.lt.s32.totalorder %v2907, 2
    %vm2928 = vcmp.lt.s32.totalorder %v2907, 3
    %vm2929 = vcmp.lt.s32.totalorder %v2907, 4
    %v2930 = vsel %vm2926, %v2910, %v2913
    %v2931 = vsel %vm2929, %v2919, 2102212464
    %v2932 = vsel %vm2928, %v2916, %v2931
    %v2933 = vsel %vm2927, %v2930, %v2932
    %v2934 = vsel %vm2926, %v2913, %v2916
    %v2935 = vsel %vm2929, %v2922, 920167782
    %v2936 = vsel %vm2928, %v2919, %v2935
    %v2937 = vsel %vm2927, %v2934, %v2936
    %v2938 = vsel %vm2926, %v2916, %v2919
    %v2939 = vsel %vm2929, %v2925, 1326507024
    %v2940 = vsel %vm2928, %v2922, %v2939
    %v2941 = vsel %vm2927, %v2938, %v2940
    %v2942 = vshll.u32 %v2902, 8
    %v2943 = vmul.u32.u64.compose %v2942, %v2941
    %v2944 = vextract.low.u32 %v2943
    %v2945 = vextract.high.u32 %v2943
    %v2946 = vmul.u32.u64.compose %v2942, %v2937
    %v2947 = vextract.low.u32 %v2946
    %v2948 = vextract.high.u32 %v2946
    %v2949 = vmul.u32 %v2942, %v2933
    %v2950 = vadd.s32 %v2945, %v2947
    %vm2951 = vc.u32 %v2945, %v2947
    %v2952 = vadd.s32 %v2948, 1
    %v2953 = vsel %vm2951, %v2952, %v2948
    %v2954 = vadd.s32 %v2949, %v2953
    %v2955 = vadd.s32 %v2954, 536870912
    %v2956 = vshrl.u32 %v2955, 30
    %v2957 = vshll.u32 %v2956, 30
    %v2958 = vsub.s32 %v2954, %v2957
    %vm2959 = vcmp.lt.s32.totalorder %v2958, 0
    %v2960 = vsub.s32 0, %v2958
    %v2961 = vsel %vm2959, %v2960, %v2958
    %v2962 = vclz %v2961
    %v2963 = vsub.s32 %v2962, 2
    %vm2964 = vcmp.gt.s32.totalorder 0, %v2963
    %v2965 = vsel %vm2964, 0, %v2963
    %v2966 = vsub.s32 32, %v2965
    %v2967 = vshll.u32 %v2958, %v2965
    %v2968 = vshrl.u32 %v2950, %v2966
    %v2969 = vor.u32 %v2967, %v2968
    %v2970 = vsub.s32 4294967266, %v2965
    %v2971 = vadd.s32 %v2970, 127
    %v2972 = vshll.u32 %v2971, 23
    %v2973 = vor.u32 4788187, %v2972
    %v2974 = vand.u32 2147483647, %v2973
    %v2976 = vcvt.s32.f32 %v2969
    %v2977 = vmul.f32 %v2976, %v2974
    %v2978 = vxor.u32 %v2977, 2147483648
    %v2979 = vsel %vm2896, %v2978, %v2977
    %v2980 = vsub.s32 4, %v2956
    %v2981 = vsel %vm2896, %v2980, %v2956
    %v2982 = vsel %vm2895, %v1434, %v2979
    %v2983 = vsel %vm2895, 0, %v2981
    %v2984 = vcosq.f32.pop %v2982
    %v2985 = vsinq.f32.pop %v2982
    %vm2986 = vweird.f32 %v1434
    %v2987 = vand.u32 %v2983, 3
    %vm2988 = vcmp.lt.s32.totalorder %v2987, 2
    %vm2989 = vcmp.eq.s32.totalorder %v2987, 0
    %v2990 = vxor.u32 %v2985, 2147483648
    %v2991 = vsel %vm2989, %v2984, %v2990
    %vm2992 = vcmp.eq.s32.totalorder %v2987, 2
    %v2993 = vxor.u32 %v2984, 2147483648
    %v2994 = vsel %vm2992, %v2993, %v2985
    %v2995 = vsel %vm2988, %v2991, %v2994
    %v2996 = vsel %vm2986, nan, %v2995
    %v2997 = vand.u32 2147483647, %v1435
    %vm2998 = vcmp.le.f32.partialorder %v2997, 0.7853982
    %vm2999 = vcmp.lt.s32.totalorder %v1435, 0
    %v3000 = vand.u32 %v1435, 2139095040
    %v3001 = vshrl.u32 %v3000, 23
    %v3002 = vsub.s32 %v3001, 127
    %v3003 = vand.u32 2147483647, %v1435
    %v3004 = vand.u32 %v3003, 8388607
    %v3005 = vor.u32 %v3004, 8388608
    %v3006 = vsub.s32 0, %v3005
    %v3007 = vadd.s32 %v3002, 1
    %vm3008 = vcmp.gt.s32.totalorder %v3007, 0
    %v3009 = vsel %vm3008, %v3007, 0
    %v3010 = vshrl.u32 %v3009, 5
    %v3011 = vand.u32 %v3009, 31
    %v3012 = vsub.s32 32, %v3011
    %v3013 = vshrl.u32 683565275, %v3012
    %v3014 = vshll.u32 683565275, %v3011
    %v3015 = vshrl.u32 2475754826, %v3012
    %v3016 = vor.u32 %v3014, %v3015
    %v3017 = vshll.u32 2475754826, %v3011
    %v3018 = vshrl.u32 2131351028, %v3012
    %v3019 = vor.u32 %v3017, %v3018
    %v3020 = vshll.u32 2131351028, %v3011
    %v3021 = vshrl.u32 2102212464, %v3012
    %v3022 = vor.u32 %v3020, %v3021
    %v3023 = vshll.u32 2102212464, %v3011
    %v3024 = vshrl.u32 920167782, %v3012
    %v3025 = vor.u32 %v3023, %v3024
    %v3026 = vshll.u32 920167782, %v3011
    %v3027 = vshrl.u32 1326507024, %v3012
    %v3028 = vor.u32 %v3026, %v3027
    %vm3029 = vcmp.lt.s32.totalorder %v3010, 1
    %vm3030 = vcmp.lt.s32.totalorder %v3010, 2
    %vm3031 = vcmp.lt.s32.totalorder %v3010, 3
    %vm3032 = vcmp.lt.s32.totalorder %v3010, 4
    %v3033 = vsel %vm3029, %v3013, %v3016
    %v3034 = vsel %vm3032, %v3022, 2102212464
    %v3035 = vsel %vm3031, %v3019, %v3034
    %v3036 = vsel %vm3030, %v3033, %v3035
    %v3037 = vsel %vm3029, %v3016, %v3019
    %v3038 = vsel %vm3032, %v3025, 920167782
    %v3039 = vsel %vm3031, %v3022, %v3038
    %v3040 = vsel %vm3030, %v3037, %v3039
    %v3041 = vsel %vm3029, %v3019, %v3022
    %v3042 = vsel %vm3032, %v3028, 1326507024
    %v3043 = vsel %vm3031, %v3025, %v3042
    %v3044 = vsel %vm3030, %v3041, %v3043
    %v3045 = vshll.u32 %v3005, 8
    %v3046 = vmul.u32.u64.compose %v3045, %v3044
    %v3047 = vextract.low.u32 %v3046
    %v3048 = vextract.high.u32 %v3046
    %v3049 = vmul.u32.u64.compose %v3045, %v3040
    %v3050 = vextract.low.u32 %v3049
    %v3051 = vextract.high.u32 %v3049
    %v3052 = vmul.u32 %v3045, %v3036
    %v3053 = vadd.s32 %v3048, %v3050
    %vm3054 = vc.u32 %v3048, %v3050
    %v3055 = vadd.s32 %v3051, 1
    %v3056 = vsel %vm3054, %v3055, %v3051
    %v3057 = vadd.s32 %v3052, %v3056
    %v3058 = vadd.s32 %v3057, 536870912
    %v3059 = vshrl.u32 %v3058, 30
    %v3060 = vshll.u32 %v3059, 30
    %v3061 = vsub.s32 %v3057, %v3060
    %vm3062 = vcmp.lt.s32.totalorder %v3061, 0
    %v3063 = vsub.s32 0, %v3061
    %v3064 = vsel %vm3062, %v3063, %v3061
    %v3065 = vclz %v3064
    %v3066 = vsub.s32 %v3065, 2
    %vm3067 = vcmp.gt.s32.totalorder 0, %v3066
    %v3068 = vsel %vm3067, 0, %v3066
    %v3069 = vsub.s32 32, %v3068
    %v3070 = vshll.u32 %v3061, %v3068
    %v3071 = vshrl.u32 %v3053, %v3069
    %v3072 = vor.u32 %v3070, %v3071
    %v3073 = vsub.s32 4294967266, %v3068
    %v3074 = vadd.s32 %v3073, 127
    %v3075 = vshll.u32 %v3074, 23
    %v3076 = vor.u32 4788187, %v3075
    %v3077 = vand.u32 2147483647, %v3076
    %v3079 = vcvt.s32.f32 %v3072
    %v3080 = vmul.f32 %v3079, %v3077
    %v3081 = vxor.u32 %v3080, 2147483648
    %v3082 = vsel %vm2999, %v3081, %v3080
    %v3083 = vsub.s32 4, %v3059
    %v3084 = vsel %vm2999, %v3083, %v3059
    %v3085 = vsel %vm2998, %v1435, %v3082
    %v3086 = vsel %vm2998, 0, %v3084
    %v3087 = vcosq.f32.pop %v3085
    %v3088 = vsinq.f32.pop %v3085
    %vm3089 = vweird.f32 %v1435
    %v3090 = vand.u32 %v3086, 3
    %vm3091 = vcmp.lt.s32.totalorder %v3090, 2
    %vm3092 = vcmp.eq.s32.totalorder %v3090, 0
    %v3093 = vxor.u32 %v3088, 2147483648
    %v3094 = vsel %vm3092, %v3087, %v3093
    %vm3095 = vcmp.eq.s32.totalorder %v3090, 2
    %v3096 = vxor.u32 %v3087, 2147483648
    %v3097 = vsel %vm3095, %v3096, %v3088
    %v3098 = vsel %vm3091, %v3094, %v3097
    %v3099 = vsel %vm3089, nan, %v3098
    %v3100 = vand.u32 2147483647, %v1436
    %vm3101 = vcmp.le.f32.partialorder %v3100, 0.7853982
    %vm3102 = vcmp.lt.s32.totalorder %v1436, 0
    %v3103 = vand.u32 %v1436, 2139095040
    %v3104 = vshrl.u32 %v3103, 23
    %v3105 = vsub.s32 %v3104, 127
    %v3106 = vand.u32 2147483647, %v1436
    %v3107 = vand.u32 %v3106, 8388607
    %v3108 = vor.u32 %v3107, 8388608
    %v3109 = vsub.s32 0, %v3108
    %v3110 = vadd.s32 %v3105, 1
    %vm3111 = vcmp.gt.s32.totalorder %v3110, 0
    %v3112 = vsel %vm3111, %v3110, 0
    %v3113 = vshrl.u32 %v3112, 5
    %v3114 = vand.u32 %v3112, 31
    %v3115 = vsub.s32 32, %v3114
    %v3116 = vshrl.u32 683565275, %v3115
    %v3117 = vshll.u32 683565275, %v3114
    %v3118 = vshrl.u32 2475754826, %v3115
    %v3119 = vor.u32 %v3117, %v3118
    %v3120 = vshll.u32 2475754826, %v3114
    %v3121 = vshrl.u32 2131351028, %v3115
    %v3122 = vor.u32 %v3120, %v3121
    %v3123 = vshll.u32 2131351028, %v3114
    %v3124 = vshrl.u32 2102212464, %v3115
    %v3125 = vor.u32 %v3123, %v3124
    %v3126 = vshll.u32 2102212464, %v3114
    %v3127 = vshrl.u32 920167782, %v3115
    %v3128 = vor.u32 %v3126, %v3127
    %v3129 = vshll.u32 920167782, %v3114
    %v3130 = vshrl.u32 1326507024, %v3115
    %v3131 = vor.u32 %v3129, %v3130
    %vm3132 = vcmp.lt.s32.totalorder %v3113, 1
    %vm3133 = vcmp.lt.s32.totalorder %v3113, 2
    %vm3134 = vcmp.lt.s32.totalorder %v3113, 3
    %vm3135 = vcmp.lt.s32.totalorder %v3113, 4
    %v3136 = vsel %vm3132, %v3116, %v3119
    %v3137 = vsel %vm3135, %v3125, 2102212464
    %v3138 = vsel %vm3134, %v3122, %v3137
    %v3139 = vsel %vm3133, %v3136, %v3138
    %v3140 = vsel %vm3132, %v3119, %v3122
    %v3141 = vsel %vm3135, %v3128, 920167782
    %v3142 = vsel %vm3134, %v3125, %v3141
    %v3143 = vsel %vm3133, %v3140, %v3142
    %v3144 = vsel %vm3132, %v3122, %v3125
    %v3145 = vsel %vm3135, %v3131, 1326507024
    %v3146 = vsel %vm3134, %v3128, %v3145
    %v3147 = vsel %vm3133, %v3144, %v3146
    %v3148 = vshll.u32 %v3108, 8
    %v3149 = vmul.u32.u64.compose %v3148, %v3147
    %v3150 = vextract.low.u32 %v3149
    %v3151 = vextract.high.u32 %v3149
    %v3152 = vmul.u32.u64.compose %v3148, %v3143
    %v3153 = vextract.low.u32 %v3152
    %v3154 = vextract.high.u32 %v3152
    %v3155 = vmul.u32 %v3148, %v3139
    %v3156 = vadd.s32 %v3151, %v3153
    %vm3157 = vc.u32 %v3151, %v3153
    %v3158 = vadd.s32 %v3154, 1
    %v3159 = vsel %vm3157, %v3158, %v3154
    %v3160 = vadd.s32 %v3155, %v3159
    %v3161 = vadd.s32 %v3160, 536870912
    %v3162 = vshrl.u32 %v3161, 30
    %v3163 = vshll.u32 %v3162, 30
    %v3164 = vsub.s32 %v3160, %v3163
    %vm3165 = vcmp.lt.s32.totalorder %v3164, 0
    %v3166 = vsub.s32 0, %v3164
    %v3167 = vsel %vm3165, %v3166, %v3164
    %v3168 = vclz %v3167
    %v3169 = vsub.s32 %v3168, 2
    %vm3170 = vcmp.gt.s32.totalorder 0, %v3169
    %v3171 = vsel %vm3170, 0, %v3169
    %v3172 = vsub.s32 32, %v3171
    %v3173 = vshll.u32 %v3164, %v3171
    %v3174 = vshrl.u32 %v3156, %v3172
    %v3175 = vor.u32 %v3173, %v3174
    %v3176 = vsub.s32 4294967266, %v3171
    %v3177 = vadd.s32 %v3176, 127
    %v3178 = vshll.u32 %v3177, 23
    %v3179 = vor.u32 4788187, %v3178
    %v3180 = vand.u32 2147483647, %v3179
    %v3182 = vcvt.s32.f32 %v3175
    %v3183 = vmul.f32 %v3182, %v3180
    %v3184 = vxor.u32 %v3183, 2147483648
    %v3185 = vsel %vm3102, %v3184, %v3183
    %v3186 = vsub.s32 4, %v3162
    %v3187 = vsel %vm3102, %v3186, %v3162
    %v3188 = vsel %vm3101, %v1436, %v3185
    %v3189 = vsel %vm3101, 0, %v3187
    %v3190 = vcosq.f32.pop %v3188
    %v3191 = vsinq.f32.pop %v3188
    %vm3192 = vweird.f32 %v1436
    %v3193 = vand.u32 %v3189, 3
    %vm3194 = vcmp.lt.s32.totalorder %v3193, 2
    %vm3195 = vcmp.eq.s32.totalorder %v3193, 0
    %v3196 = vxor.u32 %v3191, 2147483648
    %v3197 = vsel %vm3195, %v3190, %v3196
    %vm3198 = vcmp.eq.s32.totalorder %v3193, 2
    %v3199 = vxor.u32 %v3190, 2147483648
    %v3200 = vsel %vm3198, %v3199, %v3191
    %v3201 = vsel %vm3194, %v3197, %v3200
    %v3202 = vsel %vm3192, nan, %v3201
    %v3203 = vand.u32 2147483647, %v1437
    %vm3204 = vcmp.le.f32.partialorder %v3203, 0.7853982
    %vm3205 = vcmp.lt.s32.totalorder %v1437, 0
    %v3206 = vand.u32 %v1437, 2139095040
    %v3207 = vshrl.u32 %v3206, 23
    %v3208 = vsub.s32 %v3207, 127
    %v3209 = vand.u32 2147483647, %v1437
    %v3210 = vand.u32 %v3209, 8388607
    %v3211 = vor.u32 %v3210, 8388608
    %v3212 = vsub.s32 0, %v3211
    %v3213 = vadd.s32 %v3208, 1
    %vm3214 = vcmp.gt.s32.totalorder %v3213, 0
    %v3215 = vsel %vm3214, %v3213, 0
    %v3216 = vshrl.u32 %v3215, 5
    %v3217 = vand.u32 %v3215, 31
    %v3218 = vsub.s32 32, %v3217
    %v3219 = vshrl.u32 683565275, %v3218
    %v3220 = vshll.u32 683565275, %v3217
    %v3221 = vshrl.u32 2475754826, %v3218
    %v3222 = vor.u32 %v3220, %v3221
    %v3223 = vshll.u32 2475754826, %v3217
    %v3224 = vshrl.u32 2131351028, %v3218
    %v3225 = vor.u32 %v3223, %v3224
    %v3226 = vshll.u32 2131351028, %v3217
    %v3227 = vshrl.u32 2102212464, %v3218
    %v3228 = vor.u32 %v3226, %v3227
    %v3229 = vshll.u32 2102212464, %v3217
    %v3230 = vshrl.u32 920167782, %v3218
    %v3231 = vor.u32 %v3229, %v3230
    %v3232 = vshll.u32 920167782, %v3217
    %v3233 = vshrl.u32 1326507024, %v3218
    %v3234 = vor.u32 %v3232, %v3233
    %vm3235 = vcmp.lt.s32.totalorder %v3216, 1
    %vm3236 = vcmp.lt.s32.totalorder %v3216, 2
    %vm3237 = vcmp.lt.s32.totalorder %v3216, 3
    %vm3238 = vcmp.lt.s32.totalorder %v3216, 4
    %v3239 = vsel %vm3235, %v3219, %v3222
    %v3240 = vsel %vm3238, %v3228, 2102212464
    %v3241 = vsel %vm3237, %v3225, %v3240
    %v3242 = vsel %vm3236, %v3239, %v3241
    %v3243 = vsel %vm3235, %v3222, %v3225
    %v3244 = vsel %vm3238, %v3231, 920167782
    %v3245 = vsel %vm3237, %v3228, %v3244
    %v3246 = vsel %vm3236, %v3243, %v3245
    %v3247 = vsel %vm3235, %v3225, %v3228
    %v3248 = vsel %vm3238, %v3234, 1326507024
    %v3249 = vsel %vm3237, %v3231, %v3248
    %v3250 = vsel %vm3236, %v3247, %v3249
    %v3251 = vshll.u32 %v3211, 8
    %v3252 = vmul.u32.u64.compose %v3251, %v3250
    %v3253 = vextract.low.u32 %v3252
    %v3254 = vextract.high.u32 %v3252
    %v3255 = vmul.u32.u64.compose %v3251, %v3246
    %v3256 = vextract.low.u32 %v3255
    %v3257 = vextract.high.u32 %v3255
    %v3258 = vmul.u32 %v3251, %v3242
    %v3259 = vadd.s32 %v3254, %v3256
    %vm3260 = vc.u32 %v3254, %v3256
    %v3261 = vadd.s32 %v3257, 1
    %v3262 = vsel %vm3260, %v3261, %v3257
    %v3263 = vadd.s32 %v3258, %v3262
    %v3264 = vadd.s32 %v3263, 536870912
    %v3265 = vshrl.u32 %v3264, 30
    %v3266 = vshll.u32 %v3265, 30
    %v3267 = vsub.s32 %v3263, %v3266
    %vm3268 = vcmp.lt.s32.totalorder %v3267, 0
    %v3269 = vsub.s32 0, %v3267
    %v3270 = vsel %vm3268, %v3269, %v3267
    %v3271 = vclz %v3270
    %v3272 = vsub.s32 %v3271, 2
    %vm3273 = vcmp.gt.s32.totalorder 0, %v3272
    %v3274 = vsel %vm3273, 0, %v3272
    %v3275 = vsub.s32 32, %v3274
    %v3276 = vshll.u32 %v3267, %v3274
    %v3277 = vshrl.u32 %v3259, %v3275
    %v3278 = vor.u32 %v3276, %v3277
    %v3279 = vsub.s32 4294967266, %v3274
    %v3280 = vadd.s32 %v3279, 127
    %v3281 = vshll.u32 %v3280, 23
    %v3282 = vor.u32 4788187, %v3281
    %v3283 = vand.u32 2147483647, %v3282
    %v3285 = vcvt.s32.f32 %v3278
    %v3286 = vmul.f32 %v3285, %v3283
    %v3287 = vxor.u32 %v3286, 2147483648
    %v3288 = vsel %vm3205, %v3287, %v3286
    %v3289 = vsub.s32 4, %v3265
    %v3290 = vsel %vm3205, %v3289, %v3265
    %v3291 = vsel %vm3204, %v1437, %v3288
    %v3292 = vsel %vm3204, 0, %v3290
    %v3293 = vcosq.f32.pop %v3291
    %v3294 = vsinq.f32.pop %v3291
    %vm3295 = vweird.f32 %v1437
    %v3296 = vand.u32 %v3292, 3
    %vm3297 = vcmp.lt.s32.totalorder %v3296, 2
    %vm3298 = vcmp.eq.s32.totalorder %v3296, 0
    %v3299 = vxor.u32 %v3294, 2147483648
    %v3300 = vsel %vm3298, %v3293, %v3299
    %vm3301 = vcmp.eq.s32.totalorder %v3296, 2
    %v3302 = vxor.u32 %v3293, 2147483648
    %v3303 = vsel %vm3301, %v3302, %v3294
    %v3304 = vsel %vm3297, %v3300, %v3303
    %v3305 = vsel %vm3295, nan, %v3304
    %v3306 = vand.u32 2147483647, %v1438
    %vm3307 = vcmp.le.f32.partialorder %v3306, 0.7853982
    %vm3308 = vcmp.lt.s32.totalorder %v1438, 0
    %v3309 = vand.u32 %v1438, 2139095040
    %v3310 = vshrl.u32 %v3309, 23
    %v3311 = vsub.s32 %v3310, 127
    %v3312 = vand.u32 2147483647, %v1438
    %v3313 = vand.u32 %v3312, 8388607
    %v3314 = vor.u32 %v3313, 8388608
    %v3315 = vsub.s32 0, %v3314
    %v3316 = vadd.s32 %v3311, 1
    %vm3317 = vcmp.gt.s32.totalorder %v3316, 0
    %v3318 = vsel %vm3317, %v3316, 0
    %v3319 = vshrl.u32 %v3318, 5
    %v3320 = vand.u32 %v3318, 31
    %v3321 = vsub.s32 32, %v3320
    %v3322 = vshrl.u32 683565275, %v3321
    %v3323 = vshll.u32 683565275, %v3320
    %v3324 = vshrl.u32 2475754826, %v3321
    %v3325 = vor.u32 %v3323, %v3324
    %v3326 = vshll.u32 2475754826, %v3320
    %v3327 = vshrl.u32 2131351028, %v3321
    %v3328 = vor.u32 %v3326, %v3327
    %v3329 = vshll.u32 2131351028, %v3320
    %v3330 = vshrl.u32 2102212464, %v3321
    %v3331 = vor.u32 %v3329, %v3330
    %v3332 = vshll.u32 2102212464, %v3320
    %v3333 = vshrl.u32 920167782, %v3321
    %v3334 = vor.u32 %v3332, %v3333
    %v3335 = vshll.u32 920167782, %v3320
    %v3336 = vshrl.u32 1326507024, %v3321
    %v3337 = vor.u32 %v3335, %v3336
    %vm3338 = vcmp.lt.s32.totalorder %v3319, 1
    %vm3339 = vcmp.lt.s32.totalorder %v3319, 2
    %vm3340 = vcmp.lt.s32.totalorder %v3319, 3
    %vm3341 = vcmp.lt.s32.totalorder %v3319, 4
    %v3342 = vsel %vm3338, %v3322, %v3325
    %v3343 = vsel %vm3341, %v3331, 2102212464
    %v3344 = vsel %vm3340, %v3328, %v3343
    %v3345 = vsel %vm3339, %v3342, %v3344
    %v3346 = vsel %vm3338, %v3325, %v3328
    %v3347 = vsel %vm3341, %v3334, 920167782
    %v3348 = vsel %vm3340, %v3331, %v3347
    %v3349 = vsel %vm3339, %v3346, %v3348
    %v3350 = vsel %vm3338, %v3328, %v3331
    %v3351 = vsel %vm3341, %v3337, 1326507024
    %v3352 = vsel %vm3340, %v3334, %v3351
    %v3353 = vsel %vm3339, %v3350, %v3352
    %v3354 = vshll.u32 %v3314, 8
    %v3355 = vmul.u32.u64.compose %v3354, %v3353
    %v3356 = vextract.low.u32 %v3355
    %v3357 = vextract.high.u32 %v3355
    %v3358 = vmul.u32.u64.compose %v3354, %v3349
    %v3359 = vextract.low.u32 %v3358
    %v3360 = vextract.high.u32 %v3358
    %v3361 = vmul.u32 %v3354, %v3345
    %v3362 = vadd.s32 %v3357, %v3359
    %vm3363 = vc.u32 %v3357, %v3359
    %v3364 = vadd.s32 %v3360, 1
    %v3365 = vsel %vm3363, %v3364, %v3360
    %v3366 = vadd.s32 %v3361, %v3365
    %v3367 = vadd.s32 %v3366, 536870912
    %v3368 = vshrl.u32 %v3367, 30
    %v3369 = vshll.u32 %v3368, 30
    %v3370 = vsub.s32 %v3366, %v3369
    %vm3371 = vcmp.lt.s32.totalorder %v3370, 0
    %v3372 = vsub.s32 0, %v3370
    %v3373 = vsel %vm3371, %v3372, %v3370
    %v3374 = vclz %v3373
    %v3375 = vsub.s32 %v3374, 2
    %vm3376 = vcmp.gt.s32.totalorder 0, %v3375
    %v3377 = vsel %vm3376, 0, %v3375
    %v3378 = vsub.s32 32, %v3377
    %v3379 = vshll.u32 %v3370, %v3377
    %v3380 = vshrl.u32 %v3362, %v3378
    %v3381 = vor.u32 %v3379, %v3380
    %v3382 = vsub.s32 4294967266, %v3377
    %v3383 = vadd.s32 %v3382, 127
    %v3384 = vshll.u32 %v3383, 23
    %v3385 = vor.u32 4788187, %v3384
    %v3386 = vand.u32 2147483647, %v3385
    %v3388 = vcvt.s32.f32 %v3381
    %v3389 = vmul.f32 %v3388, %v3386
    %v3390 = vxor.u32 %v3389, 2147483648
    %v3391 = vsel %vm3308, %v3390, %v3389
    %v3392 = vsub.s32 4, %v3368
    %v3393 = vsel %vm3308, %v3392, %v3368
    %v3394 = vsel %vm3307, %v1438, %v3391
    %v3395 = vsel %vm3307, 0, %v3393
    %v3396 = vcosq.f32.pop %v3394
    %v3397 = vsinq.f32.pop %v3394
    %vm3398 = vweird.f32 %v1438
    %v3399 = vand.u32 %v3395, 3
    %vm3400 = vcmp.lt.s32.totalorder %v3399, 2
    %vm3401 = vcmp.eq.s32.totalorder %v3399, 0
    %v3402 = vxor.u32 %v3397, 2147483648
    %v3403 = vsel %vm3401, %v3396, %v3402
    %vm3404 = vcmp.eq.s32.totalorder %v3399, 2
    %v3405 = vxor.u32 %v3396, 2147483648
    %v3406 = vsel %vm3404, %v3405, %v3397
    %v3407 = vsel %vm3400, %v3403, %v3406
    %v3408 = vsel %vm3398, nan, %v3407
    %v3409 = vand.u32 2147483647, %v1439
    %vm3410 = vcmp.le.f32.partialorder %v3409, 0.7853982
    %vm3411 = vcmp.lt.s32.totalorder %v1439, 0
    %v3412 = vand.u32 %v1439, 2139095040
    %v3413 = vshrl.u32 %v3412, 23
    %v3414 = vsub.s32 %v3413, 127
    %v3415 = vand.u32 2147483647, %v1439
    %v3416 = vand.u32 %v3415, 8388607
    %v3417 = vor.u32 %v3416, 8388608
    %v3418 = vsub.s32 0, %v3417
    %v3419 = vadd.s32 %v3414, 1
    %vm3420 = vcmp.gt.s32.totalorder %v3419, 0
    %v3421 = vsel %vm3420, %v3419, 0
    %v3422 = vshrl.u32 %v3421, 5
    %v3423 = vand.u32 %v3421, 31
    %v3424 = vsub.s32 32, %v3423
    %v3425 = vshrl.u32 683565275, %v3424
    %v3426 = vshll.u32 683565275, %v3423
    %v3427 = vshrl.u32 2475754826, %v3424
    %v3428 = vor.u32 %v3426, %v3427
    %v3429 = vshll.u32 2475754826, %v3423
    %v3430 = vshrl.u32 2131351028, %v3424
    %v3431 = vor.u32 %v3429, %v3430
    %v3432 = vshll.u32 2131351028, %v3423
    %v3433 = vshrl.u32 2102212464, %v3424
    %v3434 = vor.u32 %v3432, %v3433
    %v3435 = vshll.u32 2102212464, %v3423
    %v3436 = vshrl.u32 920167782, %v3424
    %v3437 = vor.u32 %v3435, %v3436
    %v3438 = vshll.u32 920167782, %v3423
    %v3439 = vshrl.u32 1326507024, %v3424
    %v3440 = vor.u32 %v3438, %v3439
    %vm3441 = vcmp.lt.s32.totalorder %v3422, 1
    %vm3442 = vcmp.lt.s32.totalorder %v3422, 2
    %vm3443 = vcmp.lt.s32.totalorder %v3422, 3
    %vm3444 = vcmp.lt.s32.totalorder %v3422, 4
    %v3445 = vsel %vm3441, %v3425, %v3428
    %v3446 = vsel %vm3444, %v3434, 2102212464
    %v3447 = vsel %vm3443, %v3431, %v3446
    %v3448 = vsel %vm3442, %v3445, %v3447
    %v3449 = vsel %vm3441, %v3428, %v3431
    %v3450 = vsel %vm3444, %v3437, 920167782
    %v3451 = vsel %vm3443, %v3434, %v3450
    %v3452 = vsel %vm3442, %v3449, %v3451
    %v3453 = vsel %vm3441, %v3431, %v3434
    %v3454 = vsel %vm3444, %v3440, 1326507024
    %v3455 = vsel %vm3443, %v3437, %v3454
    %v3456 = vsel %vm3442, %v3453, %v3455
    %v3457 = vshll.u32 %v3417, 8
    %v3458 = vmul.u32.u64.compose %v3457, %v3456
    %v3459 = vextract.low.u32 %v3458
    %v3460 = vextract.high.u32 %v3458
    %v3461 = vmul.u32.u64.compose %v3457, %v3452
    %v3462 = vextract.low.u32 %v3461
    %v3463 = vextract.high.u32 %v3461
    %v3464 = vmul.u32 %v3457, %v3448
    %v3465 = vadd.s32 %v3460, %v3462
    %vm3466 = vc.u32 %v3460, %v3462
    %v3467 = vadd.s32 %v3463, 1
    %v3468 = vsel %vm3466, %v3467, %v3463
    %v3469 = vadd.s32 %v3464, %v3468
    %v3470 = vadd.s32 %v3469, 536870912
    %v3471 = vshrl.u32 %v3470, 30
    %v3472 = vshll.u32 %v3471, 30
    %v3473 = vsub.s32 %v3469, %v3472
    %vm3474 = vcmp.lt.s32.totalorder %v3473, 0
    %v3475 = vsub.s32 0, %v3473
    %v3476 = vsel %vm3474, %v3475, %v3473
    %v3477 = vclz %v3476
    %v3478 = vsub.s32 %v3477, 2
    %vm3479 = vcmp.gt.s32.totalorder 0, %v3478
    %v3480 = vsel %vm3479, 0, %v3478
    %v3481 = vsub.s32 32, %v3480
    %v3482 = vshll.u32 %v3473, %v3480
    %v3483 = vshrl.u32 %v3465, %v3481
    %v3484 = vor.u32 %v3482, %v3483
    %v3485 = vsub.s32 4294967266, %v3480
    %v3486 = vadd.s32 %v3485, 127
    %v3487 = vshll.u32 %v3486, 23
    %v3488 = vor.u32 4788187, %v3487
    %v3489 = vand.u32 2147483647, %v3488
    %v3491 = vcvt.s32.f32 %v3484
    %v3492 = vmul.f32 %v3491, %v3489
    %v3493 = vxor.u32 %v3492, 2147483648
    %v3494 = vsel %vm3411, %v3493, %v3492
    %v3495 = vsub.s32 4, %v3471
    %v3496 = vsel %vm3411, %v3495, %v3471
    %v3497 = vsel %vm3410, %v1439, %v3494
    %v3498 = vsel %vm3410, 0, %v3496
    %v3499 = vcosq.f32.pop %v3497
    %v3500 = vsinq.f32.pop %v3497
    %vm3501 = vweird.f32 %v1439
    %v3502 = vand.u32 %v3498, 3
    %vm3503 = vcmp.lt.s32.totalorder %v3502, 2
    %vm3504 = vcmp.eq.s32.totalorder %v3502, 0
    %v3505 = vxor.u32 %v3500, 2147483648
    %v3506 = vsel %vm3504, %v3499, %v3505
    %vm3507 = vcmp.eq.s32.totalorder %v3502, 2
    %v3508 = vxor.u32 %v3499, 2147483648
    %v3509 = vsel %vm3507, %v3508, %v3500
    %v3510 = vsel %vm3503, %v3506, %v3509
    %v3511 = vsel %vm3501, nan, %v3510
    %v3512 = vand.u32 2147483647, %v1440
    %vm3513 = vcmp.le.f32.partialorder %v3512, 0.7853982
    %vm3514 = vcmp.lt.s32.totalorder %v1440, 0
    %v3515 = vand.u32 %v1440, 2139095040
    %v3516 = vshrl.u32 %v3515, 23
    %v3517 = vsub.s32 %v3516, 127
    %v3518 = vand.u32 2147483647, %v1440
    %v3519 = vand.u32 %v3518, 8388607
    %v3520 = vor.u32 %v3519, 8388608
    %v3521 = vsub.s32 0, %v3520
    %v3522 = vadd.s32 %v3517, 1
    %vm3523 = vcmp.gt.s32.totalorder %v3522, 0
    %v3524 = vsel %vm3523, %v3522, 0
    %v3525 = vshrl.u32 %v3524, 5
    %v3526 = vand.u32 %v3524, 31
    %v3527 = vsub.s32 32, %v3526
    %v3528 = vshrl.u32 683565275, %v3527
    %v3529 = vshll.u32 683565275, %v3526
    %v3530 = vshrl.u32 2475754826, %v3527
    %v3531 = vor.u32 %v3529, %v3530
    %v3532 = vshll.u32 2475754826, %v3526
    %v3533 = vshrl.u32 2131351028, %v3527
    %v3534 = vor.u32 %v3532, %v3533
    %v3535 = vshll.u32 2131351028, %v3526
    %v3536 = vshrl.u32 2102212464, %v3527
    %v3537 = vor.u32 %v3535, %v3536
    %v3538 = vshll.u32 2102212464, %v3526
    %v3539 = vshrl.u32 920167782, %v3527
    %v3540 = vor.u32 %v3538, %v3539
    %v3541 = vshll.u32 920167782, %v3526
    %v3542 = vshrl.u32 1326507024, %v3527
    %v3543 = vor.u32 %v3541, %v3542
    %vm3544 = vcmp.lt.s32.totalorder %v3525, 1
    %vm3545 = vcmp.lt.s32.totalorder %v3525, 2
    %vm3546 = vcmp.lt.s32.totalorder %v3525, 3
    %vm3547 = vcmp.lt.s32.totalorder %v3525, 4
    %v3548 = vsel %vm3544, %v3528, %v3531
    %v3549 = vsel %vm3547, %v3537, 2102212464
    %v3550 = vsel %vm3546, %v3534, %v3549
    %v3551 = vsel %vm3545, %v3548, %v3550
    %v3552 = vsel %vm3544, %v3531, %v3534
    %v3553 = vsel %vm3547, %v3540, 920167782
    %v3554 = vsel %vm3546, %v3537, %v3553
    %v3555 = vsel %vm3545, %v3552, %v3554
    %v3556 = vsel %vm3544, %v3534, %v3537
    %v3557 = vsel %vm3547, %v3543, 1326507024
    %v3558 = vsel %vm3546, %v3540, %v3557
    %v3559 = vsel %vm3545, %v3556, %v3558
    %v3560 = vshll.u32 %v3520, 8
    %v3561 = vmul.u32.u64.compose %v3560, %v3559
    %v3562 = vextract.low.u32 %v3561
    %v3563 = vextract.high.u32 %v3561
    %v3564 = vmul.u32.u64.compose %v3560, %v3555
    %v3565 = vextract.low.u32 %v3564
    %v3566 = vextract.high.u32 %v3564
    %v3567 = vmul.u32 %v3560, %v3551
    %v3568 = vadd.s32 %v3563, %v3565
    %vm3569 = vc.u32 %v3563, %v3565
    %v3570 = vadd.s32 %v3566, 1
    %v3571 = vsel %vm3569, %v3570, %v3566
    %v3572 = vadd.s32 %v3567, %v3571
    %v3573 = vadd.s32 %v3572, 536870912
    %v3574 = vshrl.u32 %v3573, 30
    %v3575 = vshll.u32 %v3574, 30
    %v3576 = vsub.s32 %v3572, %v3575
    %vm3577 = vcmp.lt.s32.totalorder %v3576, 0
    %v3578 = vsub.s32 0, %v3576
    %v3579 = vsel %vm3577, %v3578, %v3576
    %v3580 = vclz %v3579
    %v3581 = vsub.s32 %v3580, 2
    %vm3582 = vcmp.gt.s32.totalorder 0, %v3581
    %v3583 = vsel %vm3582, 0, %v3581
    %v3584 = vsub.s32 32, %v3583
    %v3585 = vshll.u32 %v3576, %v3583
    %v3586 = vshrl.u32 %v3568, %v3584
    %v3587 = vor.u32 %v3585, %v3586
    %v3588 = vsub.s32 4294967266, %v3583
    %v3589 = vadd.s32 %v3588, 127
    %v3590 = vshll.u32 %v3589, 23
    %v3591 = vor.u32 4788187, %v3590
    %v3592 = vand.u32 2147483647, %v3591
    %v3594 = vcvt.s32.f32 %v3587
    %v3595 = vmul.f32 %v3594, %v3592
    %v3596 = vxor.u32 %v3595, 2147483648
    %v3597 = vsel %vm3514, %v3596, %v3595
    %v3598 = vsub.s32 4, %v3574
    %v3599 = vsel %vm3514, %v3598, %v3574
    %v3600 = vsel %vm3513, %v1440, %v3597
    %v3601 = vsel %vm3513, 0, %v3599
    %v3602 = vcosq.f32.pop %v3600
    %v3603 = vsinq.f32.pop %v3600
    %vm3604 = vweird.f32 %v1440
    %v3605 = vand.u32 %v3601, 3
    %vm3606 = vcmp.lt.s32.totalorder %v3605, 2
    %vm3607 = vcmp.eq.s32.totalorder %v3605, 0
    %v3608 = vxor.u32 %v3603, 2147483648
    %v3609 = vsel %vm3607, %v3602, %v3608
    %vm3610 = vcmp.eq.s32.totalorder %v3605, 2
    %v3611 = vxor.u32 %v3602, 2147483648
    %v3612 = vsel %vm3610, %v3611, %v3603
    %v3613 = vsel %vm3606, %v3609, %v3612
    %v3614 = vsel %vm3604, nan, %v3613
    %v3615 = vand.u32 2147483647, %v1441
    %vm3616 = vcmp.le.f32.partialorder %v3615, 0.7853982
    %vm3617 = vcmp.lt.s32.totalorder %v1441, 0
    %v3618 = vand.u32 %v1441, 2139095040
    %v3619 = vshrl.u32 %v3618, 23
    %v3620 = vsub.s32 %v3619, 127
    %v3621 = vand.u32 2147483647, %v1441
    %v3622 = vand.u32 %v3621, 8388607
    %v3623 = vor.u32 %v3622, 8388608
    %v3624 = vsub.s32 0, %v3623
    %v3625 = vadd.s32 %v3620, 1
    %vm3626 = vcmp.gt.s32.totalorder %v3625, 0
    %v3627 = vsel %vm3626, %v3625, 0
    %v3628 = vshrl.u32 %v3627, 5
    %v3629 = vand.u32 %v3627, 31
    %v3630 = vsub.s32 32, %v3629
    %v3631 = vshrl.u32 683565275, %v3630
    %v3632 = vshll.u32 683565275, %v3629
    %v3633 = vshrl.u32 2475754826, %v3630
    %v3634 = vor.u32 %v3632, %v3633
    %v3635 = vshll.u32 2475754826, %v3629
    %v3636 = vshrl.u32 2131351028, %v3630
    %v3637 = vor.u32 %v3635, %v3636
    %v3638 = vshll.u32 2131351028, %v3629
    %v3639 = vshrl.u32 2102212464, %v3630
    %v3640 = vor.u32 %v3638, %v3639
    %v3641 = vshll.u32 2102212464, %v3629
    %v3642 = vshrl.u32 920167782, %v3630
    %v3643 = vor.u32 %v3641, %v3642
    %v3644 = vshll.u32 920167782, %v3629
    %v3645 = vshrl.u32 1326507024, %v3630
    %v3646 = vor.u32 %v3644, %v3645
    %vm3647 = vcmp.lt.s32.totalorder %v3628, 1
    %vm3648 = vcmp.lt.s32.totalorder %v3628, 2
    %vm3649 = vcmp.lt.s32.totalorder %v3628, 3
    %vm3650 = vcmp.lt.s32.totalorder %v3628, 4
    %v3651 = vsel %vm3647, %v3631, %v3634
    %v3652 = vsel %vm3650, %v3640, 2102212464
    %v3653 = vsel %vm3649, %v3637, %v3652
    %v3654 = vsel %vm3648, %v3651, %v3653
    %v3655 = vsel %vm3647, %v3634, %v3637
    %v3656 = vsel %vm3650, %v3643, 920167782
    %v3657 = vsel %vm3649, %v3640, %v3656
    %v3658 = vsel %vm3648, %v3655, %v3657
    %v3659 = vsel %vm3647, %v3637, %v3640
    %v3660 = vsel %vm3650, %v3646, 1326507024
    %v3661 = vsel %vm3649, %v3643, %v3660
    %v3662 = vsel %vm3648, %v3659, %v3661
    %v3663 = vshll.u32 %v3623, 8
    %v3664 = vmul.u32.u64.compose %v3663, %v3662
    %v3665 = vextract.low.u32 %v3664
    %v3666 = vextract.high.u32 %v3664
    %v3667 = vmul.u32.u64.compose %v3663, %v3658
    %v3668 = vextract.low.u32 %v3667
    %v3669 = vextract.high.u32 %v3667
    %v3670 = vmul.u32 %v3663, %v3654
    %v3671 = vadd.s32 %v3666, %v3668
    %vm3672 = vc.u32 %v3666, %v3668
    %v3673 = vadd.s32 %v3669, 1
    %v3674 = vsel %vm3672, %v3673, %v3669
    %v3675 = vadd.s32 %v3670, %v3674
    %v3676 = vadd.s32 %v3675, 536870912
    %v3677 = vshrl.u32 %v3676, 30
    %v3678 = vshll.u32 %v3677, 30
    %v3679 = vsub.s32 %v3675, %v3678
    %vm3680 = vcmp.lt.s32.totalorder %v3679, 0
    %v3681 = vsub.s32 0, %v3679
    %v3682 = vsel %vm3680, %v3681, %v3679
    %v3683 = vclz %v3682
    %v3684 = vsub.s32 %v3683, 2
    %vm3685 = vcmp.gt.s32.totalorder 0, %v3684
    %v3686 = vsel %vm3685, 0, %v3684
    %v3687 = vsub.s32 32, %v3686
    %v3688 = vshll.u32 %v3679, %v3686
    %v3689 = vshrl.u32 %v3671, %v3687
    %v3690 = vor.u32 %v3688, %v3689
    %v3691 = vsub.s32 4294967266, %v3686
    %v3692 = vadd.s32 %v3691, 127
    %v3693 = vshll.u32 %v3692, 23
    %v3694 = vor.u32 4788187, %v3693
    %v3695 = vand.u32 2147483647, %v3694
    %v3697 = vcvt.s32.f32 %v3690
    %v3698 = vmul.f32 %v3697, %v3695
    %v3699 = vxor.u32 %v3698, 2147483648
    %v3700 = vsel %vm3617, %v3699, %v3698
    %v3701 = vsub.s32 4, %v3677
    %v3702 = vsel %vm3617, %v3701, %v3677
    %v3703 = vsel %vm3616, %v1441, %v3700
    %v3704 = vsel %vm3616, 0, %v3702
    %v3705 = vcosq.f32.pop %v3703
    %v3706 = vsinq.f32.pop %v3703
    %vm3707 = vweird.f32 %v1441
    %v3708 = vand.u32 %v3704, 3
    %vm3709 = vcmp.lt.s32.totalorder %v3708, 2
    %vm3710 = vcmp.eq.s32.totalorder %v3708, 0
    %v3711 = vxor.u32 %v3706, 2147483648
    %v3712 = vsel %vm3710, %v3705, %v3711
    %vm3713 = vcmp.eq.s32.totalorder %v3708, 2
    %v3714 = vxor.u32 %v3705, 2147483648
    %v3715 = vsel %vm3713, %v3714, %v3706
    %v3716 = vsel %vm3709, %v3712, %v3715
    %v3717 = vsel %vm3707, nan, %v3716
    %v3718 = vand.u32 2147483647, %v1442
    %vm3719 = vcmp.le.f32.partialorder %v3718, 0.7853982
    %vm3720 = vcmp.lt.s32.totalorder %v1442, 0
    %v3721 = vand.u32 %v1442, 2139095040
    %v3722 = vshrl.u32 %v3721, 23
    %v3723 = vsub.s32 %v3722, 127
    %v3724 = vand.u32 2147483647, %v1442
    %v3725 = vand.u32 %v3724, 8388607
    %v3726 = vor.u32 %v3725, 8388608
    %v3727 = vsub.s32 0, %v3726
    %v3728 = vadd.s32 %v3723, 1
    %vm3729 = vcmp.gt.s32.totalorder %v3728, 0
    %v3730 = vsel %vm3729, %v3728, 0
    %v3731 = vshrl.u32 %v3730, 5
    %v3732 = vand.u32 %v3730, 31
    %v3733 = vsub.s32 32, %v3732
    %v3734 = vshrl.u32 683565275, %v3733
    %v3735 = vshll.u32 683565275, %v3732
    %v3736 = vshrl.u32 2475754826, %v3733
    %v3737 = vor.u32 %v3735, %v3736
    %v3738 = vshll.u32 2475754826, %v3732
    %v3739 = vshrl.u32 2131351028, %v3733
    %v3740 = vor.u32 %v3738, %v3739
    %v3741 = vshll.u32 2131351028, %v3732
    %v3742 = vshrl.u32 2102212464, %v3733
    %v3743 = vor.u32 %v3741, %v3742
    %v3744 = vshll.u32 2102212464, %v3732
    %v3745 = vshrl.u32 920167782, %v3733
    %v3746 = vor.u32 %v3744, %v3745
    %v3747 = vshll.u32 920167782, %v3732
    %v3748 = vshrl.u32 1326507024, %v3733
    %v3749 = vor.u32 %v3747, %v3748
    %vm3750 = vcmp.lt.s32.totalorder %v3731, 1
    %vm3751 = vcmp.lt.s32.totalorder %v3731, 2
    %vm3752 = vcmp.lt.s32.totalorder %v3731, 3
    %vm3753 = vcmp.lt.s32.totalorder %v3731, 4
    %v3754 = vsel %vm3750, %v3734, %v3737
    %v3755 = vsel %vm3753, %v3743, 2102212464
    %v3756 = vsel %vm3752, %v3740, %v3755
    %v3757 = vsel %vm3751, %v3754, %v3756
    %v3758 = vsel %vm3750, %v3737, %v3740
    %v3759 = vsel %vm3753, %v3746, 920167782
    %v3760 = vsel %vm3752, %v3743, %v3759
    %v3761 = vsel %vm3751, %v3758, %v3760
    %v3762 = vsel %vm3750, %v3740, %v3743
    %v3763 = vsel %vm3753, %v3749, 1326507024
    %v3764 = vsel %vm3752, %v3746, %v3763
    %v3765 = vsel %vm3751, %v3762, %v3764
    %v3766 = vshll.u32 %v3726, 8
    %v3767 = vmul.u32.u64.compose %v3766, %v3765
    %v3768 = vextract.low.u32 %v3767
    %v3769 = vextract.high.u32 %v3767
    %v3770 = vmul.u32.u64.compose %v3766, %v3761
    %v3771 = vextract.low.u32 %v3770
    %v3772 = vextract.high.u32 %v3770
    %v3773 = vmul.u32 %v3766, %v3757
    %v3774 = vadd.s32 %v3769, %v3771
    %vm3775 = vc.u32 %v3769, %v3771
    %v3776 = vadd.s32 %v3772, 1
    %v3777 = vsel %vm3775, %v3776, %v3772
    %v3778 = vadd.s32 %v3773, %v3777
    %v3779 = vadd.s32 %v3778, 536870912
    %v3780 = vshrl.u32 %v3779, 30
    %v3781 = vshll.u32 %v3780, 30
    %v3782 = vsub.s32 %v3778, %v3781
    %vm3783 = vcmp.lt.s32.totalorder %v3782, 0
    %v3784 = vsub.s32 0, %v3782
    %v3785 = vsel %vm3783, %v3784, %v3782
    %v3786 = vclz %v3785
    %v3787 = vsub.s32 %v3786, 2
    %vm3788 = vcmp.gt.s32.totalorder 0, %v3787
    %v3789 = vsel %vm3788, 0, %v3787
    %v3790 = vsub.s32 32, %v3789
    %v3791 = vshll.u32 %v3782, %v3789
    %v3792 = vshrl.u32 %v3774, %v3790
    %v3793 = vor.u32 %v3791, %v3792
    %v3794 = vsub.s32 4294967266, %v3789
    %v3795 = vadd.s32 %v3794, 127
    %v3796 = vshll.u32 %v3795, 23
    %v3797 = vor.u32 4788187, %v3796
    %v3798 = vand.u32 2147483647, %v3797
    %v3800 = vcvt.s32.f32 %v3793
    %v3801 = vmul.f32 %v3800, %v3798
    %v3802 = vxor.u32 %v3801, 2147483648
    %v3803 = vsel %vm3720, %v3802, %v3801
    %v3804 = vsub.s32 4, %v3780
    %v3805 = vsel %vm3720, %v3804, %v3780
    %v3806 = vsel %vm3719, %v1442, %v3803
    %v3807 = vsel %vm3719, 0, %v3805
    %v3808 = vcosq.f32.pop %v3806
    %v3809 = vsinq.f32.pop %v3806
    %vm3810 = vweird.f32 %v1442
    %v3811 = vand.u32 %v3807, 3
    %vm3812 = vcmp.lt.s32.totalorder %v3811, 2
    %vm3813 = vcmp.eq.s32.totalorder %v3811, 0
    %v3814 = vxor.u32 %v3809, 2147483648
    %v3815 = vsel %vm3813, %v3808, %v3814
    %vm3816 = vcmp.eq.s32.totalorder %v3811, 2
    %v3817 = vxor.u32 %v3808, 2147483648
    %v3818 = vsel %vm3816, %v3817, %v3809
    %v3819 = vsel %vm3812, %v3815, %v3818
    %v3820 = vsel %vm3810, nan, %v3819
    %v3821 = vand.u32 2147483647, %v1443
    %vm3822 = vcmp.le.f32.partialorder %v3821, 0.7853982
    %vm3823 = vcmp.lt.s32.totalorder %v1443, 0
    %v3824 = vand.u32 %v1443, 2139095040
    %v3825 = vshrl.u32 %v3824, 23
    %v3826 = vsub.s32 %v3825, 127
    %v3827 = vand.u32 2147483647, %v1443
    %v3828 = vand.u32 %v3827, 8388607
    %v3829 = vor.u32 %v3828, 8388608
    %v3830 = vsub.s32 0, %v3829
    %v3831 = vadd.s32 %v3826, 1
    %vm3832 = vcmp.gt.s32.totalorder %v3831, 0
    %v3833 = vsel %vm3832, %v3831, 0
    %v3834 = vshrl.u32 %v3833, 5
    %v3835 = vand.u32 %v3833, 31
    %v3836 = vsub.s32 32, %v3835
    %v3837 = vshrl.u32 683565275, %v3836
    %v3838 = vshll.u32 683565275, %v3835
    %v3839 = vshrl.u32 2475754826, %v3836
    %v3840 = vor.u32 %v3838, %v3839
    %v3841 = vshll.u32 2475754826, %v3835
    %v3842 = vshrl.u32 2131351028, %v3836
    %v3843 = vor.u32 %v3841, %v3842
    %v3844 = vshll.u32 2131351028, %v3835
    %v3845 = vshrl.u32 2102212464, %v3836
    %v3846 = vor.u32 %v3844, %v3845
    %v3847 = vshll.u32 2102212464, %v3835
    %v3848 = vshrl.u32 920167782, %v3836
    %v3849 = vor.u32 %v3847, %v3848
    %v3850 = vshll.u32 920167782, %v3835
    %v3851 = vshrl.u32 1326507024, %v3836
    %v3852 = vor.u32 %v3850, %v3851
    %vm3853 = vcmp.lt.s32.totalorder %v3834, 1
    %vm3854 = vcmp.lt.s32.totalorder %v3834, 2
    %vm3855 = vcmp.lt.s32.totalorder %v3834, 3
    %vm3856 = vcmp.lt.s32.totalorder %v3834, 4
    %v3857 = vsel %vm3853, %v3837, %v3840
    %v3858 = vsel %vm3856, %v3846, 2102212464
    %v3859 = vsel %vm3855, %v3843, %v3858
    %v3860 = vsel %vm3854, %v3857, %v3859
    %v3861 = vsel %vm3853, %v3840, %v3843
    %v3862 = vsel %vm3856, %v3849, 920167782
    %v3863 = vsel %vm3855, %v3846, %v3862
    %v3864 = vsel %vm3854, %v3861, %v3863
    %v3865 = vsel %vm3853, %v3843, %v3846
    %v3866 = vsel %vm3856, %v3852, 1326507024
    %v3867 = vsel %vm3855, %v3849, %v3866
    %v3868 = vsel %vm3854, %v3865, %v3867
    %v3869 = vshll.u32 %v3829, 8
    %v3870 = vmul.u32.u64.compose %v3869, %v3868
    %v3871 = vextract.low.u32 %v3870
    %v3872 = vextract.high.u32 %v3870
    %v3873 = vmul.u32.u64.compose %v3869, %v3864
    %v3874 = vextract.low.u32 %v3873
    %v3875 = vextract.high.u32 %v3873
    %v3876 = vmul.u32 %v3869, %v3860
    %v3877 = vadd.s32 %v3872, %v3874
    %vm3878 = vc.u32 %v3872, %v3874
    %v3879 = vadd.s32 %v3875, 1
    %v3880 = vsel %vm3878, %v3879, %v3875
    %v3881 = vadd.s32 %v3876, %v3880
    %v3882 = vadd.s32 %v3881, 536870912
    %v3883 = vshrl.u32 %v3882, 30
    %v3884 = vshll.u32 %v3883, 30
    %v3885 = vsub.s32 %v3881, %v3884
    %vm3886 = vcmp.lt.s32.totalorder %v3885, 0
    %v3887 = vsub.s32 0, %v3885
    %v3888 = vsel %vm3886, %v3887, %v3885
    %v3889 = vclz %v3888
    %v3890 = vsub.s32 %v3889, 2
    %vm3891 = vcmp.gt.s32.totalorder 0, %v3890
    %v3892 = vsel %vm3891, 0, %v3890
    %v3893 = vsub.s32 32, %v3892
    %v3894 = vshll.u32 %v3885, %v3892
    %v3895 = vshrl.u32 %v3877, %v3893
    %v3896 = vor.u32 %v3894, %v3895
    %v3897 = vsub.s32 4294967266, %v3892
    %v3898 = vadd.s32 %v3897, 127
    %v3899 = vshll.u32 %v3898, 23
    %v3900 = vor.u32 4788187, %v3899
    %v3901 = vand.u32 2147483647, %v3900
    %v3903 = vcvt.s32.f32 %v3896
    %v3904 = vmul.f32 %v3903, %v3901
    %v3905 = vxor.u32 %v3904, 2147483648
    %v3906 = vsel %vm3823, %v3905, %v3904
    %v3907 = vsub.s32 4, %v3883
    %v3908 = vsel %vm3823, %v3907, %v3883
    %v3909 = vsel %vm3822, %v1443, %v3906
    %v3910 = vsel %vm3822, 0, %v3908
    %v3911 = vcosq.f32.pop %v3909
    %v3912 = vsinq.f32.pop %v3909
    %vm3913 = vweird.f32 %v1443
    %v3914 = vand.u32 %v3910, 3
    %vm3915 = vcmp.lt.s32.totalorder %v3914, 2
    %vm3916 = vcmp.eq.s32.totalorder %v3914, 0
    %v3917 = vxor.u32 %v3912, 2147483648
    %v3918 = vsel %vm3916, %v3911, %v3917
    %vm3919 = vcmp.eq.s32.totalorder %v3914, 2
    %v3920 = vxor.u32 %v3911, 2147483648
    %v3921 = vsel %vm3919, %v3920, %v3912
    %v3922 = vsel %vm3915, %v3918, %v3921
    %v3923 = vsel %vm3913, nan, %v3922
    %v3924 = vand.u32 2147483647, %v1444
    %vm3925 = vcmp.le.f32.partialorder %v3924, 0.7853982
    %vm3926 = vcmp.lt.s32.totalorder %v1444, 0
    %v3927 = vand.u32 %v1444, 2139095040
    %v3928 = vshrl.u32 %v3927, 23
    %v3929 = vsub.s32 %v3928, 127
    %v3930 = vand.u32 2147483647, %v1444
    %v3931 = vand.u32 %v3930, 8388607
    %v3932 = vor.u32 %v3931, 8388608
    %v3933 = vsub.s32 0, %v3932
    %v3934 = vadd.s32 %v3929, 1
    %vm3935 = vcmp.gt.s32.totalorder %v3934, 0
    %v3936 = vsel %vm3935, %v3934, 0
    %v3937 = vshrl.u32 %v3936, 5
    %v3938 = vand.u32 %v3936, 31
    %v3939 = vsub.s32 32, %v3938
    %v3940 = vshrl.u32 683565275, %v3939
    %v3941 = vshll.u32 683565275, %v3938
    %v3942 = vshrl.u32 2475754826, %v3939
    %v3943 = vor.u32 %v3941, %v3942
    %v3944 = vshll.u32 2475754826, %v3938
    %v3945 = vshrl.u32 2131351028, %v3939
    %v3946 = vor.u32 %v3944, %v3945
    %v3947 = vshll.u32 2131351028, %v3938
    %v3948 = vshrl.u32 2102212464, %v3939
    %v3949 = vor.u32 %v3947, %v3948
    %v3950 = vshll.u32 2102212464, %v3938
    %v3951 = vshrl.u32 920167782, %v3939
    %v3952 = vor.u32 %v3950, %v3951
    %v3953 = vshll.u32 920167782, %v3938
    %v3954 = vshrl.u32 1326507024, %v3939
    %v3955 = vor.u32 %v3953, %v3954
    %vm3956 = vcmp.lt.s32.totalorder %v3937, 1
    %vm3957 = vcmp.lt.s32.totalorder %v3937, 2
    %vm3958 = vcmp.lt.s32.totalorder %v3937, 3
    %vm3959 = vcmp.lt.s32.totalorder %v3937, 4
    %v3960 = vsel %vm3956, %v3940, %v3943
    %v3961 = vsel %vm3959, %v3949, 2102212464
    %v3962 = vsel %vm3958, %v3946, %v3961
    %v3963 = vsel %vm3957, %v3960, %v3962
    %v3964 = vsel %vm3956, %v3943, %v3946
    %v3965 = vsel %vm3959, %v3952, 920167782
    %v3966 = vsel %vm3958, %v3949, %v3965
    %v3967 = vsel %vm3957, %v3964, %v3966
    %v3968 = vsel %vm3956, %v3946, %v3949
    %v3969 = vsel %vm3959, %v3955, 1326507024
    %v3970 = vsel %vm3958, %v3952, %v3969
    %v3971 = vsel %vm3957, %v3968, %v3970
    %v3972 = vshll.u32 %v3932, 8
    %v3973 = vmul.u32.u64.compose %v3972, %v3971
    %v3974 = vextract.low.u32 %v3973
    %v3975 = vextract.high.u32 %v3973
    %v3976 = vmul.u32.u64.compose %v3972, %v3967
    %v3977 = vextract.low.u32 %v3976
    %v3978 = vextract.high.u32 %v3976
    %v3979 = vmul.u32 %v3972, %v3963
    %v3980 = vadd.s32 %v3975, %v3977
    %vm3981 = vc.u32 %v3975, %v3977
    %v3982 = vadd.s32 %v3978, 1
    %v3983 = vsel %vm3981, %v3982, %v3978
    %v3984 = vadd.s32 %v3979, %v3983
    %v3985 = vadd.s32 %v3984, 536870912
    %v3986 = vshrl.u32 %v3985, 30
    %v3987 = vshll.u32 %v3986, 30
    %v3988 = vsub.s32 %v3984, %v3987
    %vm3989 = vcmp.lt.s32.totalorder %v3988, 0
    %v3990 = vsub.s32 0, %v3988
    %v3991 = vsel %vm3989, %v3990, %v3988
    %v3992 = vclz %v3991
    %v3993 = vsub.s32 %v3992, 2
    %vm3994 = vcmp.gt.s32.totalorder 0, %v3993
    %v3995 = vsel %vm3994, 0, %v3993
    %v3996 = vsub.s32 32, %v3995
    %v3997 = vshll.u32 %v3988, %v3995
    %v3998 = vshrl.u32 %v3980, %v3996
    %v3999 = vor.u32 %v3997, %v3998
    %v4000 = vsub.s32 4294967266, %v3995
    %v4001 = vadd.s32 %v4000, 127
    %v4002 = vshll.u32 %v4001, 23
    %v4003 = vor.u32 4788187, %v4002
    %v4004 = vand.u32 2147483647, %v4003
    %v4006 = vcvt.s32.f32 %v3999
    %v4007 = vmul.f32 %v4006, %v4004
    %v4008 = vxor.u32 %v4007, 2147483648
    %v4009 = vsel %vm3926, %v4008, %v4007
    %v4010 = vsub.s32 4, %v3986
    %v4011 = vsel %vm3926, %v4010, %v3986
    %v4012 = vsel %vm3925, %v1444, %v4009
    %v4013 = vsel %vm3925, 0, %v4011
    %v4014 = vcosq.f32.pop %v4012
    %v4015 = vsinq.f32.pop %v4012
    %vm4016 = vweird.f32 %v1444
    %v4017 = vand.u32 %v4013, 3
    %vm4018 = vcmp.lt.s32.totalorder %v4017, 2
    %vm4019 = vcmp.eq.s32.totalorder %v4017, 0
    %v4020 = vxor.u32 %v4015, 2147483648
    %v4021 = vsel %vm4019, %v4014, %v4020
    %vm4022 = vcmp.eq.s32.totalorder %v4017, 2
    %v4023 = vxor.u32 %v4014, 2147483648
    %v4024 = vsel %vm4022, %v4023, %v4015
    %v4025 = vsel %vm4018, %v4021, %v4024
    %v4026 = vsel %vm4016, nan, %v4025
    %v4027 = vand.u32 2147483647, %v1445
    %vm4028 = vcmp.le.f32.partialorder %v4027, 0.7853982
    %vm4029 = vcmp.lt.s32.totalorder %v1445, 0
    %v4030 = vand.u32 %v1445, 2139095040
    %v4031 = vshrl.u32 %v4030, 23
    %v4032 = vsub.s32 %v4031, 127
    %v4033 = vand.u32 2147483647, %v1445
    %v4034 = vand.u32 %v4033, 8388607
    %v4035 = vor.u32 %v4034, 8388608
    %v4036 = vsub.s32 0, %v4035
    %v4037 = vadd.s32 %v4032, 1
    %vm4038 = vcmp.gt.s32.totalorder %v4037, 0
    %v4039 = vsel %vm4038, %v4037, 0
    %v4040 = vshrl.u32 %v4039, 5
    %v4041 = vand.u32 %v4039, 31
    %v4042 = vsub.s32 32, %v4041
    %v4043 = vshrl.u32 683565275, %v4042
    %v4044 = vshll.u32 683565275, %v4041
    %v4045 = vshrl.u32 2475754826, %v4042
    %v4046 = vor.u32 %v4044, %v4045
    %v4047 = vshll.u32 2475754826, %v4041
    %v4048 = vshrl.u32 2131351028, %v4042
    %v4049 = vor.u32 %v4047, %v4048
    %v4050 = vshll.u32 2131351028, %v4041
    %v4051 = vshrl.u32 2102212464, %v4042
    %v4052 = vor.u32 %v4050, %v4051
    %v4053 = vshll.u32 2102212464, %v4041
    %v4054 = vshrl.u32 920167782, %v4042
    %v4055 = vor.u32 %v4053, %v4054
    %v4056 = vshll.u32 920167782, %v4041
    %v4057 = vshrl.u32 1326507024, %v4042
    %v4058 = vor.u32 %v4056, %v4057
    %vm4059 = vcmp.lt.s32.totalorder %v4040, 1
    %vm4060 = vcmp.lt.s32.totalorder %v4040, 2
    %vm4061 = vcmp.lt.s32.totalorder %v4040, 3
    %vm4062 = vcmp.lt.s32.totalorder %v4040, 4
    %v4063 = vsel %vm4059, %v4043, %v4046
    %v4064 = vsel %vm4062, %v4052, 2102212464
    %v4065 = vsel %vm4061, %v4049, %v4064
    %v4066 = vsel %vm4060, %v4063, %v4065
    %v4067 = vsel %vm4059, %v4046, %v4049
    %v4068 = vsel %vm4062, %v4055, 920167782
    %v4069 = vsel %vm4061, %v4052, %v4068
    %v4070 = vsel %vm4060, %v4067, %v4069
    %v4071 = vsel %vm4059, %v4049, %v4052
    %v4072 = vsel %vm4062, %v4058, 1326507024
    %v4073 = vsel %vm4061, %v4055, %v4072
    %v4074 = vsel %vm4060, %v4071, %v4073
    %v4075 = vshll.u32 %v4035, 8
    %v4076 = vmul.u32.u64.compose %v4075, %v4074
    %v4077 = vextract.low.u32 %v4076
    %v4078 = vextract.high.u32 %v4076
    %v4079 = vmul.u32.u64.compose %v4075, %v4070
    %v4080 = vextract.low.u32 %v4079
    %v4081 = vextract.high.u32 %v4079
    %v4082 = vmul.u32 %v4075, %v4066
    %v4083 = vadd.s32 %v4078, %v4080
    %vm4084 = vc.u32 %v4078, %v4080
    %v4085 = vadd.s32 %v4081, 1
    %v4086 = vsel %vm4084, %v4085, %v4081
    %v4087 = vadd.s32 %v4082, %v4086
    %v4088 = vadd.s32 %v4087, 536870912
    %v4089 = vshrl.u32 %v4088, 30
    %v4090 = vshll.u32 %v4089, 30
    %v4091 = vsub.s32 %v4087, %v4090
    %vm4092 = vcmp.lt.s32.totalorder %v4091, 0
    %v4093 = vsub.s32 0, %v4091
    %v4094 = vsel %vm4092, %v4093, %v4091
    %v4095 = vclz %v4094
    %v4096 = vsub.s32 %v4095, 2
    %vm4097 = vcmp.gt.s32.totalorder 0, %v4096
    %v4098 = vsel %vm4097, 0, %v4096
    %v4099 = vsub.s32 32, %v4098
    %v4100 = vshll.u32 %v4091, %v4098
    %v4101 = vshrl.u32 %v4083, %v4099
    %v4102 = vor.u32 %v4100, %v4101
    %v4103 = vsub.s32 4294967266, %v4098
    %v4104 = vadd.s32 %v4103, 127
    %v4105 = vshll.u32 %v4104, 23
    %v4106 = vor.u32 4788187, %v4105
    %v4107 = vand.u32 2147483647, %v4106
    %v4109 = vcvt.s32.f32 %v4102
    %v4110 = vmul.f32 %v4109, %v4107
    %v4111 = vxor.u32 %v4110, 2147483648
    %v4112 = vsel %vm4029, %v4111, %v4110
    %v4113 = vsub.s32 4, %v4089
    %v4114 = vsel %vm4029, %v4113, %v4089
    %v4115 = vsel %vm4028, %v1445, %v4112
    %v4116 = vsel %vm4028, 0, %v4114
    %v4117 = vcosq.f32.pop %v4115
    %v4118 = vsinq.f32.pop %v4115
    %vm4119 = vweird.f32 %v1445
    %v4120 = vand.u32 %v4116, 3
    %vm4121 = vcmp.lt.s32.totalorder %v4120, 2
    %vm4122 = vcmp.eq.s32.totalorder %v4120, 0
    %v4123 = vxor.u32 %v4118, 2147483648
    %v4124 = vsel %vm4122, %v4117, %v4123
    %vm4125 = vcmp.eq.s32.totalorder %v4120, 2
    %v4126 = vxor.u32 %v4117, 2147483648
    %v4127 = vsel %vm4125, %v4126, %v4118
    %v4128 = vsel %vm4121, %v4124, %v4127
    %v4129 = vsel %vm4119, nan, %v4128
    %v4130 = vand.u32 2147483647, %v1446
    %vm4131 = vcmp.le.f32.partialorder %v4130, 0.7853982
    %vm4132 = vcmp.lt.s32.totalorder %v1446, 0
    %v4133 = vand.u32 %v1446, 2139095040
    %v4134 = vshrl.u32 %v4133, 23
    %v4135 = vsub.s32 %v4134, 127
    %v4136 = vand.u32 2147483647, %v1446
    %v4137 = vand.u32 %v4136, 8388607
    %v4138 = vor.u32 %v4137, 8388608
    %v4139 = vsub.s32 0, %v4138
    %v4140 = vadd.s32 %v4135, 1
    %vm4141 = vcmp.gt.s32.totalorder %v4140, 0
    %v4142 = vsel %vm4141, %v4140, 0
    %v4143 = vshrl.u32 %v4142, 5
    %v4144 = vand.u32 %v4142, 31
    %v4145 = vsub.s32 32, %v4144
    %v4146 = vshrl.u32 683565275, %v4145
    %v4147 = vshll.u32 683565275, %v4144
    %v4148 = vshrl.u32 2475754826, %v4145
    %v4149 = vor.u32 %v4147, %v4148
    %v4150 = vshll.u32 2475754826, %v4144
    %v4151 = vshrl.u32 2131351028, %v4145
    %v4152 = vor.u32 %v4150, %v4151
    %v4153 = vshll.u32 2131351028, %v4144
    %v4154 = vshrl.u32 2102212464, %v4145
    %v4155 = vor.u32 %v4153, %v4154
    %v4156 = vshll.u32 2102212464, %v4144
    %v4157 = vshrl.u32 920167782, %v4145
    %v4158 = vor.u32 %v4156, %v4157
    %v4159 = vshll.u32 920167782, %v4144
    %v4160 = vshrl.u32 1326507024, %v4145
    %v4161 = vor.u32 %v4159, %v4160
    %vm4162 = vcmp.lt.s32.totalorder %v4143, 1
    %vm4163 = vcmp.lt.s32.totalorder %v4143, 2
    %vm4164 = vcmp.lt.s32.totalorder %v4143, 3
    %vm4165 = vcmp.lt.s32.totalorder %v4143, 4
    %v4166 = vsel %vm4162, %v4146, %v4149
    %v4167 = vsel %vm4165, %v4155, 2102212464
    %v4168 = vsel %vm4164, %v4152, %v4167
    %v4169 = vsel %vm4163, %v4166, %v4168
    %v4170 = vsel %vm4162, %v4149, %v4152
    %v4171 = vsel %vm4165, %v4158, 920167782
    %v4172 = vsel %vm4164, %v4155, %v4171
    %v4173 = vsel %vm4163, %v4170, %v4172
    %v4174 = vsel %vm4162, %v4152, %v4155
    %v4175 = vsel %vm4165, %v4161, 1326507024
    %v4176 = vsel %vm4164, %v4158, %v4175
    %v4177 = vsel %vm4163, %v4174, %v4176
    %v4178 = vshll.u32 %v4138, 8
    %v4179 = vmul.u32.u64.compose %v4178, %v4177
    %v4180 = vextract.low.u32 %v4179
    %v4181 = vextract.high.u32 %v4179
    %v4182 = vmul.u32.u64.compose %v4178, %v4173
    %v4183 = vextract.low.u32 %v4182
    %v4184 = vextract.high.u32 %v4182
    %v4185 = vmul.u32 %v4178, %v4169
    %v4186 = vadd.s32 %v4181, %v4183
    %vm4187 = vc.u32 %v4181, %v4183
    %v4188 = vadd.s32 %v4184, 1
    %v4189 = vsel %vm4187, %v4188, %v4184
    %v4190 = vadd.s32 %v4185, %v4189
    %v4191 = vadd.s32 %v4190, 536870912
    %v4192 = vshrl.u32 %v4191, 30
    %v4193 = vshll.u32 %v4192, 30
    %v4194 = vsub.s32 %v4190, %v4193
    %vm4195 = vcmp.lt.s32.totalorder %v4194, 0
    %v4196 = vsub.s32 0, %v4194
    %v4197 = vsel %vm4195, %v4196, %v4194
    %v4198 = vclz %v4197
    %v4199 = vsub.s32 %v4198, 2
    %vm4200 = vcmp.gt.s32.totalorder 0, %v4199
    %v4201 = vsel %vm4200, 0, %v4199
    %v4202 = vsub.s32 32, %v4201
    %v4203 = vshll.u32 %v4194, %v4201
    %v4204 = vshrl.u32 %v4186, %v4202
    %v4205 = vor.u32 %v4203, %v4204
    %v4206 = vsub.s32 4294967266, %v4201
    %v4207 = vadd.s32 %v4206, 127
    %v4208 = vshll.u32 %v4207, 23
    %v4209 = vor.u32 4788187, %v4208
    %v4210 = vand.u32 2147483647, %v4209
    %v4212 = vcvt.s32.f32 %v4205
    %v4213 = vmul.f32 %v4212, %v4210
    %v4214 = vxor.u32 %v4213, 2147483648
    %v4215 = vsel %vm4132, %v4214, %v4213
    %v4216 = vsub.s32 4, %v4192
    %v4217 = vsel %vm4132, %v4216, %v4192
    %v4218 = vsel %vm4131, %v1446, %v4215
    %v4219 = vsel %vm4131, 0, %v4217
    %v4220 = vcosq.f32.pop %v4218
    %v4221 = vsinq.f32.pop %v4218
    %vm4222 = vweird.f32 %v1446
    %v4223 = vand.u32 %v4219, 3
    %vm4224 = vcmp.lt.s32.totalorder %v4223, 2
    %vm4225 = vcmp.eq.s32.totalorder %v4223, 0
    %v4226 = vxor.u32 %v4221, 2147483648
    %v4227 = vsel %vm4225, %v4220, %v4226
    %vm4228 = vcmp.eq.s32.totalorder %v4223, 2
    %v4229 = vxor.u32 %v4220, 2147483648
    %v4230 = vsel %vm4228, %v4229, %v4221
    %v4231 = vsel %vm4224, %v4227, %v4230
    %v4232 = vsel %vm4222, nan, %v4231
    %v4233 = vand.u32 2147483647, %v1447
    %vm4234 = vcmp.le.f32.partialorder %v4233, 0.7853982
    %vm4235 = vcmp.lt.s32.totalorder %v1447, 0
    %v4236 = vand.u32 %v1447, 2139095040
    %v4237 = vshrl.u32 %v4236, 23
    %v4238 = vsub.s32 %v4237, 127
    %v4239 = vand.u32 2147483647, %v1447
    %v4240 = vand.u32 %v4239, 8388607
    %v4241 = vor.u32 %v4240, 8388608
    %v4242 = vsub.s32 0, %v4241
    %v4243 = vadd.s32 %v4238, 1
    %vm4244 = vcmp.gt.s32.totalorder %v4243, 0
    %v4245 = vsel %vm4244, %v4243, 0
    %v4246 = vshrl.u32 %v4245, 5
    %v4247 = vand.u32 %v4245, 31
    %v4248 = vsub.s32 32, %v4247
    %v4249 = vshrl.u32 683565275, %v4248
    %v4250 = vshll.u32 683565275, %v4247
    %v4251 = vshrl.u32 2475754826, %v4248
    %v4252 = vor.u32 %v4250, %v4251
    %v4253 = vshll.u32 2475754826, %v4247
    %v4254 = vshrl.u32 2131351028, %v4248
    %v4255 = vor.u32 %v4253, %v4254
    %v4256 = vshll.u32 2131351028, %v4247
    %v4257 = vshrl.u32 2102212464, %v4248
    %v4258 = vor.u32 %v4256, %v4257
    %v4259 = vshll.u32 2102212464, %v4247
    %v4260 = vshrl.u32 920167782, %v4248
    %v4261 = vor.u32 %v4259, %v4260
    %v4262 = vshll.u32 920167782, %v4247
    %v4263 = vshrl.u32 1326507024, %v4248
    %v4264 = vor.u32 %v4262, %v4263
    %vm4265 = vcmp.lt.s32.totalorder %v4246, 1
    %vm4266 = vcmp.lt.s32.totalorder %v4246, 2
    %vm4267 = vcmp.lt.s32.totalorder %v4246, 3
    %vm4268 = vcmp.lt.s32.totalorder %v4246, 4
    %v4269 = vsel %vm4265, %v4249, %v4252
    %v4270 = vsel %vm4268, %v4258, 2102212464
    %v4271 = vsel %vm4267, %v4255, %v4270
    %v4272 = vsel %vm4266, %v4269, %v4271
    %v4273 = vsel %vm4265, %v4252, %v4255
    %v4274 = vsel %vm4268, %v4261, 920167782
    %v4275 = vsel %vm4267, %v4258, %v4274
    %v4276 = vsel %vm4266, %v4273, %v4275
    %v4277 = vsel %vm4265, %v4255, %v4258
    %v4278 = vsel %vm4268, %v4264, 1326507024
    %v4279 = vsel %vm4267, %v4261, %v4278
    %v4280 = vsel %vm4266, %v4277, %v4279
    %v4281 = vshll.u32 %v4241, 8
    %v4282 = vmul.u32.u64.compose %v4281, %v4280
    %v4283 = vextract.low.u32 %v4282
    %v4284 = vextract.high.u32 %v4282
    %v4285 = vmul.u32.u64.compose %v4281, %v4276
    %v4286 = vextract.low.u32 %v4285
    %v4287 = vextract.high.u32 %v4285
    %v4288 = vmul.u32 %v4281, %v4272
    %v4289 = vadd.s32 %v4284, %v4286
    %vm4290 = vc.u32 %v4284, %v4286
    %v4291 = vadd.s32 %v4287, 1
    %v4292 = vsel %vm4290, %v4291, %v4287
    %v4293 = vadd.s32 %v4288, %v4292
    %v4294 = vadd.s32 %v4293, 536870912
    %v4295 = vshrl.u32 %v4294, 30
    %v4296 = vshll.u32 %v4295, 30
    %v4297 = vsub.s32 %v4293, %v4296
    %vm4298 = vcmp.lt.s32.totalorder %v4297, 0
    %v4299 = vsub.s32 0, %v4297
    %v4300 = vsel %vm4298, %v4299, %v4297
    %v4301 = vclz %v4300
    %v4302 = vsub.s32 %v4301, 2
    %vm4303 = vcmp.gt.s32.totalorder 0, %v4302
    %v4304 = vsel %vm4303, 0, %v4302
    %v4305 = vsub.s32 32, %v4304
    %v4306 = vshll.u32 %v4297, %v4304
    %v4307 = vshrl.u32 %v4289, %v4305
    %v4308 = vor.u32 %v4306, %v4307
    %v4309 = vsub.s32 4294967266, %v4304
    %v4310 = vadd.s32 %v4309, 127
    %v4311 = vshll.u32 %v4310, 23
    %v4312 = vor.u32 4788187, %v4311
    %v4313 = vand.u32 2147483647, %v4312
    %v4315 = vcvt.s32.f32 %v4308
    %v4316 = vmul.f32 %v4315, %v4313
    %v4317 = vxor.u32 %v4316, 2147483648
    %v4318 = vsel %vm4235, %v4317, %v4316
    %v4319 = vsub.s32 4, %v4295
    %v4320 = vsel %vm4235, %v4319, %v4295
    %v4321 = vsel %vm4234, %v1447, %v4318
    %v4322 = vsel %vm4234, 0, %v4320
    %v4323 = vcosq.f32.pop %v4321
    %v4324 = vsinq.f32.pop %v4321
    %vm4325 = vweird.f32 %v1447
    %v4326 = vand.u32 %v4322, 3
    %vm4327 = vcmp.lt.s32.totalorder %v4326, 2
    %vm4328 = vcmp.eq.s32.totalorder %v4326, 0
    %v4329 = vxor.u32 %v4324, 2147483648
    %v4330 = vsel %vm4328, %v4323, %v4329
    %vm4331 = vcmp.eq.s32.totalorder %v4326, 2
    %v4332 = vxor.u32 %v4323, 2147483648
    %v4333 = vsel %vm4331, %v4332, %v4324
    %v4334 = vsel %vm4327, %v4330, %v4333
    %v4335 = vsel %vm4325, nan, %v4334
    %v4336 = vand.u32 2147483647, %v1448
    %vm4337 = vcmp.le.f32.partialorder %v4336, 0.7853982
    %vm4338 = vcmp.lt.s32.totalorder %v1448, 0
    %v4339 = vand.u32 %v1448, 2139095040
    %v4340 = vshrl.u32 %v4339, 23
    %v4341 = vsub.s32 %v4340, 127
    %v4342 = vand.u32 2147483647, %v1448
    %v4343 = vand.u32 %v4342, 8388607
    %v4344 = vor.u32 %v4343, 8388608
    %v4345 = vsub.s32 0, %v4344
    %v4346 = vadd.s32 %v4341, 1
    %vm4347 = vcmp.gt.s32.totalorder %v4346, 0
    %v4348 = vsel %vm4347, %v4346, 0
    %v4349 = vshrl.u32 %v4348, 5
    %v4350 = vand.u32 %v4348, 31
    %v4351 = vsub.s32 32, %v4350
    %v4352 = vshrl.u32 683565275, %v4351
    %v4353 = vshll.u32 683565275, %v4350
    %v4354 = vshrl.u32 2475754826, %v4351
    %v4355 = vor.u32 %v4353, %v4354
    %v4356 = vshll.u32 2475754826, %v4350
    %v4357 = vshrl.u32 2131351028, %v4351
    %v4358 = vor.u32 %v4356, %v4357
    %v4359 = vshll.u32 2131351028, %v4350
    %v4360 = vshrl.u32 2102212464, %v4351
    %v4361 = vor.u32 %v4359, %v4360
    %v4362 = vshll.u32 2102212464, %v4350
    %v4363 = vshrl.u32 920167782, %v4351
    %v4364 = vor.u32 %v4362, %v4363
    %v4365 = vshll.u32 920167782, %v4350
    %v4366 = vshrl.u32 1326507024, %v4351
    %v4367 = vor.u32 %v4365, %v4366
    %vm4368 = vcmp.lt.s32.totalorder %v4349, 1
    %vm4369 = vcmp.lt.s32.totalorder %v4349, 2
    %vm4370 = vcmp.lt.s32.totalorder %v4349, 3
    %vm4371 = vcmp.lt.s32.totalorder %v4349, 4
    %v4372 = vsel %vm4368, %v4352, %v4355
    %v4373 = vsel %vm4371, %v4361, 2102212464
    %v4374 = vsel %vm4370, %v4358, %v4373
    %v4375 = vsel %vm4369, %v4372, %v4374
    %v4376 = vsel %vm4368, %v4355, %v4358
    %v4377 = vsel %vm4371, %v4364, 920167782
    %v4378 = vsel %vm4370, %v4361, %v4377
    %v4379 = vsel %vm4369, %v4376, %v4378
    %v4380 = vsel %vm4368, %v4358, %v4361
    %v4381 = vsel %vm4371, %v4367, 1326507024
    %v4382 = vsel %vm4370, %v4364, %v4381
    %v4383 = vsel %vm4369, %v4380, %v4382
    %v4384 = vshll.u32 %v4344, 8
    %v4385 = vmul.u32.u64.compose %v4384, %v4383
    %v4386 = vextract.low.u32 %v4385
    %v4387 = vextract.high.u32 %v4385
    %v4388 = vmul.u32.u64.compose %v4384, %v4379
    %v4389 = vextract.low.u32 %v4388
    %v4390 = vextract.high.u32 %v4388
    %v4391 = vmul.u32 %v4384, %v4375
    %v4392 = vadd.s32 %v4387, %v4389
    %vm4393 = vc.u32 %v4387, %v4389
    %v4394 = vadd.s32 %v4390, 1
    %v4395 = vsel %vm4393, %v4394, %v4390
    %v4396 = vadd.s32 %v4391, %v4395
    %v4397 = vadd.s32 %v4396, 536870912
    %v4398 = vshrl.u32 %v4397, 30
    %v4399 = vshll.u32 %v4398, 30
    %v4400 = vsub.s32 %v4396, %v4399
    %vm4401 = vcmp.lt.s32.totalorder %v4400, 0
    %v4402 = vsub.s32 0, %v4400
    %v4403 = vsel %vm4401, %v4402, %v4400
    %v4404 = vclz %v4403
    %v4405 = vsub.s32 %v4404, 2
    %vm4406 = vcmp.gt.s32.totalorder 0, %v4405
    %v4407 = vsel %vm4406, 0, %v4405
    %v4408 = vsub.s32 32, %v4407
    %v4409 = vshll.u32 %v4400, %v4407
    %v4410 = vshrl.u32 %v4392, %v4408
    %v4411 = vor.u32 %v4409, %v4410
    %v4412 = vsub.s32 4294967266, %v4407
    %v4413 = vadd.s32 %v4412, 127
    %v4414 = vshll.u32 %v4413, 23
    %v4415 = vor.u32 4788187, %v4414
    %v4416 = vand.u32 2147483647, %v4415
    %v4418 = vcvt.s32.f32 %v4411
    %v4419 = vmul.f32 %v4418, %v4416
    %v4420 = vxor.u32 %v4419, 2147483648
    %v4421 = vsel %vm4338, %v4420, %v4419
    %v4422 = vsub.s32 4, %v4398
    %v4423 = vsel %vm4338, %v4422, %v4398
    %v4424 = vsel %vm4337, %v1448, %v4421
    %v4425 = vsel %vm4337, 0, %v4423
    %v4426 = vcosq.f32.pop %v4424
    %v4427 = vsinq.f32.pop %v4424
    %vm4428 = vweird.f32 %v1448
    %v4429 = vand.u32 %v4425, 3
    %vm4430 = vcmp.lt.s32.totalorder %v4429, 2
    %vm4431 = vcmp.eq.s32.totalorder %v4429, 0
    %v4432 = vxor.u32 %v4427, 2147483648
    %v4433 = vsel %vm4431, %v4426, %v4432
    %vm4434 = vcmp.eq.s32.totalorder %v4429, 2
    %v4435 = vxor.u32 %v4426, 2147483648
    %v4436 = vsel %vm4434, %v4435, %v4427
    %v4437 = vsel %vm4430, %v4433, %v4436
    %v4438 = vsel %vm4428, nan, %v4437
    %v4439 = vand.u32 2147483647, %v1449
    %vm4440 = vcmp.le.f32.partialorder %v4439, 0.7853982
    %vm4441 = vcmp.lt.s32.totalorder %v1449, 0
    %v4442 = vand.u32 %v1449, 2139095040
    %v4443 = vshrl.u32 %v4442, 23
    %v4444 = vsub.s32 %v4443, 127
    %v4445 = vand.u32 2147483647, %v1449
    %v4446 = vand.u32 %v4445, 8388607
    %v4447 = vor.u32 %v4446, 8388608
    %v4448 = vsub.s32 0, %v4447
    %v4449 = vadd.s32 %v4444, 1
    %vm4450 = vcmp.gt.s32.totalorder %v4449, 0
    %v4451 = vsel %vm4450, %v4449, 0
    %v4452 = vshrl.u32 %v4451, 5
    %v4453 = vand.u32 %v4451, 31
    %v4454 = vsub.s32 32, %v4453
    %v4455 = vshrl.u32 683565275, %v4454
    %v4456 = vshll.u32 683565275, %v4453
    %v4457 = vshrl.u32 2475754826, %v4454
    %v4458 = vor.u32 %v4456, %v4457
    %v4459 = vshll.u32 2475754826, %v4453
    %v4460 = vshrl.u32 2131351028, %v4454
    %v4461 = vor.u32 %v4459, %v4460
    %v4462 = vshll.u32 2131351028, %v4453
    %v4463 = vshrl.u32 2102212464, %v4454
    %v4464 = vor.u32 %v4462, %v4463
    %v4465 = vshll.u32 2102212464, %v4453
    %v4466 = vshrl.u32 920167782, %v4454
    %v4467 = vor.u32 %v4465, %v4466
    %v4468 = vshll.u32 920167782, %v4453
    %v4469 = vshrl.u32 1326507024, %v4454
    %v4470 = vor.u32 %v4468, %v4469
    %vm4471 = vcmp.lt.s32.totalorder %v4452, 1
    %vm4472 = vcmp.lt.s32.totalorder %v4452, 2
    %vm4473 = vcmp.lt.s32.totalorder %v4452, 3
    %vm4474 = vcmp.lt.s32.totalorder %v4452, 4
    %v4475 = vsel %vm4471, %v4455, %v4458
    %v4476 = vsel %vm4474, %v4464, 2102212464
    %v4477 = vsel %vm4473, %v4461, %v4476
    %v4478 = vsel %vm4472, %v4475, %v4477
    %v4479 = vsel %vm4471, %v4458, %v4461
    %v4480 = vsel %vm4474, %v4467, 920167782
    %v4481 = vsel %vm4473, %v4464, %v4480
    %v4482 = vsel %vm4472, %v4479, %v4481
    %v4483 = vsel %vm4471, %v4461, %v4464
    %v4484 = vsel %vm4474, %v4470, 1326507024
    %v4485 = vsel %vm4473, %v4467, %v4484
    %v4486 = vsel %vm4472, %v4483, %v4485
    %v4487 = vshll.u32 %v4447, 8
    %v4488 = vmul.u32.u64.compose %v4487, %v4486
    %v4489 = vextract.low.u32 %v4488
    %v4490 = vextract.high.u32 %v4488
    %v4491 = vmul.u32.u64.compose %v4487, %v4482
    %v4492 = vextract.low.u32 %v4491
    %v4493 = vextract.high.u32 %v4491
    %v4494 = vmul.u32 %v4487, %v4478
    %v4495 = vadd.s32 %v4490, %v4492
    %vm4496 = vc.u32 %v4490, %v4492
    %v4497 = vadd.s32 %v4493, 1
    %v4498 = vsel %vm4496, %v4497, %v4493
    %v4499 = vadd.s32 %v4494, %v4498
    %v4500 = vadd.s32 %v4499, 536870912
    %v4501 = vshrl.u32 %v4500, 30
    %v4502 = vshll.u32 %v4501, 30
    %v4503 = vsub.s32 %v4499, %v4502
    %vm4504 = vcmp.lt.s32.totalorder %v4503, 0
    %v4505 = vsub.s32 0, %v4503
    %v4506 = vsel %vm4504, %v4505, %v4503
    %v4507 = vclz %v4506
    %v4508 = vsub.s32 %v4507, 2
    %vm4509 = vcmp.gt.s32.totalorder 0, %v4508
    %v4510 = vsel %vm4509, 0, %v4508
    %v4511 = vsub.s32 32, %v4510
    %v4512 = vshll.u32 %v4503, %v4510
    %v4513 = vshrl.u32 %v4495, %v4511
    %v4514 = vor.u32 %v4512, %v4513
    %v4515 = vsub.s32 4294967266, %v4510
    %v4516 = vadd.s32 %v4515, 127
    %v4517 = vshll.u32 %v4516, 23
    %v4518 = vor.u32 4788187, %v4517
    %v4519 = vand.u32 2147483647, %v4518
    %v4521 = vcvt.s32.f32 %v4514
    %v4522 = vmul.f32 %v4521, %v4519
    %v4523 = vxor.u32 %v4522, 2147483648
    %v4524 = vsel %vm4441, %v4523, %v4522
    %v4525 = vsub.s32 4, %v4501
    %v4526 = vsel %vm4441, %v4525, %v4501
    %v4527 = vsel %vm4440, %v1449, %v4524
    %v4528 = vsel %vm4440, 0, %v4526
    %v4529 = vcosq.f32.pop %v4527
    %v4530 = vsinq.f32.pop %v4527
    %vm4531 = vweird.f32 %v1449
    %v4532 = vand.u32 %v4528, 3
    %vm4533 = vcmp.lt.s32.totalorder %v4532, 2
    %vm4534 = vcmp.eq.s32.totalorder %v4532, 0
    %v4535 = vxor.u32 %v4530, 2147483648
    %v4536 = vsel %vm4534, %v4529, %v4535
    %vm4537 = vcmp.eq.s32.totalorder %v4532, 2
    %v4538 = vxor.u32 %v4529, 2147483648
    %v4539 = vsel %vm4537, %v4538, %v4530
    %v4540 = vsel %vm4533, %v4536, %v4539
    %v4541 = vsel %vm4531, nan, %v4540
    %v4542 = vand.u32 2147483647, %v1450
    %vm4543 = vcmp.le.f32.partialorder %v4542, 0.7853982
    %vm4544 = vcmp.lt.s32.totalorder %v1450, 0
    %v4545 = vand.u32 %v1450, 2139095040
    %v4546 = vshrl.u32 %v4545, 23
    %v4547 = vsub.s32 %v4546, 127
    %v4548 = vand.u32 2147483647, %v1450
    %v4549 = vand.u32 %v4548, 8388607
    %v4550 = vor.u32 %v4549, 8388608
    %v4551 = vsub.s32 0, %v4550
    %v4552 = vadd.s32 %v4547, 1
    %vm4553 = vcmp.gt.s32.totalorder %v4552, 0
    %v4554 = vsel %vm4553, %v4552, 0
    %v4555 = vshrl.u32 %v4554, 5
    %v4556 = vand.u32 %v4554, 31
    %v4557 = vsub.s32 32, %v4556
    %v4558 = vshrl.u32 683565275, %v4557
    %v4559 = vshll.u32 683565275, %v4556
    %v4560 = vshrl.u32 2475754826, %v4557
    %v4561 = vor.u32 %v4559, %v4560
    %v4562 = vshll.u32 2475754826, %v4556
    %v4563 = vshrl.u32 2131351028, %v4557
    %v4564 = vor.u32 %v4562, %v4563
    %v4565 = vshll.u32 2131351028, %v4556
    %v4566 = vshrl.u32 2102212464, %v4557
    %v4567 = vor.u32 %v4565, %v4566
    %v4568 = vshll.u32 2102212464, %v4556
    %v4569 = vshrl.u32 920167782, %v4557
    %v4570 = vor.u32 %v4568, %v4569
    %v4571 = vshll.u32 920167782, %v4556
    %v4572 = vshrl.u32 1326507024, %v4557
    %v4573 = vor.u32 %v4571, %v4572
    %vm4574 = vcmp.lt.s32.totalorder %v4555, 1
    %vm4575 = vcmp.lt.s32.totalorder %v4555, 2
    %vm4576 = vcmp.lt.s32.totalorder %v4555, 3
    %vm4577 = vcmp.lt.s32.totalorder %v4555, 4
    %v4578 = vsel %vm4574, %v4558, %v4561
    %v4579 = vsel %vm4577, %v4567, 2102212464
    %v4580 = vsel %vm4576, %v4564, %v4579
    %v4581 = vsel %vm4575, %v4578, %v4580
    %v4582 = vsel %vm4574, %v4561, %v4564
    %v4583 = vsel %vm4577, %v4570, 920167782
    %v4584 = vsel %vm4576, %v4567, %v4583
    %v4585 = vsel %vm4575, %v4582, %v4584
    %v4586 = vsel %vm4574, %v4564, %v4567
    %v4587 = vsel %vm4577, %v4573, 1326507024
    %v4588 = vsel %vm4576, %v4570, %v4587
    %v4589 = vsel %vm4575, %v4586, %v4588
    %v4590 = vshll.u32 %v4550, 8
    %v4591 = vmul.u32.u64.compose %v4590, %v4589
    %v4592 = vextract.low.u32 %v4591
    %v4593 = vextract.high.u32 %v4591
    %v4594 = vmul.u32.u64.compose %v4590, %v4585
    %v4595 = vextract.low.u32 %v4594
    %v4596 = vextract.high.u32 %v4594
    %v4597 = vmul.u32 %v4590, %v4581
    %v4598 = vadd.s32 %v4593, %v4595
    %vm4599 = vc.u32 %v4593, %v4595
    %v4600 = vadd.s32 %v4596, 1
    %v4601 = vsel %vm4599, %v4600, %v4596
    %v4602 = vadd.s32 %v4597, %v4601
    %v4603 = vadd.s32 %v4602, 536870912
    %v4604 = vshrl.u32 %v4603, 30
    %v4605 = vshll.u32 %v4604, 30
    %v4606 = vsub.s32 %v4602, %v4605
    %vm4607 = vcmp.lt.s32.totalorder %v4606, 0
    %v4608 = vsub.s32 0, %v4606
    %v4609 = vsel %vm4607, %v4608, %v4606
    %v4610 = vclz %v4609
    %v4611 = vsub.s32 %v4610, 2
    %vm4612 = vcmp.gt.s32.totalorder 0, %v4611
    %v4613 = vsel %vm4612, 0, %v4611
    %v4614 = vsub.s32 32, %v4613
    %v4615 = vshll.u32 %v4606, %v4613
    %v4616 = vshrl.u32 %v4598, %v4614
    %v4617 = vor.u32 %v4615, %v4616
    %v4618 = vsub.s32 4294967266, %v4613
    %v4619 = vadd.s32 %v4618, 127
    %v4620 = vshll.u32 %v4619, 23
    %v4621 = vor.u32 4788187, %v4620
    %v4622 = vand.u32 2147483647, %v4621
    %v4624 = vcvt.s32.f32 %v4617
    %v4625 = vmul.f32 %v4624, %v4622
    %v4626 = vxor.u32 %v4625, 2147483648
    %v4627 = vsel %vm4544, %v4626, %v4625
    %v4628 = vsub.s32 4, %v4604
    %v4629 = vsel %vm4544, %v4628, %v4604
    %v4630 = vsel %vm4543, %v1450, %v4627
    %v4631 = vsel %vm4543, 0, %v4629
    %v4632 = vcosq.f32.pop %v4630
    %v4633 = vsinq.f32.pop %v4630
    %vm4634 = vweird.f32 %v1450
    %v4635 = vand.u32 %v4631, 3
    %vm4636 = vcmp.lt.s32.totalorder %v4635, 2
    %vm4637 = vcmp.eq.s32.totalorder %v4635, 0
    %v4638 = vxor.u32 %v4633, 2147483648
    %v4639 = vsel %vm4637, %v4632, %v4638
    %vm4640 = vcmp.eq.s32.totalorder %v4635, 2
    %v4641 = vxor.u32 %v4632, 2147483648
    %v4642 = vsel %vm4640, %v4641, %v4633
    %v4643 = vsel %vm4636, %v4639, %v4642
    %v4644 = vsel %vm4634, nan, %v4643
    %v4645 = vand.u32 2147483647, %v1451
    %vm4646 = vcmp.le.f32.partialorder %v4645, 0.7853982
    %vm4647 = vcmp.lt.s32.totalorder %v1451, 0
    %v4648 = vand.u32 %v1451, 2139095040
    %v4649 = vshrl.u32 %v4648, 23
    %v4650 = vsub.s32 %v4649, 127
    %v4651 = vand.u32 2147483647, %v1451
    %v4652 = vand.u32 %v4651, 8388607
    %v4653 = vor.u32 %v4652, 8388608
    %v4654 = vsub.s32 0, %v4653
    %v4655 = vadd.s32 %v4650, 1
    %vm4656 = vcmp.gt.s32.totalorder %v4655, 0
    %v4657 = vsel %vm4656, %v4655, 0
    %v4658 = vshrl.u32 %v4657, 5
    %v4659 = vand.u32 %v4657, 31
    %v4660 = vsub.s32 32, %v4659
    %v4661 = vshrl.u32 683565275, %v4660
    %v4662 = vshll.u32 683565275, %v4659
    %v4663 = vshrl.u32 2475754826, %v4660
    %v4664 = vor.u32 %v4662, %v4663
    %v4665 = vshll.u32 2475754826, %v4659
    %v4666 = vshrl.u32 2131351028, %v4660
    %v4667 = vor.u32 %v4665, %v4666
    %v4668 = vshll.u32 2131351028, %v4659
    %v4669 = vshrl.u32 2102212464, %v4660
    %v4670 = vor.u32 %v4668, %v4669
    %v4671 = vshll.u32 2102212464, %v4659
    %v4672 = vshrl.u32 920167782, %v4660
    %v4673 = vor.u32 %v4671, %v4672
    %v4674 = vshll.u32 920167782, %v4659
    %v4675 = vshrl.u32 1326507024, %v4660
    %v4676 = vor.u32 %v4674, %v4675
    %vm4677 = vcmp.lt.s32.totalorder %v4658, 1
    %vm4678 = vcmp.lt.s32.totalorder %v4658, 2
    %vm4679 = vcmp.lt.s32.totalorder %v4658, 3
    %vm4680 = vcmp.lt.s32.totalorder %v4658, 4
    %v4681 = vsel %vm4677, %v4661, %v4664
    %v4682 = vsel %vm4680, %v4670, 2102212464
    %v4683 = vsel %vm4679, %v4667, %v4682
    %v4684 = vsel %vm4678, %v4681, %v4683
    %v4685 = vsel %vm4677, %v4664, %v4667
    %v4686 = vsel %vm4680, %v4673, 920167782
    %v4687 = vsel %vm4679, %v4670, %v4686
    %v4688 = vsel %vm4678, %v4685, %v4687
    %v4689 = vsel %vm4677, %v4667, %v4670
    %v4690 = vsel %vm4680, %v4676, 1326507024
    %v4691 = vsel %vm4679, %v4673, %v4690
    %v4692 = vsel %vm4678, %v4689, %v4691
    %v4693 = vshll.u32 %v4653, 8
    %v4694 = vmul.u32.u64.compose %v4693, %v4692
    %v4695 = vextract.low.u32 %v4694
    %v4696 = vextract.high.u32 %v4694
    %v4697 = vmul.u32.u64.compose %v4693, %v4688
    %v4698 = vextract.low.u32 %v4697
    %v4699 = vextract.high.u32 %v4697
    %v4700 = vmul.u32 %v4693, %v4684
    %v4701 = vadd.s32 %v4696, %v4698
    %vm4702 = vc.u32 %v4696, %v4698
    %v4703 = vadd.s32 %v4699, 1
    %v4704 = vsel %vm4702, %v4703, %v4699
    %v4705 = vadd.s32 %v4700, %v4704
    %v4706 = vadd.s32 %v4705, 536870912
    %v4707 = vshrl.u32 %v4706, 30
    %v4708 = vshll.u32 %v4707, 30
    %v4709 = vsub.s32 %v4705, %v4708
    %vm4710 = vcmp.lt.s32.totalorder %v4709, 0
    %v4711 = vsub.s32 0, %v4709
    %v4712 = vsel %vm4710, %v4711, %v4709
    %v4713 = vclz %v4712
    %v4714 = vsub.s32 %v4713, 2
    %vm4715 = vcmp.gt.s32.totalorder 0, %v4714
    %v4716 = vsel %vm4715, 0, %v4714
    %v4717 = vsub.s32 32, %v4716
    %v4718 = vshll.u32 %v4709, %v4716
    %v4719 = vshrl.u32 %v4701, %v4717
    %v4720 = vor.u32 %v4718, %v4719
    %v4721 = vsub.s32 4294967266, %v4716
    %v4722 = vadd.s32 %v4721, 127
    %v4723 = vshll.u32 %v4722, 23
    %v4724 = vor.u32 4788187, %v4723
    %v4725 = vand.u32 2147483647, %v4724
    %v4727 = vcvt.s32.f32 %v4720
    %v4728 = vmul.f32 %v4727, %v4725
    %v4729 = vxor.u32 %v4728, 2147483648
    %v4730 = vsel %vm4647, %v4729, %v4728
    %v4731 = vsub.s32 4, %v4707
    %v4732 = vsel %vm4647, %v4731, %v4707
    %v4733 = vsel %vm4646, %v1451, %v4730
    %v4734 = vsel %vm4646, 0, %v4732
    %v4735 = vcosq.f32.pop %v4733
    %v4736 = vsinq.f32.pop %v4733
    %vm4737 = vweird.f32 %v1451
    %v4738 = vand.u32 %v4734, 3
    %vm4739 = vcmp.lt.s32.totalorder %v4738, 2
    %vm4740 = vcmp.eq.s32.totalorder %v4738, 0
    %v4741 = vxor.u32 %v4736, 2147483648
    %v4742 = vsel %vm4740, %v4735, %v4741
    %vm4743 = vcmp.eq.s32.totalorder %v4738, 2
    %v4744 = vxor.u32 %v4735, 2147483648
    %v4745 = vsel %vm4743, %v4744, %v4736
    %v4746 = vsel %vm4739, %v4742, %v4745
    %v4747 = vsel %vm4737, nan, %v4746
    %v4748 = vadd.f32 %v1554, 1.0
    %v4749 = vadd.f32 %v1657, 1.0
    %v4750 = vadd.f32 %v1760, 1.0
    %v4751 = vadd.f32 %v1863, 1.0
    %v4752 = vadd.f32 %v1966, 1.0
    %v4753 = vadd.f32 %v2069, 1.0
    %v4754 = vadd.f32 %v2172, 1.0
    %v4755 = vadd.f32 %v2275, 1.0
    %v4756 = vadd.f32 %v2378, 1.0
    %v4757 = vadd.f32 %v2481, 1.0
    %v4758 = vadd.f32 %v2584, 1.0
    %v4759 = vadd.f32 %v2687, 1.0
    %v4760 = vadd.f32 %v2790, 1.0
    %v4761 = vadd.f32 %v2893, 1.0
    %v4762 = vadd.f32 %v2996, 1.0
    %v4763 = vadd.f32 %v3099, 1.0
    %v4764 = vadd.f32 %v3202, 1.0
    %v4765 = vadd.f32 %v3305, 1.0
    %v4766 = vadd.f32 %v3408, 1.0
    %v4767 = vadd.f32 %v3511, 1.0
    %v4768 = vadd.f32 %v3614, 1.0
    %v4769 = vadd.f32 %v3717, 1.0
    %v4770 = vadd.f32 %v3820, 1.0
    %v4771 = vadd.f32 %v3923, 1.0
    %v4772 = vadd.f32 %v4026, 1.0
    %v4773 = vadd.f32 %v4129, 1.0
    %v4774 = vadd.f32 %v4232, 1.0
    %v4775 = vadd.f32 %v4335, 1.0
    %v4776 = vadd.f32 %v4438, 1.0
    %v4777 = vadd.f32 %v4541, 1.0
    %v4778 = vadd.f32 %v4644, 1.0
    %v4779 = vadd.f32 %v4747, 1.0
    %v4780 = vmul.f32 %v4748, 0.5
    %v4781 = vmul.f32 %v4749, 0.5
    %v4782 = vmul.f32 %v4750, 0.5
    %v4783 = vmul.f32 %v4751, 0.5
    %v4784 = vmul.f32 %v4752, 0.5
    %v4785 = vmul.f32 %v4753, 0.5
    %v4786 = vmul.f32 %v4754, 0.5
    %v4787 = vmul.f32 %v4755, 0.5
    %v4788 = vmul.f32 %v4756, 0.5
    %v4789 = vmul.f32 %v4757, 0.5
    %v4790 = vmul.f32 %v4758, 0.5
    %v4791 = vmul.f32 %v4759, 0.5
    %v4792 = vmul.f32 %v4760, 0.5
    %v4793 = vmul.f32 %v4761, 0.5
    %v4794 = vmul.f32 %v4762, 0.5
    %v4795 = vmul.f32 %v4763, 0.5
    %v4796 = vmul.f32 %v4764, 0.5
    %v4797 = vmul.f32 %v4765, 0.5
    %v4798 = vmul.f32 %v4766, 0.5
    %v4799 = vmul.f32 %v4767, 0.5
    %v4800 = vmul.f32 %v4768, 0.5
    %v4801 = vmul.f32 %v4769, 0.5
    %v4802 = vmul.f32 %v4770, 0.5
    %v4803 = vmul.f32 %v4771, 0.5
    %v4804 = vmul.f32 %v4772, 0.5
    %v4805 = vmul.f32 %v4773, 0.5
    %v4806 = vmul.f32 %v4774, 0.5
    %v4807 = vmul.f32 %v4775, 0.5
    %v4808 = vmul.f32 %v4776, 0.5
    %v4809 = vmul.f32 %v4777, 0.5
    %v4810 = vmul.f32 %v4778, 0.5
    %v4811 = vmul.f32 %v4779, 0.5
    %4813 = vset.pattern.permute.xlu0 0
    %4814 = vperm.xlu0 %4813, %v4780
    %v4815 = vpop.permute.xlu0 %4814
    %4818 = vset.pattern.permute.xlu0 0
    %4819 = vperm.xlu0 %4818, %v4781
    %v4820 = vpop.permute.xlu0 %4819
    %4823 = vset.pattern.permute.xlu0 0
    %4824 = vperm.xlu0 %4823, %v4782
    %v4825 = vpop.permute.xlu0 %4824
    %4828 = vset.pattern.permute.xlu0 0
    %4829 = vperm.xlu0 %4828, %v4783
    %v4830 = vpop.permute.xlu0 %4829
    %4833 = vset.pattern.permute.xlu0 0
    %4834 = vperm.xlu0 %4833, %v4784
    %v4835 = vpop.permute.xlu0 %4834
    %4838 = vset.pattern.permute.xlu0 0
    %4839 = vperm.xlu0 %4838, %v4785
    %v4840 = vpop.permute.xlu0 %4839
    %4843 = vset.pattern.permute.xlu0 0
    %4844 = vperm.xlu0 %4843, %v4786
    %v4845 = vpop.permute.xlu0 %4844
    %4848 = vset.pattern.permute.xlu0 0
    %4849 = vperm.xlu0 %4848, %v4787
    %v4850 = vpop.permute.xlu0 %4849
    %4853 = vset.pattern.permute.xlu0 0
    %4854 = vperm.xlu0 %4853, %v4788
    %v4855 = vpop.permute.xlu0 %4854
    %4858 = vset.pattern.permute.xlu0 0
    %4859 = vperm.xlu0 %4858, %v4789
    %v4860 = vpop.permute.xlu0 %4859
    %4863 = vset.pattern.permute.xlu0 0
    %4864 = vperm.xlu0 %4863, %v4790
    %v4865 = vpop.permute.xlu0 %4864
    %4868 = vset.pattern.permute.xlu0 0
    %4869 = vperm.xlu0 %4868, %v4791
    %v4870 = vpop.permute.xlu0 %4869
    %4873 = vset.pattern.permute.xlu0 0
    %4874 = vperm.xlu0 %4873, %v4792
    %v4875 = vpop.permute.xlu0 %4874
    %4878 = vset.pattern.permute.xlu0 0
    %4879 = vperm.xlu0 %4878, %v4793
    %v4880 = vpop.permute.xlu0 %4879
    %4883 = vset.pattern.permute.xlu0 0
    %4884 = vperm.xlu0 %4883, %v4794
    %v4885 = vpop.permute.xlu0 %4884
    %4888 = vset.pattern.permute.xlu0 0
    %4889 = vperm.xlu0 %4888, %v4795
    %v4890 = vpop.permute.xlu0 %4889
    %4893 = vset.pattern.permute.xlu0 0
    %4894 = vperm.xlu0 %4893, %v4796
    %v4895 = vpop.permute.xlu0 %4894
    %4898 = vset.pattern.permute.xlu0 0
    %4899 = vperm.xlu0 %4898, %v4797
    %v4900 = vpop.permute.xlu0 %4899
    %4903 = vset.pattern.permute.xlu0 0
    %4904 = vperm.xlu0 %4903, %v4798
    %v4905 = vpop.permute.xlu0 %4904
    %4908 = vset.pattern.permute.xlu0 0
    %4909 = vperm.xlu0 %4908, %v4799
    %v4910 = vpop.permute.xlu0 %4909
    %4913 = vset.pattern.permute.xlu0 0
    %4914 = vperm.xlu0 %4913, %v4800
    %v4915 = vpop.permute.xlu0 %4914
    %4918 = vset.pattern.permute.xlu0 0
    %4919 = vperm.xlu0 %4918, %v4801
    %v4920 = vpop.permute.xlu0 %4919
    %4923 = vset.pattern.permute.xlu0 0
    %4924 = vperm.xlu0 %4923, %v4802
    %v4925 = vpop.permute.xlu0 %4924
    %4928 = vset.pattern.permute.xlu0 0
    %4929 = vperm.xlu0 %4928, %v4803
    %v4930 = vpop.permute.xlu0 %4929
    %4933 = vset.pattern.permute.xlu0 0
    %4934 = vperm.xlu0 %4933, %v4804
    %v4935 = vpop.permute.xlu0 %4934
    %4938 = vset.pattern.permute.xlu0 0
    %4939 = vperm.xlu0 %4938, %v4805
    %v4940 = vpop.permute.xlu0 %4939
    %4943 = vset.pattern.permute.xlu0 0
    %4944 = vperm.xlu0 %4943, %v4806
    %v4945 = vpop.permute.xlu0 %4944
    %4948 = vset.pattern.permute.xlu0 0
    %4949 = vperm.xlu0 %4948, %v4807
    %v4950 = vpop.permute.xlu0 %4949
    %4953 = vset.pattern.permute.xlu0 0
    %4954 = vperm.xlu0 %4953, %v4808
    %v4955 = vpop.permute.xlu0 %4954
    %4958 = vset.pattern.permute.xlu0 0
    %4959 = vperm.xlu0 %4958, %v4809
    %v4960 = vpop.permute.xlu0 %4959
    %4963 = vset.pattern.permute.xlu0 0
    %4964 = vperm.xlu0 %4963, %v4810
    %v4965 = vpop.permute.xlu0 %4964
    %4968 = vset.pattern.permute.xlu0 0
    %4969 = vperm.xlu0 %4968, %v4811
    %v4970 = vpop.permute.xlu0 %4969
    %v4972 = vmul.f32 %v1256, %v4815
    %v4973 = vmul.f32 %v1259, %v4820
    %v4974 = vmul.f32 %v1264, %v4825
    %v4975 = vmul.f32 %v1267, %v4830
    %v4976 = vmul.f32 %v1272, %v4835
    %v4977 = vmul.f32 %v1275, %v4840
    %v4978 = vmul.f32 %v1280, %v4845
    %v4979 = vmul.f32 %v1283, %v4850
    %v4980 = vmul.f32 %v1288, %v4855
    %v4981 = vmul.f32 %v1291, %v4860
    %v4982 = vmul.f32 %v1296, %v4865
    %v4983 = vmul.f32 %v1299, %v4870
    %v4984 = vmul.f32 %v1304, %v4875
    %v4985 = vmul.f32 %v1307, %v4880
    %v4986 = vmul.f32 %v1312, %v4885
    %v4987 = vmul.f32 %v1315, %v4890
    %v4988 = vmul.f32 %v1320, %v4895
    %v4989 = vmul.f32 %v1323, %v4900
    %v4990 = vmul.f32 %v1328, %v4905
    %v4991 = vmul.f32 %v1331, %v4910
    %v4992 = vmul.f32 %v1336, %v4915
    %v4993 = vmul.f32 %v1339, %v4920
    %v4994 = vmul.f32 %v1344, %v4925
    %v4995 = vmul.f32 %v1347, %v4930
    %v4996 = vmul.f32 %v1352, %v4935
    %v4997 = vmul.f32 %v1355, %v4940
    %v4998 = vmul.f32 %v1360, %v4945
    %v4999 = vmul.f32 %v1363, %v4950
    %v5000 = vmul.f32 %v1368, %v4955
    %v5001 = vmul.f32 %v1371, %v4960
    %v5002 = vmul.f32 %v1376, %v4965
    %v5003 = vmul.f32 %v1379, %v4970
    %v5004 = vlaneseq
    %v5005 = vand.u32 %v5004, 127
    %v5006 = vld [vmem:[%s2] sm:$0xff]
    %v5007 = vld [vmem:[%s2 + $0x8] sm:$0xff]
    %v5008 = vld [vmem:[%s2 + $0x10] sm:$0xff]
    %v5009 = vld [vmem:[%s2 + $0x18] sm:$0xff]
    %v5010 = vld [vmem:[%s2 + $0x20] sm:$0xff]
    %v5011 = vld [vmem:[%s2 + $0x28] sm:$0xff]
    %v5012 = vld [vmem:[%s2 + $0x30] sm:$0xff]
    %v5013 = vld [vmem:[%s2 + $0x38] sm:$0xff]
    %v5014 = vld [vmem:[%s2 + $0x40] sm:$0xff]
    %v5015 = vld [vmem:[%s2 + $0x48] sm:$0xff]
    %v5016 = vld [vmem:[%s2 + $0x50] sm:$0xff]
    %v5017 = vld [vmem:[%s2 + $0x58] sm:$0xff]
    %v5018 = vld [vmem:[%s2 + $0x60] sm:$0xff]
    %v5019 = vld [vmem:[%s2 + $0x68] sm:$0xff]
    %v5020 = vld [vmem:[%s2 + $0x70] sm:$0xff]
    %v5021 = vld [vmem:[%s2 + $0x78] sm:$0xff]
    %v5022 = vld [vmem:[%s2 + $0x80] sm:$0xff]
    %v5023 = vld [vmem:[%s2 + $0x88] sm:$0xff]
    %v5024 = vld [vmem:[%s2 + $0x90] sm:$0xff]
    %v5025 = vld [vmem:[%s2 + $0x98] sm:$0xff]
    %v5026 = vld [vmem:[%s2 + $0xa0] sm:$0xff]
    %v5027 = vld [vmem:[%s2 + $0xa8] sm:$0xff]
    %v5028 = vld [vmem:[%s2 + $0xb0] sm:$0xff]
    %v5029 = vld [vmem:[%s2 + $0xb8] sm:$0xff]
    %v5030 = vld [vmem:[%s2 + $0xc0] sm:$0xff]
    %v5031 = vld [vmem:[%s2 + $0xc8] sm:$0xff]
    %v5032 = vld [vmem:[%s2 + $0xd0] sm:$0xff]
    %v5033 = vld [vmem:[%s2 + $0xd8] sm:$0xff]
    %v5034 = vld [vmem:[%s2 + $0xe0] sm:$0xff]
    %v5035 = vld [vmem:[%s2 + $0xe8] sm:$0xff]
    %v5036 = vld [vmem:[%s2 + $0xf0] sm:$0xff]
    %v5037 = vld [vmem:[%s2 + $0xf8] sm:$0xff]
    %5038 = vset.pattern.permute.xlu0 0
    %5039 = vperm.xlu0 %5038, %v5006
    %v5040 = vpop.permute.xlu0 %5039
    %5041 = vset.pattern.permute.xlu0 0
    %5042 = vperm.xlu0 %5041, %v5007
    %v5043 = vpop.permute.xlu0 %5042
    %5044 = vset.pattern.permute.xlu0 0
    %5045 = vperm.xlu0 %5044, %v5008
    %v5046 = vpop.permute.xlu0 %5045
    %5047 = vset.pattern.permute.xlu0 0
    %5048 = vperm.xlu0 %5047, %v5009
    %v5049 = vpop.permute.xlu0 %5048
    %5050 = vset.pattern.permute.xlu0 0
    %5051 = vperm.xlu0 %5050, %v5010
    %v5052 = vpop.permute.xlu0 %5051
    %5053 = vset.pattern.permute.xlu0 0
    %5054 = vperm.xlu0 %5053, %v5011
    %v5055 = vpop.permute.xlu0 %5054
    %5056 = vset.pattern.permute.xlu0 0
    %5057 = vperm.xlu0 %5056, %v5012
    %v5058 = vpop.permute.xlu0 %5057
    %5059 = vset.pattern.permute.xlu0 0
    %5060 = vperm.xlu0 %5059, %v5013
    %v5061 = vpop.permute.xlu0 %5060
    %5062 = vset.pattern.permute.xlu0 0
    %5063 = vperm.xlu0 %5062, %v5014
    %v5064 = vpop.permute.xlu0 %5063
    %5065 = vset.pattern.permute.xlu0 0
    %5066 = vperm.xlu0 %5065, %v5015
    %v5067 = vpop.permute.xlu0 %5066
    %5068 = vset.pattern.permute.xlu0 0
    %5069 = vperm.xlu0 %5068, %v5016
    %v5070 = vpop.permute.xlu0 %5069
    %5071 = vset.pattern.permute.xlu0 0
    %5072 = vperm.xlu0 %5071, %v5017
    %v5073 = vpop.permute.xlu0 %5072
    %5074 = vset.pattern.permute.xlu0 0
    %5075 = vperm.xlu0 %5074, %v5018
    %v5076 = vpop.permute.xlu0 %5075
    %5077 = vset.pattern.permute.xlu0 0
    %5078 = vperm.xlu0 %5077, %v5019
    %v5079 = vpop.permute.xlu0 %5078
    %5080 = vset.pattern.permute.xlu0 0
    %5081 = vperm.xlu0 %5080, %v5020
    %v5082 = vpop.permute.xlu0 %5081
    %5083 = vset.pattern.permute.xlu0 0
    %5084 = vperm.xlu0 %5083, %v5021
    %v5085 = vpop.permute.xlu0 %5084
    %5086 = vset.pattern.permute.xlu0 0
    %5087 = vperm.xlu0 %5086, %v5022
    %v5088 = vpop.permute.xlu0 %5087
    %5089 = vset.pattern.permute.xlu0 0
    %5090 = vperm.xlu0 %5089, %v5023
    %v5091 = vpop.permute.xlu0 %5090
    %5092 = vset.pattern.permute.xlu0 0
    %5093 = vperm.xlu0 %5092, %v5024
    %v5094 = vpop.permute.xlu0 %5093
    %5095 = vset.pattern.permute.xlu0 0
    %5096 = vperm.xlu0 %5095, %v5025
    %v5097 = vpop.permute.xlu0 %5096
    %5098 = vset.pattern.permute.xlu0 0
    %5099 = vperm.xlu0 %5098, %v5026
    %v5100 = vpop.permute.xlu0 %5099
    %5101 = vset.pattern.permute.xlu0 0
    %5102 = vperm.xlu0 %5101, %v5027
    %v5103 = vpop.permute.xlu0 %5102
    %5104 = vset.pattern.permute.xlu0 0
    %5105 = vperm.xlu0 %5104, %v5028
    %v5106 = vpop.permute.xlu0 %5105
    %5107 = vset.pattern.permute.xlu0 0
    %5108 = vperm.xlu0 %5107, %v5029
    %v5109 = vpop.permute.xlu0 %5108
    %5110 = vset.pattern.permute.xlu0 0
    %5111 = vperm.xlu0 %5110, %v5030
    %v5112 = vpop.permute.xlu0 %5111
    %5113 = vset.pattern.permute.xlu0 0
    %5114 = vperm.xlu0 %5113, %v5031
    %v5115 = vpop.permute.xlu0 %5114
    %5116 = vset.pattern.permute.xlu0 0
    %5117 = vperm.xlu0 %5116, %v5032
    %v5118 = vpop.permute.xlu0 %5117
    %5119 = vset.pattern.permute.xlu0 0
    %5120 = vperm.xlu0 %5119, %v5033
    %v5121 = vpop.permute.xlu0 %5120
    %5122 = vset.pattern.permute.xlu0 0
    %5123 = vperm.xlu0 %5122, %v5034
    %v5124 = vpop.permute.xlu0 %5123
    %5125 = vset.pattern.permute.xlu0 0
    %5126 = vperm.xlu0 %5125, %v5035
    %v5127 = vpop.permute.xlu0 %5126
    %5128 = vset.pattern.permute.xlu0 0
    %5129 = vperm.xlu0 %5128, %v5036
    %v5130 = vpop.permute.xlu0 %5129
    %5131 = vset.pattern.permute.xlu0 0
    %5132 = vperm.xlu0 %5131, %v5037
    %v5133 = vpop.permute.xlu0 %5132
    %vm5134 = vcmp.eq.s32.totalorder %v5005, %v5040
    %vm5135 = vcmp.eq.s32.totalorder %v5005, %v5043
    %vm5136 = vcmp.eq.s32.totalorder %v5005, %v5046
    %vm5137 = vcmp.eq.s32.totalorder %v5005, %v5049
    %vm5138 = vcmp.eq.s32.totalorder %v5005, %v5052
    %vm5139 = vcmp.eq.s32.totalorder %v5005, %v5055
    %vm5140 = vcmp.eq.s32.totalorder %v5005, %v5058
    %vm5141 = vcmp.eq.s32.totalorder %v5005, %v5061
    %vm5142 = vcmp.eq.s32.totalorder %v5005, %v5064
    %vm5143 = vcmp.eq.s32.totalorder %v5005, %v5067
    %vm5144 = vcmp.eq.s32.totalorder %v5005, %v5070
    %vm5145 = vcmp.eq.s32.totalorder %v5005, %v5073
    %vm5146 = vcmp.eq.s32.totalorder %v5005, %v5076
    %vm5147 = vcmp.eq.s32.totalorder %v5005, %v5079
    %vm5148 = vcmp.eq.s32.totalorder %v5005, %v5082
    %vm5149 = vcmp.eq.s32.totalorder %v5005, %v5085
    %vm5150 = vcmp.eq.s32.totalorder %v5005, %v5088
    %vm5151 = vcmp.eq.s32.totalorder %v5005, %v5091
    %vm5152 = vcmp.eq.s32.totalorder %v5005, %v5094
    %vm5153 = vcmp.eq.s32.totalorder %v5005, %v5097
    %vm5154 = vcmp.eq.s32.totalorder %v5005, %v5100
    %vm5155 = vcmp.eq.s32.totalorder %v5005, %v5103
    %vm5156 = vcmp.eq.s32.totalorder %v5005, %v5106
    %vm5157 = vcmp.eq.s32.totalorder %v5005, %v5109
    %vm5158 = vcmp.eq.s32.totalorder %v5005, %v5112
    %vm5159 = vcmp.eq.s32.totalorder %v5005, %v5115
    %vm5160 = vcmp.eq.s32.totalorder %v5005, %v5118
    %vm5161 = vcmp.eq.s32.totalorder %v5005, %v5121
    %vm5162 = vcmp.eq.s32.totalorder %v5005, %v5124
    %vm5163 = vcmp.eq.s32.totalorder %v5005, %v5127
    %vm5164 = vcmp.eq.s32.totalorder %v5005, %v5130
    %vm5165 = vcmp.eq.s32.totalorder %v5005, %v5133
    %v5166 = vsel %vm5134, 1, 0
    %v5167 = vsel %vm5135, 1, 0
    %v5168 = vsel %vm5136, 1, 0
    %v5169 = vsel %vm5137, 1, 0
    %v5170 = vsel %vm5138, 1, 0
    %v5171 = vsel %vm5139, 1, 0
    %v5172 = vsel %vm5140, 1, 0
    %v5173 = vsel %vm5141, 1, 0
    %v5174 = vsel %vm5142, 1, 0
    %v5175 = vsel %vm5143, 1, 0
    %v5176 = vsel %vm5144, 1, 0
    %v5177 = vsel %vm5145, 1, 0
    %v5178 = vsel %vm5146, 1, 0
    %v5179 = vsel %vm5147, 1, 0
    %v5180 = vsel %vm5148, 1, 0
    %v5181 = vsel %vm5149, 1, 0
    %v5182 = vsel %vm5150, 1, 0
    %v5183 = vsel %vm5151, 1, 0
    %v5184 = vsel %vm5152, 1, 0
    %v5185 = vsel %vm5153, 1, 0
    %v5186 = vsel %vm5154, 1, 0
    %v5187 = vsel %vm5155, 1, 0
    %v5188 = vsel %vm5156, 1, 0
    %v5189 = vsel %vm5157, 1, 0
    %v5190 = vsel %vm5158, 1, 0
    %v5191 = vsel %vm5159, 1, 0
    %v5192 = vsel %vm5160, 1, 0
    %v5193 = vsel %vm5161, 1, 0
    %v5194 = vsel %vm5162, 1, 0
    %v5195 = vsel %vm5163, 1, 0
    %v5196 = vsel %vm5164, 1, 0
    %v5197 = vsel %vm5165, 1, 0
    %v5198 = vcvt.s32.f32 %v5166
    %v5199 = vcvt.s32.f32 %v5167
    %v5200 = vcvt.s32.f32 %v5168
    %v5201 = vcvt.s32.f32 %v5169
    %v5202 = vcvt.s32.f32 %v5170
    %v5203 = vcvt.s32.f32 %v5171
    %v5204 = vcvt.s32.f32 %v5172
    %v5205 = vcvt.s32.f32 %v5173
    %v5206 = vcvt.s32.f32 %v5174
    %v5207 = vcvt.s32.f32 %v5175
    %v5208 = vcvt.s32.f32 %v5176
    %v5209 = vcvt.s32.f32 %v5177
    %v5210 = vcvt.s32.f32 %v5178
    %v5211 = vcvt.s32.f32 %v5179
    %v5212 = vcvt.s32.f32 %v5180
    %v5213 = vcvt.s32.f32 %v5181
    %v5214 = vcvt.s32.f32 %v5182
    %v5215 = vcvt.s32.f32 %v5183
    %v5216 = vcvt.s32.f32 %v5184
    %v5217 = vcvt.s32.f32 %v5185
    %v5218 = vcvt.s32.f32 %v5186
    %v5219 = vcvt.s32.f32 %v5187
    %v5220 = vcvt.s32.f32 %v5188
    %v5221 = vcvt.s32.f32 %v5189
    %v5222 = vcvt.s32.f32 %v5190
    %v5223 = vcvt.s32.f32 %v5191
    %v5224 = vcvt.s32.f32 %v5192
    %v5225 = vcvt.s32.f32 %v5193
    %v5226 = vcvt.s32.f32 %v5194
    %v5227 = vcvt.s32.f32 %v5195
    %v5228 = vcvt.s32.f32 %v5196
    %v5229 = vcvt.s32.f32 %v5197
    %v5230 = vpack.c.bf16 %v5199, %v5198
    %v5231 = vpack.c.bf16 %v5201, %v5200
    %v5232 = vpack.c.bf16 %v5203, %v5202
    %v5233 = vpack.c.bf16 %v5205, %v5204
    %v5234 = vpack.c.bf16 %v5207, %v5206
    %v5235 = vpack.c.bf16 %v5209, %v5208
    %v5236 = vpack.c.bf16 %v5211, %v5210
    %v5237 = vpack.c.bf16 %v5213, %v5212
    %v5238 = vpack.c.bf16 %v5215, %v5214
    %v5239 = vpack.c.bf16 %v5217, %v5216
    %v5240 = vpack.c.bf16 %v5219, %v5218
    %v5241 = vpack.c.bf16 %v5221, %v5220
    %v5242 = vpack.c.bf16 %v5223, %v5222
    %v5243 = vpack.c.bf16 %v5225, %v5224
    %v5244 = vpack.c.bf16 %v5227, %v5226
    %v5245 = vpack.c.bf16 %v5229, %v5228
    %v5246 = vld [vmem:[#allocation2] sm:$0xf]
    %vm5247 = vcmask 64512
    %v5249 = vsel %vm5247, %v5230, 0
    %v5252 = vsel %vm5247, %v5231, 0
    %v5255 = vsel %vm5247, %v5232, 0
    %v5258 = vsel %vm5247, %v5233, 0
    %v5261 = vsel %vm5247, %v5234, 0
    %v5264 = vsel %vm5247, %v5235, 0
    %v5267 = vsel %vm5247, %v5236, 0
    %v5270 = vsel %vm5247, %v5237, 0
    %v5273 = vsel %vm5247, %v5238, 0
    %v5276 = vsel %vm5247, %v5239, 0
    %v5279 = vsel %vm5247, %v5240, 0
    %v5282 = vsel %vm5247, %v5241, 0
    %v5285 = vsel %vm5247, %v5242, 0
    %v5288 = vsel %vm5247, %v5243, 0
    %v5291 = vsel %vm5247, %v5244, 0
    %v5294 = vsel %vm5247, %v5245, 0
    %vm5296 = vcmask 1043456
    %v5298 = vsel %vm5296, %v5246, 0
    %5300 = vmatprep.subr.bf16.mxu0 0
    %5301 = vmatpush1.bf16.msra.mxu0 0
    %5302 = vmatprep.subr.bf16.mxu0 0
    %5303 = vmatpush1.bf16.msra.mxu0 0
    %5304 = vmatprep.subr.bf16.mxu0 0
    %5305 = vmatpush1.bf16.msra.mxu0 0
    %5306 = vmatprep.subr.bf16.mxu0 0
    %5307 = vmatpush1.bf16.msra.mxu0 0
    %5308 = vmatprep.subr.bf16.mxu0 0
    %5309 = vmatpush1.bf16.msra.mxu0 0
    %5310 = vmatprep.subr.bf16.mxu0 0
    %5311 = vmatpush1.bf16.msra.mxu0 0
    %5312 = vmatprep.subr.bf16.mxu0 0
    %5313 = vmatpush1.bf16.msra.mxu0 0
    %5314 = vmatprep.subr.bf16.mxu0 0
    %5315 = vmatpush1.bf16.msra.mxu0 %v5298
    %5316 = vmatprep.subr.bf16.mxu0 0
    %5317 = vmatpush2.bf16.msra.mxu0 0
    %5318 = vmatprep.subr.bf16.mxu0 0
    %5319 = vmatpush2.bf16.msra.mxu0 0
    %5320 = vmatprep.subr.bf16.mxu0 0
    %5321 = vmatpush2.bf16.msra.mxu0 0
    %5322 = vmatprep.subr.bf16.mxu0 0
    %5323 = vmatpush2.bf16.msra.mxu0 0
    %5324 = vmatprep.subr.bf16.mxu0 0
    %5325 = vmatpush2.bf16.msra.mxu0 0
    %5326 = vmatprep.subr.bf16.mxu0 0
    %5327 = vmatpush2.bf16.msra.mxu0 0
    %5328 = vmatprep.subr.bf16.mxu0 0
    %5329 = vmatpush2.bf16.msra.mxu0 0
    %5330 = vmatprep.subr.bf16.mxu0 0
    %5331 = vmatpush2.bf16.msra.mxu0 0
    %5332 = vmatprep.mubr.bf16.mxu0 0
    %5333 = vmatmul.mubr.bf16.gmra.mxu0 %v5249
    %v5334 = vpop.f32.mrf.mxu0
    %v5335 = vadd.f32 0.0, %v5334
    %v5336 = vpop.f32.mrf.mxu0
    %v5337 = vpop.f32.mrf.mxu0
    %v5338 = vadd.f32 0.0, %v5337
    %v5339 = vpop.f32.mrf.mxu0
    %5340 = vmatprep.mubr.bf16.mxu0 0
    %5341 = vmatmul.mubr.bf16.gmra.mxu0 %v5252
    %v5342 = vpop.f32.mrf.mxu0
    %v5343 = vadd.f32 0.0, %v5342
    %v5344 = vpop.f32.mrf.mxu0
    %v5345 = vpop.f32.mrf.mxu0
    %v5346 = vadd.f32 0.0, %v5345
    %v5347 = vpop.f32.mrf.mxu0
    %5348 = vmatprep.mubr.bf16.mxu0 0
    %5349 = vmatmul.mubr.bf16.gmra.mxu0 %v5255
    %v5350 = vpop.f32.mrf.mxu0
    %v5351 = vadd.f32 0.0, %v5350
    %v5352 = vpop.f32.mrf.mxu0
    %v5353 = vpop.f32.mrf.mxu0
    %v5354 = vadd.f32 0.0, %v5353
    %v5355 = vpop.f32.mrf.mxu0
    %5356 = vmatprep.mubr.bf16.mxu0 0
    %5357 = vmatmul.mubr.bf16.gmra.mxu0 %v5258
    %v5358 = vpop.f32.mrf.mxu0
    %v5359 = vadd.f32 0.0, %v5358
    %v5360 = vpop.f32.mrf.mxu0
    %v5361 = vpop.f32.mrf.mxu0
    %v5362 = vadd.f32 0.0, %v5361
    %v5363 = vpop.f32.mrf.mxu0
    %5364 = vmatprep.mubr.bf16.mxu0 0
    %5365 = vmatmul.mubr.bf16.gmra.mxu0 %v5261
    %v5366 = vpop.f32.mrf.mxu0
    %v5367 = vadd.f32 0.0, %v5366
    %v5368 = vpop.f32.mrf.mxu0
    %v5369 = vpop.f32.mrf.mxu0
    %v5370 = vadd.f32 0.0, %v5369
    %v5371 = vpop.f32.mrf.mxu0
    %5372 = vmatprep.mubr.bf16.mxu0 0
    %5373 = vmatmul.mubr.bf16.gmra.mxu0 %v5264
    %v5374 = vpop.f32.mrf.mxu0
    %v5375 = vadd.f32 0.0, %v5374
    %v5376 = vpop.f32.mrf.mxu0
    %v5377 = vpop.f32.mrf.mxu0
    %v5378 = vadd.f32 0.0, %v5377
    %v5379 = vpop.f32.mrf.mxu0
    %5380 = vmatprep.mubr.bf16.mxu0 0
    %5381 = vmatmul.mubr.bf16.gmra.mxu0 %v5267
    %v5382 = vpop.f32.mrf.mxu0
    %v5383 = vadd.f32 0.0, %v5382
    %v5384 = vpop.f32.mrf.mxu0
    %v5385 = vpop.f32.mrf.mxu0
    %v5386 = vadd.f32 0.0, %v5385
    %v5387 = vpop.f32.mrf.mxu0
    %5388 = vmatprep.mubr.bf16.mxu0 0
    %5389 = vmatmul.mubr.bf16.gmra.mxu0 %v5270
    %v5390 = vpop.f32.mrf.mxu0
    %v5391 = vadd.f32 0.0, %v5390
    %v5392 = vpop.f32.mrf.mxu0
    %v5393 = vpop.f32.mrf.mxu0
    %v5394 = vadd.f32 0.0, %v5393
    %v5395 = vpop.f32.mrf.mxu0
    %5396 = vmatprep.mubr.bf16.mxu0 0
    %5397 = vmatmul.mubr.bf16.gmra.mxu0 %v5273
    %v5398 = vpop.f32.mrf.mxu0
    %v5399 = vadd.f32 0.0, %v5398
    %v5400 = vpop.f32.mrf.mxu0
    %v5401 = vpop.f32.mrf.mxu0
    %v5402 = vadd.f32 0.0, %v5401
    %v5403 = vpop.f32.mrf.mxu0
    %5404 = vmatprep.mubr.bf16.mxu0 0
    %5405 = vmatmul.mubr.bf16.gmra.mxu0 %v5276
    %v5406 = vpop.f32.mrf.mxu0
    %v5407 = vadd.f32 0.0, %v5406
    %v5408 = vpop.f32.mrf.mxu0
    %v5409 = vpop.f32.mrf.mxu0
    %v5410 = vadd.f32 0.0, %v5409
    %v5411 = vpop.f32.mrf.mxu0
    %5412 = vmatprep.mubr.bf16.mxu0 0
    %5413 = vmatmul.mubr.bf16.gmra.mxu0 %v5279
    %v5414 = vpop.f32.mrf.mxu0
    %v5415 = vadd.f32 0.0, %v5414
    %v5416 = vpop.f32.mrf.mxu0
    %v5417 = vpop.f32.mrf.mxu0
    %v5418 = vadd.f32 0.0, %v5417
    %v5419 = vpop.f32.mrf.mxu0
    %5420 = vmatprep.mubr.bf16.mxu0 0
    %5421 = vmatmul.mubr.bf16.gmra.mxu0 %v5282
    %v5422 = vpop.f32.mrf.mxu0
    %v5423 = vadd.f32 0.0, %v5422
    %v5424 = vpop.f32.mrf.mxu0
    %v5425 = vpop.f32.mrf.mxu0
    %v5426 = vadd.f32 0.0, %v5425
    %v5427 = vpop.f32.mrf.mxu0
    %5428 = vmatprep.mubr.bf16.mxu0 0
    %5429 = vmatmul.mubr.bf16.gmra.mxu0 %v5285
    %v5430 = vpop.f32.mrf.mxu0
    %v5431 = vadd.f32 0.0, %v5430
    %v5432 = vpop.f32.mrf.mxu0
    %v5433 = vpop.f32.mrf.mxu0
    %v5434 = vadd.f32 0.0, %v5433
    %v5435 = vpop.f32.mrf.mxu0
    %5436 = vmatprep.mubr.bf16.mxu0 0
    %5437 = vmatmul.mubr.bf16.gmra.mxu0 %v5288
    %v5438 = vpop.f32.mrf.mxu0
    %v5439 = vadd.f32 0.0, %v5438
    %v5440 = vpop.f32.mrf.mxu0
    %v5441 = vpop.f32.mrf.mxu0
    %v5442 = vadd.f32 0.0, %v5441
    %v5443 = vpop.f32.mrf.mxu0
    %5444 = vmatprep.mubr.bf16.mxu0 0
    %5445 = vmatmul.mubr.bf16.gmra.mxu0 %v5291
    %v5446 = vpop.f32.mrf.mxu0
    %v5447 = vadd.f32 0.0, %v5446
    %v5448 = vpop.f32.mrf.mxu0
    %v5449 = vpop.f32.mrf.mxu0
    %v5450 = vadd.f32 0.0, %v5449
    %v5451 = vpop.f32.mrf.mxu0
    %5452 = vmatprep.mubr.bf16.mxu0 0
    %5453 = vmatmul.mubr.bf16.gmra.mxu0 %v5294
    %v5454 = vpop.f32.mrf.mxu0
    %v5455 = vadd.f32 0.0, %v5454
    %v5456 = vpop.f32.mrf.mxu0
    %v5457 = vpop.f32.mrf.mxu0
    %v5458 = vadd.f32 0.0, %v5457
    %v5459 = vpop.f32.mrf.mxu0
    %5460 = vdwg.mxu0
    %v5461 = vmul.f32 %v5335, %v4972
    %v5462 = vmul.f32 %v5338, %v4973
    %v5463 = vmul.f32 %v5343, %v4974
    %v5464 = vmul.f32 %v5346, %v4975
    %v5465 = vmul.f32 %v5351, %v4976
    %v5466 = vmul.f32 %v5354, %v4977
    %v5467 = vmul.f32 %v5359, %v4978
    %v5468 = vmul.f32 %v5362, %v4979
    %v5469 = vmul.f32 %v5367, %v4980
    %v5470 = vmul.f32 %v5370, %v4981
    %v5471 = vmul.f32 %v5375, %v4982
    %v5472 = vmul.f32 %v5378, %v4983
    %v5473 = vmul.f32 %v5383, %v4984
    %v5474 = vmul.f32 %v5386, %v4985
    %v5475 = vmul.f32 %v5391, %v4986
    %v5476 = vmul.f32 %v5394, %v4987
    %v5477 = vmul.f32 %v5399, %v4988
    %v5478 = vmul.f32 %v5402, %v4989
    %v5479 = vmul.f32 %v5407, %v4990
    %v5480 = vmul.f32 %v5410, %v4991
    %v5481 = vmul.f32 %v5415, %v4992
    %v5482 = vmul.f32 %v5418, %v4993
    %v5483 = vmul.f32 %v5423, %v4994
    %v5484 = vmul.f32 %v5426, %v4995
    %v5485 = vmul.f32 %v5431, %v4996
    %v5486 = vmul.f32 %v5434, %v4997
    %v5487 = vmul.f32 %v5439, %v4998
    %v5488 = vmul.f32 %v5442, %v4999
    %v5489 = vmul.f32 %v5447, %v5000
    %v5490 = vmul.f32 %v5450, %v5001
    %v5491 = vmul.f32 %v5455, %v5002
    %v5492 = vmul.f32 %v5458, %v5003
    %v5493 = vpack.c.bf16 %v5462, %v5461
    %v5494 = vpack.c.bf16 %v5464, %v5463
    %v5495 = vpack.c.bf16 %v5466, %v5465
    %v5496 = vpack.c.bf16 %v5468, %v5467
    %v5497 = vpack.c.bf16 %v5470, %v5469
    %v5498 = vpack.c.bf16 %v5472, %v5471
    %v5499 = vpack.c.bf16 %v5474, %v5473
    %v5500 = vpack.c.bf16 %v5476, %v5475
    %v5501 = vpack.c.bf16 %v5478, %v5477
    %v5502 = vpack.c.bf16 %v5480, %v5479
    %v5503 = vpack.c.bf16 %v5482, %v5481
    %v5504 = vpack.c.bf16 %v5484, %v5483
    %v5505 = vpack.c.bf16 %v5486, %v5485
    %v5506 = vpack.c.bf16 %v5488, %v5487
    %v5507 = vpack.c.bf16 %v5490, %v5489
    %v5508 = vpack.c.bf16 %v5492, %v5491
    %v5509 = vlaneseq
    %v5510 = vshrl.u32 %v5509, 7
    %v5511 = vld [vmem:[%s3] sm:$0x3]
    %v5512 = vlaneseq
    %v5513 = vshrl.u32 %v5512, 7
    %v5514 = vsub.s32 0, %v5513
    %v5515 = vrot.slane %v5511, %v5514
    %v5516 = vlaneseq
    %v5517 = vshrl.u32 %v5516, 7
    %v5518 = vsub.s32 1, %v5517
    %v5519 = vrot.slane %v5511, %v5518
    %vm5520 = vcmp.eq.s32.totalorder %v5510, %v5515
    %vm5521 = vcmp.eq.s32.totalorder %v5510, %v5519
    %v5522 = vsel %vm5520, 1, 0
    %v5523 = vsel %vm5521, 1, 0
    %v5524 = vcvt.s32.f32 %v5522
    %v5525 = vcvt.s32.f32 %v5523
    %v5526 = vpack.c.bf16 %v5524, %v5524
    %v5527 = vpack.c.bf16 %v5525, %v5525
    %v5528 = vld [vmem:[#allocation3] sm:$0xff]
    %5529 = vmatprep.subr.bf16.mxu0 0
    %5530 = vmatpush1.bf16.msra.mxu0 %v5500
    %5531 = vmatprep.subr.bf16.mxu0 0
    %5532 = vmatpush1.bf16.msra.mxu0 %v5499
    %5533 = vmatprep.subr.bf16.mxu0 0
    %5534 = vmatpush1.bf16.msra.mxu0 %v5498
    %5535 = vmatprep.subr.bf16.mxu0 0
    %5536 = vmatpush1.bf16.msra.mxu0 %v5497
    %5537 = vmatprep.subr.bf16.mxu0 0
    %5538 = vmatpush1.bf16.msra.mxu0 %v5496
    %5539 = vmatprep.subr.bf16.mxu0 0
    %5540 = vmatpush1.bf16.msra.mxu0 %v5495
    %5541 = vmatprep.subr.bf16.mxu0 0
    %5542 = vmatpush1.bf16.msra.mxu0 %v5494
    %5543 = vmatprep.subr.bf16.mxu0 0
    %5544 = vmatpush1.bf16.msra.mxu0 %v5493
    %5545 = vmatprep.subr.bf16.mxu0 0
    %5546 = vmatpush2.bf16.msra.mxu0 %v5508
    %5547 = vmatprep.subr.bf16.mxu0 0
    %5548 = vmatpush2.bf16.msra.mxu0 %v5507
    %5549 = vmatprep.subr.bf16.mxu0 0
    %5550 = vmatpush2.bf16.msra.mxu0 %v5506
    %5551 = vmatprep.subr.bf16.mxu0 0
    %5552 = vmatpush2.bf16.msra.mxu0 %v5505
    %5553 = vmatprep.subr.bf16.mxu0 0
    %5554 = vmatpush2.bf16.msra.mxu0 %v5504
    %5555 = vmatprep.subr.bf16.mxu0 0
    %5556 = vmatpush2.bf16.msra.mxu0 %v5503
    %5557 = vmatprep.subr.bf16.mxu0 0
    %5558 = vmatpush2.bf16.msra.mxu0 %v5502
    %5559 = vmatprep.subr.bf16.mxu0 0
    %5560 = vmatpush2.bf16.msra.mxu0 %v5501
    %5561 = vmatprep.mubr.bf16.mxu0 %v5527
    %5562 = vmatmul.mubr.bf16.gmra.mxu0 %v5526
    %v5563 = vpop.f32.mrf.mxu0
    %v5564 = vadd.f32 0.0, %v5563
    %v5565 = vpop.f32.mrf.mxu0
    %v5566 = vpop.f32.mrf.mxu0
    %v5567 = vpop.f32.mrf.mxu0
    %5568 = vdwg.mxu0
    %v5569 = vadd.f32 %v5528, %v5564
    %5570 = vst [vmem:[#allocation3] sm:$0xff] %v5569
    // Predicated region
    $region66: #{tpu_custom_call.1} parent=1 // pred_check
      %p5571 = pneg %p53
    $region67: #{tpu_custom_call.1} parent=1 // pred_check_branch
      %5573 = sbr.rel (%p5571) target = $region69
    $region68: #{tpu_custom_call.1} parent=1 // pred_region
      %v5574 = vld [vmem:[#allocation3] sm:$0xff]
      %v5575 = vpack.c.bf16 %v5574, %v5574
      %v5576 = vld [vmem:[%s11] sm:$0xf]
      %v5577 = vld [vmem:[%s11 + $0x4] sm:$0xf]
      %v5578 = vld [vmem:[%s11 + $0x8] sm:$0xf]
      %v5579 = vld [vmem:[%s11 + $0xc] sm:$0xf]
      %v5580 = vld [vmem:[%s11 + $0x10] sm:$0xf]
      %v5581 = vld [vmem:[%s11 + $0x14] sm:$0xf]
      %v5582 = vld [vmem:[%s11 + $0x18] sm:$0xf]
      %v5583 = vld [vmem:[%s11 + $0x1c] sm:$0xf]
      %v5584 = vld [vmem:[%s11 + $0x20] sm:$0xf]
      %v5585 = vld [vmem:[%s11 + $0x24] sm:$0xf]
      %v5586 = vld [vmem:[%s11 + $0x28] sm:$0xf]
      %v5587 = vld [vmem:[%s11 + $0x2c] sm:$0xf]
      %v5588 = vld [vmem:[%s11 + $0x30] sm:$0xf]
      %v5589 = vld [vmem:[%s11 + $0x34] sm:$0xf]
      %v5590 = vld [vmem:[%s11 + $0x38] sm:$0xf]
      %v5591 = vld [vmem:[%s11 + $0x3c] sm:$0xf]
      %v5592 = vld [vmem:[%s12] sm:$0x1]
      %v5594 = vlaneseq
      %v5595 = vshrl.u32 %v5594, 7
      %v5596 = vsub.s32 0, %v5595
      %v5597 = vrot.slane %v5592, %v5596
      %v5615 = vunpack.c.l.b16 %v5576
      %v5616 = vunpack.c.l.b16 %v5577
      %v5617 = vunpack.c.l.b16 %v5578
      %v5618 = vunpack.c.l.b16 %v5579
      %v5619 = vunpack.c.l.b16 %v5580
      %v5620 = vunpack.c.l.b16 %v5581
      %v5621 = vunpack.c.l.b16 %v5582
      %v5622 = vunpack.c.l.b16 %v5583
      %v5623 = vunpack.c.l.b16 %v5584
      %v5624 = vunpack.c.l.b16 %v5585
      %v5625 = vunpack.c.l.b16 %v5586
      %v5626 = vunpack.c.l.b16 %v5587
      %v5627 = vunpack.c.l.b16 %v5588
      %v5628 = vunpack.c.l.b16 %v5589
      %v5629 = vunpack.c.l.b16 %v5590
      %v5630 = vunpack.c.l.b16 %v5591
      %v5631 = vpack.c.b16 %v5616, %v5615
      %v5632 = vpack.c.b16 %v5618, %v5617
      %v5633 = vpack.c.b16 %v5620, %v5619
      %v5634 = vpack.c.b16 %v5622, %v5621
      %v5635 = vpack.c.b16 %v5624, %v5623
      %v5636 = vpack.c.b16 %v5626, %v5625
      %v5637 = vpack.c.b16 %v5628, %v5627
      %v5638 = vpack.c.b16 %v5630, %v5629
      %5647 = vmatprep.subr.bf16.mxu0 0
      %5648 = vmatpush1.bf16.msra.mxu0 %v5638
      %5649 = vmatprep.subr.bf16.mxu0 0
      %5650 = vmatpush1.bf16.msra.mxu0 %v5637
      %5651 = vmatprep.subr.bf16.mxu0 0
      %5652 = vmatpush1.bf16.msra.mxu0 %v5636
      %5653 = vmatprep.subr.bf16.mxu0 0
      %5654 = vmatpush1.bf16.msra.mxu0 %v5635
      %5655 = vmatprep.subr.bf16.mxu0 0
      %5656 = vmatpush1.bf16.msra.mxu0 %v5634
      %5657 = vmatprep.subr.bf16.mxu0 0
      %5658 = vmatpush1.bf16.msra.mxu0 %v5633
      %5659 = vmatprep.subr.bf16.mxu0 0
      %5660 = vmatpush1.bf16.msra.mxu0 %v5632
      %5661 = vmatprep.subr.bf16.mxu0 0
      %5662 = vmatpush1.bf16.msra.mxu0 %v5631
      %5663 = vmatprep.subr.bf16.mxu0 0
      %5664 = vmatpush2.bf16.msra.mxu0 0
      %5665 = vmatprep.subr.bf16.mxu0 0
      %5666 = vmatpush2.bf16.msra.mxu0 0
      %5667 = vmatprep.subr.bf16.mxu0 0
      %5668 = vmatpush2.bf16.msra.mxu0 0
      %5669 = vmatprep.subr.bf16.mxu0 0
      %5670 = vmatpush2.bf16.msra.mxu0 0
      %5671 = vmatprep.subr.bf16.mxu0 0
      %5672 = vmatpush2.bf16.msra.mxu0 0
      %5673 = vmatprep.subr.bf16.mxu0 0
      %5674 = vmatpush2.bf16.msra.mxu0 0
      %5675 = vmatprep.subr.bf16.mxu0 0
      %5676 = vmatpush2.bf16.msra.mxu0 0
      %5677 = vmatprep.subr.bf16.mxu0 0
      %5678 = vmatpush2.bf16.msra.mxu0 0
      %5679 = vmatprep.mubr.bf16.mxu0 0
      %5680 = vmatmul.mubr.bf16.gmra.mxu0 %v5575
      %v5681 = vpop.f32.mrf.mxu0
      %v5682 = vadd.f32 %v5597, %v5681
      %v5683 = vpop.f32.mrf.mxu0
      %v5684 = vpop.f32.mrf.mxu0
      %v5685 = vpop.f32.mrf.mxu0
      %5686 = vdwg.mxu0
      %v5687 = vmax.f32 %v5682, 0.0
      %vm5688 = vcmp.ne.f32.partialorder %v5682, %v5682
      %v5689 = vadd.f32 %v5682, 0.0
      %v5690 = vand.u32 2147483647, %v5682
      %v5691 = vsub.f32 0.0, %v5690
      %v5692 = vmul.f32 %v5691, 1.442695
      %v5693 = vpow.pop %v5692
      %v5694 = vadd.f32 %v5693, 1.0
      %v5695 = vlog2.pop %v5694
      %v5696 = vmul.f32 %v5695, 0.6931472
      %v5697 = vmul.f32 -0.5, %v5693
      %v5698 = vadd.f32 %v5697, 1.0
      %v5699 = vmul.f32 %v5698, %v5693
      %v5700 = vand.u32 2147483647, %v5693
      %vm5701 = vcmp.lt.f32.partialorder %v5700, 0.0004427343
      %v5702 = vsel %vm5701, %v5699, %v5696
      %v5703 = vadd.f32 %v5687, %v5702
      %v5704 = vsel %vm5688, %v5689, %v5703
      %v5705 = vsub.f32 %v5704, 0.6931472
      %v5706 = vpack.c.bf16 %v5705, %v5705
      %v5707 = vld [vmem:[%s13] sm:$0xf]
      %v5708 = vld [vmem:[%s13 + $0x4] sm:$0xf]
      %v5709 = vld [vmem:[%s13 + $0x8] sm:$0xf]
      %v5710 = vld [vmem:[%s13 + $0xc] sm:$0xf]
      %v5711 = vld [vmem:[%s13 + $0x10] sm:$0xf]
      %v5712 = vld [vmem:[%s13 + $0x14] sm:$0xf]
      %v5713 = vld [vmem:[%s13 + $0x18] sm:$0xf]
      %v5714 = vld [vmem:[%s13 + $0x1c] sm:$0xf]
      %v5715 = vld [vmem:[%s13 + $0x20] sm:$0xf]
      %v5716 = vld [vmem:[%s13 + $0x24] sm:$0xf]
      %v5717 = vld [vmem:[%s13 + $0x28] sm:$0xf]
      %v5718 = vld [vmem:[%s13 + $0x2c] sm:$0xf]
      %v5719 = vld [vmem:[%s13 + $0x30] sm:$0xf]
      %v5720 = vld [vmem:[%s13 + $0x34] sm:$0xf]
      %v5721 = vld [vmem:[%s13 + $0x38] sm:$0xf]
      %v5722 = vld [vmem:[%s13 + $0x3c] sm:$0xf]
      %v5723 = vld [vmem:[%s14] sm:$0x1]
      %v5725 = vlaneseq
      %v5726 = vshrl.u32 %v5725, 7
      %v5727 = vsub.s32 0, %v5726
      %v5728 = vrot.slane %v5723, %v5727
      %v5746 = vunpack.c.l.b16 %v5707
      %v5747 = vunpack.c.l.b16 %v5708
      %v5748 = vunpack.c.l.b16 %v5709
      %v5749 = vunpack.c.l.b16 %v5710
      %v5750 = vunpack.c.l.b16 %v5711
      %v5751 = vunpack.c.l.b16 %v5712
      %v5752 = vunpack.c.l.b16 %v5713
      %v5753 = vunpack.c.l.b16 %v5714
      %v5754 = vunpack.c.l.b16 %v5715
      %v5755 = vunpack.c.l.b16 %v5716
      %v5756 = vunpack.c.l.b16 %v5717
      %v5757 = vunpack.c.l.b16 %v5718
      %v5758 = vunpack.c.l.b16 %v5719
      %v5759 = vunpack.c.l.b16 %v5720
      %v5760 = vunpack.c.l.b16 %v5721
      %v5761 = vunpack.c.l.b16 %v5722
      %v5762 = vpack.c.b16 %v5747, %v5746
      %v5763 = vpack.c.b16 %v5749, %v5748
      %v5764 = vpack.c.b16 %v5751, %v5750
      %v5765 = vpack.c.b16 %v5753, %v5752
      %v5766 = vpack.c.b16 %v5755, %v5754
      %v5767 = vpack.c.b16 %v5757, %v5756
      %v5768 = vpack.c.b16 %v5759, %v5758
      %v5769 = vpack.c.b16 %v5761, %v5760
      %5778 = vmatprep.subr.bf16.mxu0 0
      %5779 = vmatpush1.bf16.msra.mxu0 %v5769
      %5780 = vmatprep.subr.bf16.mxu0 0
      %5781 = vmatpush1.bf16.msra.mxu0 %v5768
      %5782 = vmatprep.subr.bf16.mxu0 0
      %5783 = vmatpush1.bf16.msra.mxu0 %v5767
      %5784 = vmatprep.subr.bf16.mxu0 0
      %5785 = vmatpush1.bf16.msra.mxu0 %v5766
      %5786 = vmatprep.subr.bf16.mxu0 0
      %5787 = vmatpush1.bf16.msra.mxu0 %v5765
      %5788 = vmatprep.subr.bf16.mxu0 0
      %5789 = vmatpush1.bf16.msra.mxu0 %v5764
      %5790 = vmatprep.subr.bf16.mxu0 0
      %5791 = vmatpush1.bf16.msra.mxu0 %v5763
      %5792 = vmatprep.subr.bf16.mxu0 0
      %5793 = vmatpush1.bf16.msra.mxu0 %v5762
      %5794 = vmatprep.subr.bf16.mxu0 0
      %5795 = vmatpush2.bf16.msra.mxu0 0
      %5796 = vmatprep.subr.bf16.mxu0 0
      %5797 = vmatpush2.bf16.msra.mxu0 0
      %5798 = vmatprep.subr.bf16.mxu0 0
      %5799 = vmatpush2.bf16.msra.mxu0 0
      %5800 = vmatprep.subr.bf16.mxu0 0
      %5801 = vmatpush2.bf16.msra.mxu0 0
      %5802 = vmatprep.subr.bf16.mxu0 0
      %5803 = vmatpush2.bf16.msra.mxu0 0
      %5804 = vmatprep.subr.bf16.mxu0 0
      %5805 = vmatpush2.bf16.msra.mxu0 0
      %5806 = vmatprep.subr.bf16.mxu0 0
      %5807 = vmatpush2.bf16.msra.mxu0 0
      %5808 = vmatprep.subr.bf16.mxu0 0
      %5809 = vmatpush2.bf16.msra.mxu0 0
      %5810 = vmatprep.mubr.bf16.mxu0 0
      %5811 = vmatmul.mubr.bf16.gmra.mxu0 %v5706
      %v5812 = vpop.f32.mrf.mxu0
      %v5813 = vadd.f32 %v5728, %v5812
      %v5814 = vpop.f32.mrf.mxu0
      %v5815 = vpop.f32.mrf.mxu0
      %v5816 = vpop.f32.mrf.mxu0
      %5817 = vdwg.mxu0
      %5818 = vst [vmem:[#allocation5] sm:$0xff] %v5813
    $region69: #{tpu_custom_call.1} parent=1 // pred_fallthru
      _
    // Predicated region
    $region70: #{tpu_custom_call.1} parent=1 // pred_check
      _
    $region71: #{tpu_custom_call.1} parent=1 // pred_check_branch
      %5820 = sbr.rel (0) target = $region73
    $region72: #{tpu_custom_call.1} parent=1 // pred_region
      %s5822 = ssub.s32 128, 128
      %5823 = vsyncadd [#allocation6], %s5822
      %s5825 = sshll.u32 [#allocation5], 4
      %s5826 = int_to_ptr.vmem [resolvable:$true] %s5825
      %5828 = dma.vmem_to_hbm [thread:$0]  %s5826, 128, %s15, [#allocation6]
    $region73: #{tpu_custom_call.1} parent=1 // pred_fallthru
      _
    // Predicated region
    $region74: #{tpu_custom_call.1} parent=1 // pred_check
      _
    $region75: #{tpu_custom_call.1} parent=1 // pred_check_branch
      %5830 = sbr.rel (0) target = $region77
    $region76: #{tpu_custom_call.1} parent=1 // pred_region
      %5831 = dma.done [#allocation6], 128
    $region77: #{tpu_custom_call.1} parent=1 // pred_fallthru
      _
    %5832 = vsyncpa [#allocation6], 1

</llo_original>
